<compile_context>
chip_gen: v5e
topology: v5e:2x2
jax: 0.10.0
libtpu: 0.0.40
codegen_flags: <defaults>
</compile_context>

<pallas_src>
import functools

import jax
import jax.numpy as jnp
from jax import lax
from jax.experimental import pallas as pl
from jax.experimental.pallas import tpu as pltpu


# --------------------------------------------------------------------------
# In-kernel single-stage body (activation stays in vregs, halo in VMEM)
# --------------------------------------------------------------------------

def _stage_body(x, m, w_in, b_in, layer_ws, w_out, b_out, xp_ref, *, K, T, MP):
    """One SingleStageModel on a (Cin, T) activation.

    x: (Cin, T) f32        m: (1, T) f32
    w_in: (F, Cin)         b_in: (F, 1)
    layer_ws: list of L tuples (wd (F, K*F), bd (F, 1), w1 (F, F), b1 (F, 1))
    w_out: (C, F)          b_out: (C, 1)
    xp_ref: zero-bordered (F, T + 2*MP) VMEM halo scratch (borders stay zero).
    Returns (mid (F, T), fin (C, T)).
    """
    out = jnp.dot(w_in, x, preferred_element_type=jnp.float32) + b_in  # conv_in
    for i, (wd, bd, w1, b1) in enumerate(layer_ws):
        d = 2 ** i
        pad = d * (K - 1) // 2
        xp_ref[:, MP:MP + T] = out                       # interior only
        # Gather K dilated taps into one (K*F, T) operand -> single MXU
        # contraction of size K*F instead of K small dots.
        taps = [xp_ref[:, MP - pad + k * d:MP - pad + k * d + T] for k in range(K)]
        xs = jnp.concatenate(taps, axis=0)
        h = jnp.dot(wd, xs, preferred_element_type=jnp.float32) + bd
        h = jnp.maximum(h, 0.0)                          # ReLU
        y = jnp.dot(w1, h, preferred_element_type=jnp.float32) + b1
        # TODO(synk): nn.Dropout is identity in eval mode; training dropout omitted.
        out = (out + y) * m                              # residual + mask
    fin = (jnp.dot(w_out, out, preferred_element_type=jnp.float32) + b_out) * m
    return out, fin


# --------------------------------------------------------------------------
# Fully-fused model kernel: tower (K=3 and K=5) + all refinement stages
# --------------------------------------------------------------------------

def _model_kernel(*args, L, T, MP, n_refine, k_tower, k_refine):
    x_ref, m_ref = args[0], args[1]
    t1 = args[2:10]                                      # tower stage1 weights
    t2 = args[10:18]                                     # tower stage2 weights
    idx = 18
    if n_refine:
        r = args[idx:idx + 8]                            # stacked refinement weights
        idx += 8
    mid_ref, outs_ref = args[idx], args[idx + 1]
    xp_ref = args[idx + 2]

    m = m_ref[...].astype(jnp.float32)                   # (1, T)
    x = x_ref[...].astype(jnp.float32)                   # (dim, T)

    # Zero the shared halo scratch once; only its interior is rewritten per
    # layer, so borders stay zero for every dilation of every stage.
    xp_ref[...] = jnp.zeros_like(xp_ref)

    def per_layer(wd, bd, w1, b1):                       # static-index ref loads
        return [(wd[i], bd[i], w1[i], b1[i]) for i in range(L)]

    win1, bin1, wd1, bd1, w11, b11, wout1, bout1 = t1
    win2, bin2, wd2, bd2, w12, b12, wout2, bout2 = t2

    mid_a, fin_a = _stage_body(x, m, win1[...], bin1[...],
                               per_layer(wd1, bd1, w11, b11),
                               wout1[...], bout1[...], xp_ref,
                               K=k_tower[0], T=T, MP=MP)
    mid_b, fin_b = _stage_body(x, m, win2[...], bin2[...],
                               per_layer(wd2, bd2, w12, b12),
                               wout2[...], bout2[...], xp_ref,
                               K=k_tower[1], T=T, MP=MP)
    mid = mid_a + mid_b
    out = fin_a + fin_b
    outs_ref[0] = out.astype(outs_ref.dtype)

    for s in range(n_refine):                            # unrolled refinement stages
        winr, binr, wdr, bdr, w1r, b1r, woutr, boutr = r
        # Fused F.softmax(prev_logits, dim=channel) * mask hand-off.
        z = out - jnp.max(out, axis=0, keepdims=True)
        e = jnp.exp(z)
        xin = (e / jnp.sum(e, axis=0, keepdims=True)) * m
        lw = [(wdr[s, i], bdr[s, i], w1r[s, i], b1r[s, i]) for i in range(L)]
        mid, out = _stage_body(xin, m, winr[s], binr[s], lw,
                               woutr[s], boutr[s], xp_ref,
                               K=k_refine, T=T, MP=MP)
        outs_ref[s + 1] = out.astype(outs_ref.dtype)

    mid_ref[...] = mid.astype(mid_ref.dtype)


def _bcast_spec(a):
    nd = a.ndim
    return pl.BlockSpec(a.shape, lambda n, _nd=nd: (0,) * _nd)


def multi_stage_forward(packed, x_nct, mask_nct):
    """x_nct: (N, dim, T), mask_nct: (N, num_classes, T) — PyTorch layout."""
    N, Cin, T = x_nct.shape
    m = mask_nct[:, 0:1, :]                               # (N, 1, T)

    t1, t2 = packed["tower"]["stage1"], packed["tower"]["stage2"]
    refine = packed["refine"]
    n_refine = packed["n_refine"]
    L = t1["num_layers"]
    F = t1["w_in"].shape[0]
    C = t1["w_out"].shape[0]
    S = n_refine + 1

    pads = [(2 ** (L - 1)) * (t1["K"] - 1) // 2, (2 ** (L - 1)) * (t2["K"] - 1) // 2]
    if n_refine:
        pads.append((2 ** (L - 1)) * (refine["K"] - 1) // 2)
    MP = max(pads)
    Tp = T + 2 * MP

    def stage_args(p):
        return [p["w_in"], p["b_in"], p["wd"], p["bd"], p["w1"], p["b1"],
                p["w_out"], p["b_out"]]

    inputs = [x_nct, m] + stage_args(t1) + stage_args(t2)
    if n_refine:
        inputs += stage_args(refine)

    in_specs = [pl.BlockSpec((None, Cin, T), lambda n: (n, 0, 0)),     # x
                pl.BlockSpec((None, 1, T), lambda n: (n, 0, 0))]       # mask
    in_specs += [_bcast_spec(a) for a in inputs[2:]]                   # weights

    kernel = functools.partial(
        _model_kernel, L=L, T=T, MP=MP, n_refine=n_refine,
        k_tower=(t1["K"], t2["K"]),
        k_refine=(refine["K"] if n_refine else 3))

    mid, outs = pl.pallas_call(
        kernel,
        out_shape=(jax.ShapeDtypeStruct((N, F, T), x_nct.dtype),
                   jax.ShapeDtypeStruct((S, N, C, T), x_nct.dtype)),
        grid=(N,),
        in_specs=in_specs,
        out_specs=(pl.BlockSpec((None, F, T), lambda n: (n, 0, 0)),
                   pl.BlockSpec((S, None, C, T), lambda n: (0, n, 0, 0))),
        scratch_shapes=[pltpu.VMEM((F, Tp), jnp.float32)],             # halo buffer
        compiler_params=pltpu.CompilerParams(
            dimension_semantics=("parallel",)),
    )(*inputs)
    return mid, outs


# --------------------------------------------------------------------------
# Parameter init (PyTorch Conv1d layout) + packing for the fused kernel
# --------------------------------------------------------------------------

def _init_conv1x1(key, cin, cout):
    k1, k2 = jax.random.split(key)
    s = 1.0 / jnp.sqrt(cin)
    w = jax.random.uniform(k1, (cout, cin), jnp.float32, -s, s)        # (Cout, Cin)
    b = jax.random.uniform(k2, (cout,), jnp.float32, -s, s)
    return w, b


def _init_convK(key, cin, cout, K):
    k1, k2 = jax.random.split(key)
    s = 1.0 / jnp.sqrt(cin * K)
    w = jax.random.uniform(k1, (cout, cin, K), jnp.float32, -s, s)     # OIH
    b = jax.random.uniform(k2, (cout,), jnp.float32, -s, s)
    return w, b


def init_single_stage(key, num_layers, num_f_maps, dim, num_classes, K):
    keys = jax.random.split(key, num_layers + 2)
    layers = []
    for i in range(num_layers):
        lk1, lk2 = jax.random.split(keys[1 + i])
        layers.append((_init_convK(lk1, num_f_maps, num_f_maps, K),
                       _init_conv1x1(lk2, num_f_maps, num_f_maps)))
    return {"K": K,
            "conv_in": _init_conv1x1(keys[0], dim, num_f_maps),
            "layers": layers,
            "conv_out": _init_conv1x1(keys[-1], num_f_maps, num_classes)}


def init_multi_stage(key, num_stages, num_layers, num_f_maps, dim, num_classes):
    keys = jax.random.split(key, num_stages + 1)
    tower = {
        "stage1": init_single_stage(keys[0], num_layers, num_f_maps, dim, num_classes, 3),
        "stage2": init_single_stage(keys[1], num_layers, num_f_maps, dim, num_classes, 5),
    }
    singles = [init_single_stage(keys[2 + s], num_layers, num_f_maps,
                                 num_classes, num_classes, 3)
               for s in range(num_stages - 1)]
    return {"tower": tower, "single_stages": singles}


def pack_stage(p):
    """Pack a stage's weights into the layouts the fused kernel consumes."""
    K = p["K"]
    w_in, b_in = p["conv_in"]                             # (F, Cin), (F,)
    F = w_in.shape[0]
    wd_l, bd_l, w1_l, b1_l = [], [], [], []
    for (wd, bd), (w1, b1) in p["layers"]:
        # wd: (F, F, K) OIH -> (F, K*F) with column index k*F + c (matches the
        # stacked-window operand row order in the kernel).
        wd_l.append(jnp.transpose(wd, (0, 2, 1)).reshape(F, K * F))
        bd_l.append(bd.reshape(F, 1))
        w1_l.append(w1)
        b1_l.append(b1.reshape(F, 1))
    w_out, b_out = p["conv_out"]
    return {"K": K, "num_layers": len(p["layers"]),
            "w_in": w_in, "b_in": b_in.reshape(F, 1),
            "wd": jnp.stack(wd_l), "bd": jnp.stack(bd_l),
            "w1": jnp.stack(w1_l), "b1": jnp.stack(b1_l),
            "w_out": w_out, "b_out": b_out.reshape(-1, 1)}


def pack_params(params):
    t1 = pack_stage(params["tower"]["stage1"])
    t2 = pack_stage(params["tower"]["stage2"])
    singles = [pack_stage(p) for p in params["single_stages"]]
    n_refine = len(singles)
    refine = None
    if n_refine:
        refine = {"K": singles[0]["K"], "num_layers": singles[0]["num_layers"]}
        for name in ["w_in", "b_in", "wd", "bd", "w1", "b1", "w_out", "b_out"]:
            refine[name] = jnp.stack([p[name] for p in singles])
    return {"tower": {"stage1": t1, "stage2": t2},
            "refine": refine, "n_refine": n_refine}


# --------------------------------------------------------------------------
# Pure-JAX reference (mirrors the PyTorch forward) for verification
# --------------------------------------------------------------------------

def _ref_conv1x1(x, w, b):                                # x: (N, Cin, T)
    return jnp.einsum("oc,nct->not", w, x) + b[None, :, None]


def _ref_convK(x, w, b, dilation):                        # w: (Cout, Cin, K)
    K = w.shape[-1]
    pad = dilation * (K - 1) // 2
    y = lax.conv_general_dilated(x, w, window_strides=(1,),
                                 padding=[(pad, pad)], rhs_dilation=(dilation,),
                                 dimension_numbers=("NCH", "OIH", "NCH"))
    return y + b[None, :, None]


def _ref_single_stage(p, x, m):
    out = _ref_conv1x1(x, *p["conv_in"])
    for i, ((wd, bd), (w1, b1)) in enumerate(p["layers"]):
        h = jax.nn.relu(_ref_convK(out, wd, bd, 2 ** i))
        h = _ref_conv1x1(h, w1, b1)
        out = (out + h) * m
    final = _ref_conv1x1(out, *p["conv_out"]) * m
    return out, final


def _ref_multi_stage(params, x, mask):
    m = mask[:, 0:1, :]
    o1, f1 = _ref_single_stage(params["tower"]["stage1"], x, m)
    o2, f2 = _ref_single_stage(params["tower"]["stage2"], x, m)
    middle, out = o1 + o2, f1 + f2
    outputs = [out]
    for p in params["single_stages"]:
        middle, out = _ref_single_stage(p, jax.nn.softmax(out, axis=1) * m, m)
        outputs.append(out)
    return middle, jnp.stack(outputs, 0)


# --------------------------------------------------------------------------

if __name__ == "__main__":
    num_stages, num_layers, num_f_maps, dim, num_classes = 3, 3, 8, 4, 6
    N, T = 2, 16

    key = jax.random.PRNGKey(0)
    kx, kp = jax.random.split(key)
    x = jax.random.normal(kx, (N, dim, T), jnp.float32)
    # binary mask (last 4 frames padded out), broadcast over the class channel
    mask = jnp.broadcast_to(
        (jnp.arange(T) < 12).astype(jnp.float32)[None, None, :],
        (N, num_classes, T)).astype(jnp.float32)

    params = init_multi_stage(kp, num_stages, num_layers, num_f_maps, dim, num_classes)
    packed = pack_params(params)

    fwd = jax.jit(functools.partial(multi_stage_forward, packed))
    middle_out, outputs = fwd(x, mask)
    jax.block_until_ready((middle_out, outputs))

    assert middle_out.shape == (N, num_f_maps, T)
    assert outputs.shape == (num_stages, N, num_classes, T)

    # Verify against the pure-JAX reference of the PyTorch forward.
    ref_middle, ref_outputs = _ref_multi_stage(params, x, mask)
    assert jnp.allclose(middle_out, ref_middle, atol=1e-4, rtol=1e-4)
    assert jnp.allclose(outputs, ref_outputs, atol=1e-4, rtol=1e-4)

    print("KERNEL_OK")
</pallas_src>

<mosaic_0001>
module attributes {stable_mosaic.version = 11 : i64} {
  func.func @_model_kernel(%arg0: i32, %arg1: memref<1x4x16xf32, #tpu.memory_space<vmem>>, %arg2: memref<1x1x16xf32, #tpu.memory_space<vmem>>, %arg3: memref<8x4xf32, #tpu.memory_space<vmem>>, %arg4: memref<8x1xf32, #tpu.memory_space<vmem>>, %arg5: memref<3x8x24xf32, #tpu.memory_space<vmem>>, %arg6: memref<3x8x1xf32, #tpu.memory_space<vmem>>, %arg7: memref<3x8x8xf32, #tpu.memory_space<vmem>>, %arg8: memref<3x8x1xf32, #tpu.memory_space<vmem>>, %arg9: memref<6x8xf32, #tpu.memory_space<vmem>>, %arg10: memref<6x1xf32, #tpu.memory_space<vmem>>, %arg11: memref<8x4xf32, #tpu.memory_space<vmem>>, %arg12: memref<8x1xf32, #tpu.memory_space<vmem>>, %arg13: memref<3x8x40xf32, #tpu.memory_space<vmem>>, %arg14: memref<3x8x1xf32, #tpu.memory_space<vmem>>, %arg15: memref<3x8x8xf32, #tpu.memory_space<vmem>>, %arg16: memref<3x8x1xf32, #tpu.memory_space<vmem>>, %arg17: memref<6x8xf32, #tpu.memory_space<vmem>>, %arg18: memref<6x1xf32, #tpu.memory_space<vmem>>, %arg19: memref<2x8x6xf32, #tpu.memory_space<vmem>>, %arg20: memref<2x8x1xf32, #tpu.memory_space<vmem>>, %arg21: memref<2x3x8x24xf32, #tpu.memory_space<vmem>>, %arg22: memref<2x3x8x1xf32, #tpu.memory_space<vmem>>, %arg23: memref<2x3x8x8xf32, #tpu.memory_space<vmem>>, %arg24: memref<2x3x8x1xf32, #tpu.memory_space<vmem>>, %arg25: memref<2x6x8xf32, #tpu.memory_space<vmem>>, %arg26: memref<2x6x1xf32, #tpu.memory_space<vmem>>, %arg27: memref<1x8x16xf32, #tpu.memory_space<vmem>>, %arg28: memref<3x1x6x16xf32, #tpu.memory_space<vmem>>, %arg29: memref<8x32xf32, #tpu.memory_space<vmem>>) attributes {dimension_semantics = [#tpu.dimension_semantics<parallel>], iteration_bounds = array<i64: 2>, scalar_prefetch = 0 : i64, scratch_operands = 1 : i64, tpu.core_type = #tpu.core_type<tc>, window_params = [{transform_indices = @transform_0, window_bounds = array<i64: 1, 4, 16>}, {transform_indices = @transform_1, window_bounds = array<i64: 1, 1, 16>}, {pipeline_mode = #tpu.pipeline_mode<synchronous>, transform_indices = @transform_2, window_bounds = array<i64: 8, 4>}, {pipeline_mode = #tpu.pipeline_mode<synchronous>, transform_indices = @transform_3, window_bounds = array<i64: 8, 1>}, {pipeline_mode = #tpu.pipeline_mode<synchronous>, transform_indices = @transform_4, window_bounds = array<i64: 3, 8, 24>}, {pipeline_mode = #tpu.pipeline_mode<synchronous>, transform_indices = @transform_5, window_bounds = array<i64: 3, 8, 1>}, {pipeline_mode = #tpu.pipeline_mode<synchronous>, transform_indices = @transform_6, window_bounds = array<i64: 3, 8, 8>}, {pipeline_mode = #tpu.pipeline_mode<synchronous>, transform_indices = @transform_7, window_bounds = array<i64: 3, 8, 1>}, {pipeline_mode = #tpu.pipeline_mode<synchronous>, transform_indices = @transform_8, window_bounds = array<i64: 6, 8>}, {pipeline_mode = #tpu.pipeline_mode<synchronous>, transform_indices = @transform_9, window_bounds = array<i64: 6, 1>}, {pipeline_mode = #tpu.pipeline_mode<synchronous>, transform_indices = @transform_10, window_bounds = array<i64: 8, 4>}, {pipeline_mode = #tpu.pipeline_mode<synchronous>, transform_indices = @transform_11, window_bounds = array<i64: 8, 1>}, {pipeline_mode = #tpu.pipeline_mode<synchronous>, transform_indices = @transform_12, window_bounds = array<i64: 3, 8, 40>}, {pipeline_mode = #tpu.pipeline_mode<synchronous>, transform_indices = @transform_13, window_bounds = array<i64: 3, 8, 1>}, {pipeline_mode = #tpu.pipeline_mode<synchronous>, transform_indices = @transform_14, window_bounds = array<i64: 3, 8, 8>}, {pipeline_mode = #tpu.pipeline_mode<synchronous>, transform_indices = @transform_15, window_bounds = array<i64: 3, 8, 1>}, {pipeline_mode = #tpu.pipeline_mode<synchronous>, transform_indices = @transform_16, window_bounds = array<i64: 6, 8>}, {pipeline_mode = #tpu.pipeline_mode<synchronous>, transform_indices = @transform_17, window_bounds = array<i64: 6, 1>}, {pipeline_mode = #tpu.pipeline_mode<synchronous>, transform_indices = @transform_18, window_bounds = array<i64: 2, 8, 6>}, {pipeline_mode = #tpu.pipeline_mode<synchronous>, transform_indices = @transform_19, window_bounds = array<i64: 2, 8, 1>}, {pipeline_mode = #tpu.pipeline_mode<synchronous>, transform_indices = @transform_20, window_bounds = array<i64: 2, 3, 8, 24>}, {pipeline_mode = #tpu.pipeline_mode<synchronous>, transform_indices = @transform_21, window_bounds = array<i64: 2, 3, 8, 1>}, {pipeline_mode = #tpu.pipeline_mode<synchronous>, transform_indices = @transform_22, window_bounds = array<i64: 2, 3, 8, 8>}, {pipeline_mode = #tpu.pipeline_mode<synchronous>, transform_indices = @transform_23, window_bounds = array<i64: 2, 3, 8, 1>}, {pipeline_mode = #tpu.pipeline_mode<synchronous>, transform_indices = @transform_24, window_bounds = array<i64: 2, 6, 8>}, {pipeline_mode = #tpu.pipeline_mode<synchronous>, transform_indices = @transform_25, window_bounds = array<i64: 2, 6, 1>}, {transform_indices = @transform_26, window_bounds = array<i64: 1, 8, 16>}, {transform_indices = @transform_27, window_bounds = array<i64: 3, 1, 6, 16>}]} {
    %c0 = arith.constant 0 : index
    %c0_0 = arith.constant 0 : index
    %c0_1 = arith.constant 0 : index
    %0 = vector.load %arg2[%c0, %c0_0, %c0_1] : memref<1x1x16xf32, #tpu.memory_space<vmem>>, vector<1x1x16xf32>
    %1 = vector.shape_cast %0 : vector<1x1x16xf32> to vector<1x16xf32>
    %c0_2 = arith.constant 0 : index
    %c0_3 = arith.constant 0 : index
    %c0_4 = arith.constant 0 : index
    %2 = vector.load %arg1[%c0_2, %c0_3, %c0_4] : memref<1x4x16xf32, #tpu.memory_space<vmem>>, vector<1x4x16xf32>
    %3 = vector.shape_cast %2 : vector<1x4x16xf32> to vector<4x16xf32>
    %cst = arith.constant 0.000000e+00 : f32
    %4 = vector.broadcast %cst : f32 to vector<8x32xf32>
    %c0_5 = arith.constant 0 : index
    %c0_6 = arith.constant 0 : index
    %5 = vector.load %arg29[%c0_5, %c0_6] : memref<8x32xf32, #tpu.memory_space<vmem>>, vector<8x32xf32>
    tpu.vector_store %arg29[%c0_5, %c0_6], %4 {strides = array<i32>} : memref<8x32xf32, #tpu.memory_space<vmem>>, vector<8x32xf32>,
    %c0_7 = arith.constant 0 : index
    %c0_8 = arith.constant 0 : index
    %6 = vector.load %arg3[%c0_7, %c0_8] : memref<8x4xf32, #tpu.memory_space<vmem>>, vector<8x4xf32>
    %c0_9 = arith.constant 0 : index
    %c0_10 = arith.constant 0 : index
    %7 = vector.load %arg4[%c0_9, %c0_10] : memref<8x1xf32, #tpu.memory_space<vmem>>, vector<8x1xf32>
    %c0_11 = arith.constant 0 : index
    %c0_12 = arith.constant 0 : index
    %c0_13 = arith.constant 0 : index
    %8 = vector.load %arg5[%c0_11, %c0_12, %c0_13] : memref<3x8x24xf32, #tpu.memory_space<vmem>>, vector<1x8x24xf32>
    %9 = vector.shape_cast %8 : vector<1x8x24xf32> to vector<8x24xf32>
    %c0_14 = arith.constant 0 : index
    %c0_15 = arith.constant 0 : index
    %c0_16 = arith.constant 0 : index
    %10 = vector.load %arg6[%c0_14, %c0_15, %c0_16] : memref<3x8x1xf32, #tpu.memory_space<vmem>>, vector<1x8x1xf32>
    %11 = vector.shape_cast %10 : vector<1x8x1xf32> to vector<8x1xf32>
    %c0_17 = arith.constant 0 : index
    %c0_18 = arith.constant 0 : index
    %c0_19 = arith.constant 0 : index
    %12 = vector.load %arg7[%c0_17, %c0_18, %c0_19] : memref<3x8x8xf32, #tpu.memory_space<vmem>>, vector<1x8x8xf32>
    %13 = vector.shape_cast %12 : vector<1x8x8xf32> to vector<8x8xf32>
    %c0_20 = arith.constant 0 : index
    %c0_21 = arith.constant 0 : index
    %c0_22 = arith.constant 0 : index
    %14 = vector.load %arg8[%c0_20, %c0_21, %c0_22] : memref<3x8x1xf32, #tpu.memory_space<vmem>>, vector<1x8x1xf32>
    %15 = vector.shape_cast %14 : vector<1x8x1xf32> to vector<8x1xf32>
    %c1 = arith.constant 1 : index
    %c0_23 = arith.constant 0 : index
    %c0_24 = arith.constant 0 : index
    %16 = vector.load %arg5[%c1, %c0_23, %c0_24] : memref<3x8x24xf32, #tpu.memory_space<vmem>>, vector<1x8x24xf32>
    %17 = vector.shape_cast %16 : vector<1x8x24xf32> to vector<8x24xf32>
    %c1_25 = arith.constant 1 : index
    %c0_26 = arith.constant 0 : index
    %c0_27 = arith.constant 0 : index
    %18 = vector.load %arg6[%c1_25, %c0_26, %c0_27] : memref<3x8x1xf32, #tpu.memory_space<vmem>>, vector<1x8x1xf32>
    %19 = vector.shape_cast %18 : vector<1x8x1xf32> to vector<8x1xf32>
    %c1_28 = arith.constant 1 : index
    %c0_29 = arith.constant 0 : index
    %c0_30 = arith.constant 0 : index
    %20 = vector.load %arg7[%c1_28, %c0_29, %c0_30] : memref<3x8x8xf32, #tpu.memory_space<vmem>>, vector<1x8x8xf32>
    %21 = vector.shape_cast %20 : vector<1x8x8xf32> to vector<8x8xf32>
    %c1_31 = arith.constant 1 : index
    %c0_32 = arith.constant 0 : index
    %c0_33 = arith.constant 0 : index
    %22 = vector.load %arg8[%c1_31, %c0_32, %c0_33] : memref<3x8x1xf32, #tpu.memory_space<vmem>>, vector<1x8x1xf32>
    %23 = vector.shape_cast %22 : vector<1x8x1xf32> to vector<8x1xf32>
    %c2 = arith.constant 2 : index
    %c0_34 = arith.constant 0 : index
    %c0_35 = arith.constant 0 : index
    %24 = vector.load %arg5[%c2, %c0_34, %c0_35] : memref<3x8x24xf32, #tpu.memory_space<vmem>>, vector<1x8x24xf32>
    %25 = vector.shape_cast %24 : vector<1x8x24xf32> to vector<8x24xf32>
    %c2_36 = arith.constant 2 : index
    %c0_37 = arith.constant 0 : index
    %c0_38 = arith.constant 0 : index
    %26 = vector.load %arg6[%c2_36, %c0_37, %c0_38] : memref<3x8x1xf32, #tpu.memory_space<vmem>>, vector<1x8x1xf32>
    %27 = vector.shape_cast %26 : vector<1x8x1xf32> to vector<8x1xf32>
    %c2_39 = arith.constant 2 : index
    %c0_40 = arith.constant 0 : index
    %c0_41 = arith.constant 0 : index
    %28 = vector.load %arg7[%c2_39, %c0_40, %c0_41] : memref<3x8x8xf32, #tpu.memory_space<vmem>>, vector<1x8x8xf32>
    %29 = vector.shape_cast %28 : vector<1x8x8xf32> to vector<8x8xf32>
    %c2_42 = arith.constant 2 : index
    %c0_43 = arith.constant 0 : index
    %c0_44 = arith.constant 0 : index
    %30 = vector.load %arg8[%c2_42, %c0_43, %c0_44] : memref<3x8x1xf32, #tpu.memory_space<vmem>>, vector<1x8x1xf32>
    %31 = vector.shape_cast %30 : vector<1x8x1xf32> to vector<8x1xf32>
    %c0_45 = arith.constant 0 : index
    %c0_46 = arith.constant 0 : index
    %32 = vector.load %arg9[%c0_45, %c0_46] : memref<6x8xf32, #tpu.memory_space<vmem>>, vector<6x8xf32>
    %c0_47 = arith.constant 0 : index
    %c0_48 = arith.constant 0 : index
    %33 = vector.load %arg10[%c0_47, %c0_48] : memref<6x1xf32, #tpu.memory_space<vmem>>, vector<6x1xf32>
    %cst_49 = arith.constant dense<0.000000e+00> : vector<8x16xf32>
    %34 = tpu.matmul %6, %3, %cst_49 {dimension_numbers = #tpu.dot_dimension_numbers<[1], [0], [0], [1], [0, 0, 1, 1], [], []>} : vector<8x4xf32>, vector<4x16xf32>, vector<8x16xf32> -> vector<8x16xf32>
    %35 = vector.broadcast %7 : vector<8x1xf32> to vector<8x16xf32>
    %36 = arith.addf %34, %35 : vector<8x16xf32>
    %c0_50 = arith.constant 0 : index
    %c8 = arith.constant 8 : index
    %37 = vector.load %arg29[%c0_50, %c8] : memref<8x32xf32, #tpu.memory_space<vmem>>, vector<8x16xf32>
    tpu.vector_store %arg29[%c0_50, %c8], %36 {strides = array<i32>} : memref<8x32xf32, #tpu.memory_space<vmem>>, vector<8x16xf32>,
    %c0_51 = arith.constant 0 : index
    %c7 = arith.constant 7 : index
    %38 = vector.load %arg29[%c0_51, %c7] : memref<8x32xf32, #tpu.memory_space<vmem>>, vector<8x16xf32>
    %c0_52 = arith.constant 0 : index
    %c8_53 = arith.constant 8 : index
    %39 = vector.load %arg29[%c0_52, %c8_53] : memref<8x32xf32, #tpu.memory_space<vmem>>, vector<8x16xf32>
    %c0_54 = arith.constant 0 : index
    %c9 = arith.constant 9 : index
    %40 = vector.load %arg29[%c0_54, %c9] : memref<8x32xf32, #tpu.memory_space<vmem>>, vector<8x16xf32>
    %41 = tpu.concatenate %38, %39, %40 in 0 : vector<8x16xf32>, vector<8x16xf32>, vector<8x16xf32> -> vector<24x16xf32>
    %cst_55 = arith.constant dense<0.000000e+00> : vector<8x16xf32>
    %42 = tpu.matmul %9, %41, %cst_55 {dimension_numbers = #tpu.dot_dimension_numbers<[1], [0], [0], [1], [0, 0, 1, 1], [], []>} : vector<8x24xf32>, vector<24x16xf32>, vector<8x16xf32> -> vector<8x16xf32>
    %43 = vector.broadcast %11 : vector<8x1xf32> to vector<8x16xf32>
    %44 = arith.addf %42, %43 : vector<8x16xf32>
    %cst_56 = arith.constant 0.000000e+00 : f32
    %45 = vector.broadcast %cst_56 : f32 to vector<8x16xf32>
    %46 = arith.maximumf %44, %45 : vector<8x16xf32>
    %cst_57 = arith.constant dense<0.000000e+00> : vector<8x16xf32>
    %47 = tpu.matmul %13, %46, %cst_57 {dimension_numbers = #tpu.dot_dimension_numbers<[1], [0], [0], [1], [0, 0, 1, 1], [], []>} : vector<8x8xf32>, vector<8x16xf32>, vector<8x16xf32> -> vector<8x16xf32>
    %48 = vector.broadcast %15 : vector<8x1xf32> to vector<8x16xf32>
    %49 = arith.addf %47, %48 : vector<8x16xf32>
    %50 = arith.addf %36, %49 : vector<8x16xf32>
    %51 = vector.broadcast %1 : vector<1x16xf32> to vector<8x16xf32>
    %52 = arith.mulf %50, %51 : vector<8x16xf32>
    %c0_58 = arith.constant 0 : index
    %c8_59 = arith.constant 8 : index
    %53 = vector.load %arg29[%c0_58, %c8_59] : memref<8x32xf32, #tpu.memory_space<vmem>>, vector<8x16xf32>
    tpu.vector_store %arg29[%c0_58, %c8_59], %52 {strides = array<i32>} : memref<8x32xf32, #tpu.memory_space<vmem>>, vector<8x16xf32>,
    %c0_60 = arith.constant 0 : index
    %c6 = arith.constant 6 : index
    %54 = vector.load %arg29[%c0_60, %c6] : memref<8x32xf32, #tpu.memory_space<vmem>>, vector<8x16xf32>
    %c0_61 = arith.constant 0 : index
    %c8_62 = arith.constant 8 : index
    %55 = vector.load %arg29[%c0_61, %c8_62] : memref<8x32xf32, #tpu.memory_space<vmem>>, vector<8x16xf32>
    %c0_63 = arith.constant 0 : index
    %c10 = arith.constant 10 : index
    %56 = vector.load %arg29[%c0_63, %c10] : memref<8x32xf32, #tpu.memory_space<vmem>>, vector<8x16xf32>
    %57 = tpu.concatenate %54, %55, %56 in 0 : vector<8x16xf32>, vector<8x16xf32>, vector<8x16xf32> -> vector<24x16xf32>
    %cst_64 = arith.constant dense<0.000000e+00> : vector<8x16xf32>
    %58 = tpu.matmul %17, %57, %cst_64 {dimension_numbers = #tpu.dot_dimension_numbers<[1], [0], [0], [1], [0, 0, 1, 1], [], []>} : vector<8x24xf32>, vector<24x16xf32>, vector<8x16xf32> -> vector<8x16xf32>
    %59 = vector.broadcast %19 : vector<8x1xf32> to vector<8x16xf32>
    %60 = arith.addf %58, %59 : vector<8x16xf32>
    %cst_65 = arith.constant 0.000000e+00 : f32
    %61 = vector.broadcast %cst_65 : f32 to vector<8x16xf32>
    %62 = arith.maximumf %60, %61 : vector<8x16xf32>
    %cst_66 = arith.constant dense<0.000000e+00> : vector<8x16xf32>
    %63 = tpu.matmul %21, %62, %cst_66 {dimension_numbers = #tpu.dot_dimension_numbers<[1], [0], [0], [1], [0, 0, 1, 1], [], []>} : vector<8x8xf32>, vector<8x16xf32>, vector<8x16xf32> -> vector<8x16xf32>
    %64 = vector.broadcast %23 : vector<8x1xf32> to vector<8x16xf32>
    %65 = arith.addf %63, %64 : vector<8x16xf32>
    %66 = arith.addf %52, %65 : vector<8x16xf32>
    %67 = vector.broadcast %1 : vector<1x16xf32> to vector<8x16xf32>
    %68 = arith.mulf %66, %67 : vector<8x16xf32>
    %c0_67 = arith.constant 0 : index
    %c8_68 = arith.constant 8 : index
    %69 = vector.load %arg29[%c0_67, %c8_68] : memref<8x32xf32, #tpu.memory_space<vmem>>, vector<8x16xf32>
    tpu.vector_store %arg29[%c0_67, %c8_68], %68 {strides = array<i32>} : memref<8x32xf32, #tpu.memory_space<vmem>>, vector<8x16xf32>,
    %c0_69 = arith.constant 0 : index
    %c4 = arith.constant 4 : index
    %70 = vector.load %arg29[%c0_69, %c4] : memref<8x32xf32, #tpu.memory_space<vmem>>, vector<8x16xf32>
    %c0_70 = arith.constant 0 : index
    %c8_71 = arith.constant 8 : index
    %71 = vector.load %arg29[%c0_70, %c8_71] : memref<8x32xf32, #tpu.memory_space<vmem>>, vector<8x16xf32>
    %c0_72 = arith.constant 0 : index
    %c12 = arith.constant 12 : index
    %72 = vector.load %arg29[%c0_72, %c12] : memref<8x32xf32, #tpu.memory_space<vmem>>, vector<8x16xf32>
    %73 = tpu.concatenate %70, %71, %72 in 0 : vector<8x16xf32>, vector<8x16xf32>, vector<8x16xf32> -> vector<24x16xf32>
    %cst_73 = arith.constant dense<0.000000e+00> : vector<8x16xf32>
    %74 = tpu.matmul %25, %73, %cst_73 {dimension_numbers = #tpu.dot_dimension_numbers<[1], [0], [0], [1], [0, 0, 1, 1], [], []>} : vector<8x24xf32>, vector<24x16xf32>, vector<8x16xf32> -> vector<8x16xf32>
    %75 = vector.broadcast %27 : vector<8x1xf32> to vector<8x16xf32>
    %76 = arith.addf %74, %75 : vector<8x16xf32>
    %cst_74 = arith.constant 0.000000e+00 : f32
    %77 = vector.broadcast %cst_74 : f32 to vector<8x16xf32>
    %78 = arith.maximumf %76, %77 : vector<8x16xf32>
    %cst_75 = arith.constant dense<0.000000e+00> : vector<8x16xf32>
    %79 = tpu.matmul %29, %78, %cst_75 {dimension_numbers = #tpu.dot_dimension_numbers<[1], [0], [0], [1], [0, 0, 1, 1], [], []>} : vector<8x8xf32>, vector<8x16xf32>, vector<8x16xf32> -> vector<8x16xf32>
    %80 = vector.broadcast %31 : vector<8x1xf32> to vector<8x16xf32>
    %81 = arith.addf %79, %80 : vector<8x16xf32>
    %82 = arith.addf %68, %81 : vector<8x16xf32>
    %83 = vector.broadcast %1 : vector<1x16xf32> to vector<8x16xf32>
    %84 = arith.mulf %82, %83 : vector<8x16xf32>
    %cst_76 = arith.constant dense<0.000000e+00> : vector<6x16xf32>
    %85 = tpu.matmul %32, %84, %cst_76 {dimension_numbers = #tpu.dot_dimension_numbers<[1], [0], [0], [1], [0, 0, 1, 1], [], []>} : vector<6x8xf32>, vector<8x16xf32>, vector<6x16xf32> -> vector<6x16xf32>
    %86 = vector.broadcast %33 : vector<6x1xf32> to vector<6x16xf32>
    %87 = arith.addf %85, %86 : vector<6x16xf32>
    %88 = vector.broadcast %1 : vector<1x16xf32> to vector<6x16xf32>
    %89 = arith.mulf %87, %88 : vector<6x16xf32>
    %c0_77 = arith.constant 0 : index
    %c0_78 = arith.constant 0 : index
    %90 = vector.load %arg11[%c0_77, %c0_78] : memref<8x4xf32, #tpu.memory_space<vmem>>, vector<8x4xf32>
    %c0_79 = arith.constant 0 : index
    %c0_80 = arith.constant 0 : index
    %91 = vector.load %arg12[%c0_79, %c0_80] : memref<8x1xf32, #tpu.memory_space<vmem>>, vector<8x1xf32>
    %c0_81 = arith.constant 0 : index
    %c0_82 = arith.constant 0 : index
    %c0_83 = arith.constant 0 : index
    %92 = vector.load %arg13[%c0_81, %c0_82, %c0_83] : memref<3x8x40xf32, #tpu.memory_space<vmem>>, vector<1x8x40xf32>
    %93 = vector.shape_cast %92 : vector<1x8x40xf32> to vector<8x40xf32>
    %c0_84 = arith.constant 0 : index
    %c0_85 = arith.constant 0 : index
    %c0_86 = arith.constant 0 : index
    %94 = vector.load %arg14[%c0_84, %c0_85, %c0_86] : memref<3x8x1xf32, #tpu.memory_space<vmem>>, vector<1x8x1xf32>
    %95 = vector.shape_cast %94 : vector<1x8x1xf32> to vector<8x1xf32>
    %c0_87 = arith.constant 0 : index
    %c0_88 = arith.constant 0 : index
    %c0_89 = arith.constant 0 : index
    %96 = vector.load %arg15[%c0_87, %c0_88, %c0_89] : memref<3x8x8xf32, #tpu.memory_space<vmem>>, vector<1x8x8xf32>
    %97 = vector.shape_cast %96 : vector<1x8x8xf32> to vector<8x8xf32>
    %c0_90 = arith.constant 0 : index
    %c0_91 = arith.constant 0 : index
    %c0_92 = arith.constant 0 : index
    %98 = vector.load %arg16[%c0_90, %c0_91, %c0_92] : memref<3x8x1xf32, #tpu.memory_space<vmem>>, vector<1x8x1xf32>
    %99 = vector.shape_cast %98 : vector<1x8x1xf32> to vector<8x1xf32>
    %c1_93 = arith.constant 1 : index
    %c0_94 = arith.constant 0 : index
    %c0_95 = arith.constant 0 : index
    %100 = vector.load %arg13[%c1_93, %c0_94, %c0_95] : memref<3x8x40xf32, #tpu.memory_space<vmem>>, vector<1x8x40xf32>
    %101 = vector.shape_cast %100 : vector<1x8x40xf32> to vector<8x40xf32>
    %c1_96 = arith.constant 1 : index
    %c0_97 = arith.constant 0 : index
    %c0_98 = arith.constant 0 : index
    %102 = vector.load %arg14[%c1_96, %c0_97, %c0_98] : memref<3x8x1xf32, #tpu.memory_space<vmem>>, vector<1x8x1xf32>
    %103 = vector.shape_cast %102 : vector<1x8x1xf32> to vector<8x1xf32>
    %c1_99 = arith.constant 1 : index
    %c0_100 = arith.constant 0 : index
    %c0_101 = arith.constant 0 : index
    %104 = vector.load %arg15[%c1_99, %c0_100, %c0_101] : memref<3x8x8xf32, #tpu.memory_space<vmem>>, vector<1x8x8xf32>
    %105 = vector.shape_cast %104 : vector<1x8x8xf32> to vector<8x8xf32>
    %c1_102 = arith.constant 1 : index
    %c0_103 = arith.constant 0 : index
    %c0_104 = arith.constant 0 : index
    %106 = vector.load %arg16[%c1_102, %c0_103, %c0_104] : memref<3x8x1xf32, #tpu.memory_space<vmem>>, vector<1x8x1xf32>
    %107 = vector.shape_cast %106 : vector<1x8x1xf32> to vector<8x1xf32>
    %c2_105 = arith.constant 2 : index
    %c0_106 = arith.constant 0 : index
    %c0_107 = arith.constant 0 : index
    %108 = vector.load %arg13[%c2_105, %c0_106, %c0_107] : memref<3x8x40xf32, #tpu.memory_space<vmem>>, vector<1x8x40xf32>
    %109 = vector.shape_cast %108 : vector<1x8x40xf32> to vector<8x40xf32>
    %c2_108 = arith.constant 2 : index
    %c0_109 = arith.constant 0 : index
    %c0_110 = arith.constant 0 : index
    %110 = vector.load %arg14[%c2_108, %c0_109, %c0_110] : memref<3x8x1xf32, #tpu.memory_space<vmem>>, vector<1x8x1xf32>
    %111 = vector.shape_cast %110 : vector<1x8x1xf32> to vector<8x1xf32>
    %c2_111 = arith.constant 2 : index
    %c0_112 = arith.constant 0 : index
    %c0_113 = arith.constant 0 : index
    %112 = vector.load %arg15[%c2_111, %c0_112, %c0_113] : memref<3x8x8xf32, #tpu.memory_space<vmem>>, vector<1x8x8xf32>
    %113 = vector.shape_cast %112 : vector<1x8x8xf32> to vector<8x8xf32>
    %c2_114 = arith.constant 2 : index
    %c0_115 = arith.constant 0 : index
    %c0_116 = arith.constant 0 : index
    %114 = vector.load %arg16[%c2_114, %c0_115, %c0_116] : memref<3x8x1xf32, #tpu.memory_space<vmem>>, vector<1x8x1xf32>
    %115 = vector.shape_cast %114 : vector<1x8x1xf32> to vector<8x1xf32>
    %c0_117 = arith.constant 0 : index
    %c0_118 = arith.constant 0 : index
    %116 = vector.load %arg17[%c0_117, %c0_118] : memref<6x8xf32, #tpu.memory_space<vmem>>, vector<6x8xf32>
    %c0_119 = arith.constant 0 : index
    %c0_120 = arith.constant 0 : index
    %117 = vector.load %arg18[%c0_119, %c0_120] : memref<6x1xf32, #tpu.memory_space<vmem>>, vector<6x1xf32>
    %cst_121 = arith.constant dense<0.000000e+00> : vector<8x16xf32>
    %118 = tpu.matmul %90, %3, %cst_121 {dimension_numbers = #tpu.dot_dimension_numbers<[1], [0], [0], [1], [0, 0, 1, 1], [], []>} : vector<8x4xf32>, vector<4x16xf32>, vector<8x16xf32> -> vector<8x16xf32>
    %119 = vector.broadcast %91 : vector<8x1xf32> to vector<8x16xf32>
    %120 = arith.addf %118, %119 : vector<8x16xf32>
    %c0_122 = arith.constant 0 : index
    %c8_123 = arith.constant 8 : index
    %121 = vector.load %arg29[%c0_122, %c8_123] : memref<8x32xf32, #tpu.memory_space<vmem>>, vector<8x16xf32>
    tpu.vector_store %arg29[%c0_122, %c8_123], %120 {strides = array<i32>} : memref<8x32xf32, #tpu.memory_space<vmem>>, vector<8x16xf32>,
    %c0_124 = arith.constant 0 : index
    %c6_125 = arith.constant 6 : index
    %122 = vector.load %arg29[%c0_124, %c6_125] : memref<8x32xf32, #tpu.memory_space<vmem>>, vector<8x16xf32>
    %c0_126 = arith.constant 0 : index
    %c7_127 = arith.constant 7 : index
    %123 = vector.load %arg29[%c0_126, %c7_127] : memref<8x32xf32, #tpu.memory_space<vmem>>, vector<8x16xf32>
    %c0_128 = arith.constant 0 : index
    %c8_129 = arith.constant 8 : index
    %124 = vector.load %arg29[%c0_128, %c8_129] : memref<8x32xf32, #tpu.memory_space<vmem>>, vector<8x16xf32>
    %c0_130 = arith.constant 0 : index
    %c9_131 = arith.constant 9 : index
    %125 = vector.load %arg29[%c0_130, %c9_131] : memref<8x32xf32, #tpu.memory_space<vmem>>, vector<8x16xf32>
    %c0_132 = arith.constant 0 : index
    %c10_133 = arith.constant 10 : index
    %126 = vector.load %arg29[%c0_132, %c10_133] : memref<8x32xf32, #tpu.memory_space<vmem>>, vector<8x16xf32>
    %127 = tpu.concatenate %122, %123, %124, %125, %126 in 0 : vector<8x16xf32>, vector<8x16xf32>, vector<8x16xf32>, vector<8x16xf32>, vector<8x16xf32> -> vector<40x16xf32>
    %cst_134 = arith.constant dense<0.000000e+00> : vector<8x16xf32>
    %128 = tpu.matmul %93, %127, %cst_134 {dimension_numbers = #tpu.dot_dimension_numbers<[1], [0], [0], [1], [0, 0, 1, 1], [], []>} : vector<8x40xf32>, vector<40x16xf32>, vector<8x16xf32> -> vector<8x16xf32>
    %129 = vector.broadcast %95 : vector<8x1xf32> to vector<8x16xf32>
    %130 = arith.addf %128, %129 : vector<8x16xf32>
    %cst_135 = arith.constant 0.000000e+00 : f32
    %131 = vector.broadcast %cst_135 : f32 to vector<8x16xf32>
    %132 = arith.maximumf %130, %131 : vector<8x16xf32>
    %cst_136 = arith.constant dense<0.000000e+00> : vector<8x16xf32>
    %133 = tpu.matmul %97, %132, %cst_136 {dimension_numbers = #tpu.dot_dimension_numbers<[1], [0], [0], [1], [0, 0, 1, 1], [], []>} : vector<8x8xf32>, vector<8x16xf32>, vector<8x16xf32> -> vector<8x16xf32>
    %134 = vector.broadcast %99 : vector<8x1xf32> to vector<8x16xf32>
    %135 = arith.addf %133, %134 : vector<8x16xf32>
    %136 = arith.addf %120, %135 : vector<8x16xf32>
    %137 = vector.broadcast %1 : vector<1x16xf32> to vector<8x16xf32>
    %138 = arith.mulf %136, %137 : vector<8x16xf32>
    %c0_137 = arith.constant 0 : index
    %c8_138 = arith.constant 8 : index
    %139 = vector.load %arg29[%c0_137, %c8_138] : memref<8x32xf32, #tpu.memory_space<vmem>>, vector<8x16xf32>
    tpu.vector_store %arg29[%c0_137, %c8_138], %138 {strides = array<i32>} : memref<8x32xf32, #tpu.memory_space<vmem>>, vector<8x16xf32>,
    %c0_139 = arith.constant 0 : index
    %c4_140 = arith.constant 4 : index
    %140 = vector.load %arg29[%c0_139, %c4_140] : memref<8x32xf32, #tpu.memory_space<vmem>>, vector<8x16xf32>
    %c0_141 = arith.constant 0 : index
    %c6_142 = arith.constant 6 : index
    %141 = vector.load %arg29[%c0_141, %c6_142] : memref<8x32xf32, #tpu.memory_space<vmem>>, vector<8x16xf32>
    %c0_143 = arith.constant 0 : index
    %c8_144 = arith.constant 8 : index
    %142 = vector.load %arg29[%c0_143, %c8_144] : memref<8x32xf32, #tpu.memory_space<vmem>>, vector<8x16xf32>
    %c0_145 = arith.constant 0 : index
    %c10_146 = arith.constant 10 : index
    %143 = vector.load %arg29[%c0_145, %c10_146] : memref<8x32xf32, #tpu.memory_space<vmem>>, vector<8x16xf32>
    %c0_147 = arith.constant 0 : index
    %c12_148 = arith.constant 12 : index
    %144 = vector.load %arg29[%c0_147, %c12_148] : memref<8x32xf32, #tpu.memory_space<vmem>>, vector<8x16xf32>
    %145 = tpu.concatenate %140, %141, %142, %143, %144 in 0 : vector<8x16xf32>, vector<8x16xf32>, vector<8x16xf32>, vector<8x16xf32>, vector<8x16xf32> -> vector<40x16xf32>
    %cst_149 = arith.constant dense<0.000000e+00> : vector<8x16xf32>
    %146 = tpu.matmul %101, %145, %cst_149 {dimension_numbers = #tpu.dot_dimension_numbers<[1], [0], [0], [1], [0, 0, 1, 1], [], []>} : vector<8x40xf32>, vector<40x16xf32>, vector<8x16xf32> -> vector<8x16xf32>
    %147 = vector.broadcast %103 : vector<8x1xf32> to vector<8x16xf32>
    %148 = arith.addf %146, %147 : vector<8x16xf32>
    %cst_150 = arith.constant 0.000000e+00 : f32
    %149 = vector.broadcast %cst_150 : f32 to vector<8x16xf32>
    %150 = arith.maximumf %148, %149 : vector<8x16xf32>
    %cst_151 = arith.constant dense<0.000000e+00> : vector<8x16xf32>
    %151 = tpu.matmul %105, %150, %cst_151 {dimension_numbers = #tpu.dot_dimension_numbers<[1], [0], [0], [1], [0, 0, 1, 1], [], []>} : vector<8x8xf32>, vector<8x16xf32>, vector<8x16xf32> -> vector<8x16xf32>
    %152 = vector.broadcast %107 : vector<8x1xf32> to vector<8x16xf32>
    %153 = arith.addf %151, %152 : vector<8x16xf32>
    %154 = arith.addf %138, %153 : vector<8x16xf32>
    %155 = vector.broadcast %1 : vector<1x16xf32> to vector<8x16xf32>
    %156 = arith.mulf %154, %155 : vector<8x16xf32>
    %c0_152 = arith.constant 0 : index
    %c8_153 = arith.constant 8 : index
    %157 = vector.load %arg29[%c0_152, %c8_153] : memref<8x32xf32, #tpu.memory_space<vmem>>, vector<8x16xf32>
    tpu.vector_store %arg29[%c0_152, %c8_153], %156 {strides = array<i32>} : memref<8x32xf32, #tpu.memory_space<vmem>>, vector<8x16xf32>,
    %c0_154 = arith.constant 0 : index
    %c0_155 = arith.constant 0 : index
    %158 = vector.load %arg29[%c0_154, %c0_155] : memref<8x32xf32, #tpu.memory_space<vmem>>, vector<8x16xf32>
    %c0_156 = arith.constant 0 : index
    %c4_157 = arith.constant 4 : index
    %159 = vector.load %arg29[%c0_156, %c4_157] : memref<8x32xf32, #tpu.memory_space<vmem>>, vector<8x16xf32>
    %c0_158 = arith.constant 0 : index
    %c8_159 = arith.constant 8 : index
    %160 = vector.load %arg29[%c0_158, %c8_159] : memref<8x32xf32, #tpu.memory_space<vmem>>, vector<8x16xf32>
    %c0_160 = arith.constant 0 : index
    %c12_161 = arith.constant 12 : index
    %161 = vector.load %arg29[%c0_160, %c12_161] : memref<8x32xf32, #tpu.memory_space<vmem>>, vector<8x16xf32>
    %c0_162 = arith.constant 0 : index
    %c16 = arith.constant 16 : index
    %162 = vector.load %arg29[%c0_162, %c16] : memref<8x32xf32, #tpu.memory_space<vmem>>, vector<8x16xf32>
    %163 = tpu.concatenate %158, %159, %160, %161, %162 in 0 : vector<8x16xf32>, vector<8x16xf32>, vector<8x16xf32>, vector<8x16xf32>, vector<8x16xf32> -> vector<40x16xf32>
    %cst_163 = arith.constant dense<0.000000e+00> : vector<8x16xf32>
    %164 = tpu.matmul %109, %163, %cst_163 {dimension_numbers = #tpu.dot_dimension_numbers<[1], [0], [0], [1], [0, 0, 1, 1], [], []>} : vector<8x40xf32>, vector<40x16xf32>, vector<8x16xf32> -> vector<8x16xf32>
    %165 = vector.broadcast %111 : vector<8x1xf32> to vector<8x16xf32>
    %166 = arith.addf %164, %165 : vector<8x16xf32>
    %cst_164 = arith.constant 0.000000e+00 : f32
    %167 = vector.broadcast %cst_164 : f32 to vector<8x16xf32>
    %168 = arith.maximumf %166, %167 : vector<8x16xf32>
    %cst_165 = arith.constant dense<0.000000e+00> : vector<8x16xf32>
    %169 = tpu.matmul %113, %168, %cst_165 {dimension_numbers = #tpu.dot_dimension_numbers<[1], [0], [0], [1], [0, 0, 1, 1], [], []>} : vector<8x8xf32>, vector<8x16xf32>, vector<8x16xf32> -> vector<8x16xf32>
    %170 = vector.broadcast %115 : vector<8x1xf32> to vector<8x16xf32>
    %171 = arith.addf %169, %170 : vector<8x16xf32>
    %172 = arith.addf %156, %171 : vector<8x16xf32>
    %173 = vector.broadcast %1 : vector<1x16xf32> to vector<8x16xf32>
    %174 = arith.mulf %172, %173 : vector<8x16xf32>
    %cst_166 = arith.constant dense<0.000000e+00> : vector<6x16xf32>
    %175 = tpu.matmul %116, %174, %cst_166 {dimension_numbers = #tpu.dot_dimension_numbers<[1], [0], [0], [1], [0, 0, 1, 1], [], []>} : vector<6x8xf32>, vector<8x16xf32>, vector<6x16xf32> -> vector<6x16xf32>
    %176 = vector.broadcast %117 : vector<6x1xf32> to vector<6x16xf32>
    %177 = arith.addf %175, %176 : vector<6x16xf32>
    %178 = vector.broadcast %1 : vector<1x16xf32> to vector<6x16xf32>
    %179 = arith.mulf %177, %178 : vector<6x16xf32>
    %180 = arith.addf %89, %179 : vector<6x16xf32>
    %c0_167 = arith.constant 0 : index
    %c0_168 = arith.constant 0 : index
    %c0_169 = arith.constant 0 : index
    %c0_170 = arith.constant 0 : index
    %181 = vector.load %arg28[%c0_167, %c0_168, %c0_169, %c0_170] : memref<3x1x6x16xf32, #tpu.memory_space<vmem>>, vector<1x1x6x16xf32>
    %182 = vector.shape_cast %181 : vector<1x1x6x16xf32> to vector<6x16xf32>
    %183 = vector.shape_cast %180 : vector<6x16xf32> to vector<1x1x6x16xf32>
    tpu.vector_store %arg28[%c0_167, %c0_168, %c0_169, %c0_170], %183 {strides = array<i32>} : memref<3x1x6x16xf32, #tpu.memory_space<vmem>>, vector<1x1x6x16xf32>,
    %cst_171 = arith.constant dense<0xFF800000> : vector<16xf32>
    %184 = vector.multi_reduction <maximumf>, %180, %cst_171 [0] : vector<6x16xf32> to vector<16xf32>
    %185 = vector.shape_cast %184 : vector<16xf32> to vector<1x16xf32>
    %186 = vector.broadcast %185 : vector<1x16xf32> to vector<6x16xf32>
    %187 = arith.subf %180, %186 : vector<6x16xf32>
    %188 = math.exp %187 : vector<6x16xf32>
    %cst_172 = arith.constant dense<0.000000e+00> : vector<16xf32>
    %189 = vector.multi_reduction <add>, %188, %cst_172 [0] : vector<6x16xf32> to vector<16xf32>
    %190 = vector.shape_cast %189 : vector<16xf32> to vector<1x16xf32>
    %191 = vector.broadcast %190 : vector<1x16xf32> to vector<6x16xf32>
    %192 = arith.divf %188, %191 : vector<6x16xf32>
    %193 = vector.broadcast %1 : vector<1x16xf32> to vector<6x16xf32>
    %194 = arith.mulf %192, %193 : vector<6x16xf32>
    %c0_173 = arith.constant 0 : index
    %c0_174 = arith.constant 0 : index
    %c0_175 = arith.constant 0 : index
    %c0_176 = arith.constant 0 : index
    %195 = vector.load %arg21[%c0_173, %c0_174, %c0_175, %c0_176] : memref<2x3x8x24xf32, #tpu.memory_space<vmem>>, vector<1x1x8x24xf32>
    %196 = vector.shape_cast %195 : vector<1x1x8x24xf32> to vector<8x24xf32>
    %c0_177 = arith.constant 0 : index
    %c0_178 = arith.constant 0 : index
    %c0_179 = arith.constant 0 : index
    %c0_180 = arith.constant 0 : index
    %197 = vector.load %arg22[%c0_177, %c0_178, %c0_179, %c0_180] : memref<2x3x8x1xf32, #tpu.memory_space<vmem>>, vector<1x1x8x1xf32>
    %198 = vector.shape_cast %197 : vector<1x1x8x1xf32> to vector<8x1xf32>
    %c0_181 = arith.constant 0 : index
    %c0_182 = arith.constant 0 : index
    %c0_183 = arith.constant 0 : index
    %c0_184 = arith.constant 0 : index
    %199 = vector.load %arg23[%c0_181, %c0_182, %c0_183, %c0_184] : memref<2x3x8x8xf32, #tpu.memory_space<vmem>>, vector<1x1x8x8xf32>
    %200 = vector.shape_cast %199 : vector<1x1x8x8xf32> to vector<8x8xf32>
    %c0_185 = arith.constant 0 : index
    %c0_186 = arith.constant 0 : index
    %c0_187 = arith.constant 0 : index
    %c0_188 = arith.constant 0 : index
    %201 = vector.load %arg24[%c0_185, %c0_186, %c0_187, %c0_188] : memref<2x3x8x1xf32, #tpu.memory_space<vmem>>, vector<1x1x8x1xf32>
    %202 = vector.shape_cast %201 : vector<1x1x8x1xf32> to vector<8x1xf32>
    %c0_189 = arith.constant 0 : index
    %c1_190 = arith.constant 1 : index
    %c0_191 = arith.constant 0 : index
    %c0_192 = arith.constant 0 : index
    %203 = vector.load %arg21[%c0_189, %c1_190, %c0_191, %c0_192] : memref<2x3x8x24xf32, #tpu.memory_space<vmem>>, vector<1x1x8x24xf32>
    %204 = vector.shape_cast %203 : vector<1x1x8x24xf32> to vector<8x24xf32>
    %c0_193 = arith.constant 0 : index
    %c1_194 = arith.constant 1 : index
    %c0_195 = arith.constant 0 : index
    %c0_196 = arith.constant 0 : index
    %205 = vector.load %arg22[%c0_193, %c1_194, %c0_195, %c0_196] : memref<2x3x8x1xf32, #tpu.memory_space<vmem>>, vector<1x1x8x1xf32>
    %206 = vector.shape_cast %205 : vector<1x1x8x1xf32> to vector<8x1xf32>
    %c0_197 = arith.constant 0 : index
    %c1_198 = arith.constant 1 : index
    %c0_199 = arith.constant 0 : index
    %c0_200 = arith.constant 0 : index
    %207 = vector.load %arg23[%c0_197, %c1_198, %c0_199, %c0_200] : memref<2x3x8x8xf32, #tpu.memory_space<vmem>>, vector<1x1x8x8xf32>
    %208 = vector.shape_cast %207 : vector<1x1x8x8xf32> to vector<8x8xf32>
    %c0_201 = arith.constant 0 : index
    %c1_202 = arith.constant 1 : index
    %c0_203 = arith.constant 0 : index
    %c0_204 = arith.constant 0 : index
    %209 = vector.load %arg24[%c0_201, %c1_202, %c0_203, %c0_204] : memref<2x3x8x1xf32, #tpu.memory_space<vmem>>, vector<1x1x8x1xf32>
    %210 = vector.shape_cast %209 : vector<1x1x8x1xf32> to vector<8x1xf32>
    %c0_205 = arith.constant 0 : index
    %c2_206 = arith.constant 2 : index
    %c0_207 = arith.constant 0 : index
    %c0_208 = arith.constant 0 : index
    %211 = vector.load %arg21[%c0_205, %c2_206, %c0_207, %c0_208] : memref<2x3x8x24xf32, #tpu.memory_space<vmem>>, vector<1x1x8x24xf32>
    %212 = vector.shape_cast %211 : vector<1x1x8x24xf32> to vector<8x24xf32>
    %c0_209 = arith.constant 0 : index
    %c2_210 = arith.constant 2 : index
    %c0_211 = arith.constant 0 : index
    %c0_212 = arith.constant 0 : index
    %213 = vector.load %arg22[%c0_209, %c2_210, %c0_211, %c0_212] : memref<2x3x8x1xf32, #tpu.memory_space<vmem>>, vector<1x1x8x1xf32>
    %214 = vector.shape_cast %213 : vector<1x1x8x1xf32> to vector<8x1xf32>
    %c0_213 = arith.constant 0 : index
    %c2_214 = arith.constant 2 : index
    %c0_215 = arith.constant 0 : index
    %c0_216 = arith.constant 0 : index
    %215 = vector.load %arg23[%c0_213, %c2_214, %c0_215, %c0_216] : memref<2x3x8x8xf32, #tpu.memory_space<vmem>>, vector<1x1x8x8xf32>
    %216 = vector.shape_cast %215 : vector<1x1x8x8xf32> to vector<8x8xf32>
    %c0_217 = arith.constant 0 : index
    %c2_218 = arith.constant 2 : index
    %c0_219 = arith.constant 0 : index
    %c0_220 = arith.constant 0 : index
    %217 = vector.load %arg24[%c0_217, %c2_218, %c0_219, %c0_220] : memref<2x3x8x1xf32, #tpu.memory_space<vmem>>, vector<1x1x8x1xf32>
    %218 = vector.shape_cast %217 : vector<1x1x8x1xf32> to vector<8x1xf32>
    %c0_221 = arith.constant 0 : index
    %c0_222 = arith.constant 0 : index
    %c0_223 = arith.constant 0 : index
    %219 = vector.load %arg19[%c0_221, %c0_222, %c0_223] : memref<2x8x6xf32, #tpu.memory_space<vmem>>, vector<1x8x6xf32>
    %220 = vector.shape_cast %219 : vector<1x8x6xf32> to vector<8x6xf32>
    %c0_224 = arith.constant 0 : index
    %c0_225 = arith.constant 0 : index
    %c0_226 = arith.constant 0 : index
    %221 = vector.load %arg20[%c0_224, %c0_225, %c0_226] : memref<2x8x1xf32, #tpu.memory_space<vmem>>, vector<1x8x1xf32>
    %222 = vector.shape_cast %221 : vector<1x8x1xf32> to vector<8x1xf32>
    %c0_227 = arith.constant 0 : index
    %c0_228 = arith.constant 0 : index
    %c0_229 = arith.constant 0 : index
    %223 = vector.load %arg25[%c0_227, %c0_228, %c0_229] : memref<2x6x8xf32, #tpu.memory_space<vmem>>, vector<1x6x8xf32>
    %224 = vector.shape_cast %223 : vector<1x6x8xf32> to vector<6x8xf32>
    %c0_230 = arith.constant 0 : index
    %c0_231 = arith.constant 0 : index
    %c0_232 = arith.constant 0 : index
    %225 = vector.load %arg26[%c0_230, %c0_231, %c0_232] : memref<2x6x1xf32, #tpu.memory_space<vmem>>, vector<1x6x1xf32>
    %226 = vector.shape_cast %225 : vector<1x6x1xf32> to vector<6x1xf32>
    %cst_233 = arith.constant dense<0.000000e+00> : vector<8x16xf32>
    %227 = tpu.matmul %220, %194, %cst_233 {dimension_numbers = #tpu.dot_dimension_numbers<[1], [0], [0], [1], [0, 0, 1, 1], [], []>} : vector<8x6xf32>, vector<6x16xf32>, vector<8x16xf32> -> vector<8x16xf32>
    %228 = vector.broadcast %222 : vector<8x1xf32> to vector<8x16xf32>
    %229 = arith.addf %227, %228 : vector<8x16xf32>
    %c0_234 = arith.constant 0 : index
    %c8_235 = arith.constant 8 : index
    %230 = vector.load %arg29[%c0_234, %c8_235] : memref<8x32xf32, #tpu.memory_space<vmem>>, vector<8x16xf32>
    tpu.vector_store %arg29[%c0_234, %c8_235], %229 {strides = array<i32>} : memref<8x32xf32, #tpu.memory_space<vmem>>, vector<8x16xf32>,
    %c0_236 = arith.constant 0 : index
    %c7_237 = arith.constant 7 : index
    %231 = vector.load %arg29[%c0_236, %c7_237] : memref<8x32xf32, #tpu.memory_space<vmem>>, vector<8x16xf32>
    %c0_238 = arith.constant 0 : index
    %c8_239 = arith.constant 8 : index
    %232 = vector.load %arg29[%c0_238, %c8_239] : memref<8x32xf32, #tpu.memory_space<vmem>>, vector<8x16xf32>
    %c0_240 = arith.constant 0 : index
    %c9_241 = arith.constant 9 : index
    %233 = vector.load %arg29[%c0_240, %c9_241] : memref<8x32xf32, #tpu.memory_space<vmem>>, vector<8x16xf32>
    %234 = tpu.concatenate %231, %232, %233 in 0 : vector<8x16xf32>, vector<8x16xf32>, vector<8x16xf32> -> vector<24x16xf32>
    %cst_242 = arith.constant dense<0.000000e+00> : vector<8x16xf32>
    %235 = tpu.matmul %196, %234, %cst_242 {dimension_numbers = #tpu.dot_dimension_numbers<[1], [0], [0], [1], [0, 0, 1, 1], [], []>} : vector<8x24xf32>, vector<24x16xf32>, vector<8x16xf32> -> vector<8x16xf32>
    %236 = vector.broadcast %198 : vector<8x1xf32> to vector<8x16xf32>
    %237 = arith.addf %235, %236 : vector<8x16xf32>
    %cst_243 = arith.constant 0.000000e+00 : f32
    %238 = vector.broadcast %cst_243 : f32 to vector<8x16xf32>
    %239 = arith.maximumf %237, %238 : vector<8x16xf32>
    %cst_244 = arith.constant dense<0.000000e+00> : vector<8x16xf32>
    %240 = tpu.matmul %200, %239, %cst_244 {dimension_numbers = #tpu.dot_dimension_numbers<[1], [0], [0], [1], [0, 0, 1, 1], [], []>} : vector<8x8xf32>, vector<8x16xf32>, vector<8x16xf32> -> vector<8x16xf32>
    %241 = vector.broadcast %202 : vector<8x1xf32> to vector<8x16xf32>
    %242 = arith.addf %240, %241 : vector<8x16xf32>
    %243 = arith.addf %229, %242 : vector<8x16xf32>
    %244 = vector.broadcast %1 : vector<1x16xf32> to vector<8x16xf32>
    %245 = arith.mulf %243, %244 : vector<8x16xf32>
    %c0_245 = arith.constant 0 : index
    %c8_246 = arith.constant 8 : index
    %246 = vector.load %arg29[%c0_245, %c8_246] : memref<8x32xf32, #tpu.memory_space<vmem>>, vector<8x16xf32>
    tpu.vector_store %arg29[%c0_245, %c8_246], %245 {strides = array<i32>} : memref<8x32xf32, #tpu.memory_space<vmem>>, vector<8x16xf32>,
    %c0_247 = arith.constant 0 : index
    %c6_248 = arith.constant 6 : index
    %247 = vector.load %arg29[%c0_247, %c6_248] : memref<8x32xf32, #tpu.memory_space<vmem>>, vector<8x16xf32>
    %c0_249 = arith.constant 0 : index
    %c8_250 = arith.constant 8 : index
    %248 = vector.load %arg29[%c0_249, %c8_250] : memref<8x32xf32, #tpu.memory_space<vmem>>, vector<8x16xf32>
    %c0_251 = arith.constant 0 : index
    %c10_252 = arith.constant 10 : index
    %249 = vector.load %arg29[%c0_251, %c10_252] : memref<8x32xf32, #tpu.memory_space<vmem>>, vector<8x16xf32>
    %250 = tpu.concatenate %247, %248, %249 in 0 : vector<8x16xf32>, vector<8x16xf32>, vector<8x16xf32> -> vector<24x16xf32>
    %cst_253 = arith.constant dense<0.000000e+00> : vector<8x16xf32>
    %251 = tpu.matmul %204, %250, %cst_253 {dimension_numbers = #tpu.dot_dimension_numbers<[1], [0], [0], [1], [0, 0, 1, 1], [], []>} : vector<8x24xf32>, vector<24x16xf32>, vector<8x16xf32> -> vector<8x16xf32>
    %252 = vector.broadcast %206 : vector<8x1xf32> to vector<8x16xf32>
    %253 = arith.addf %251, %252 : vector<8x16xf32>
    %cst_254 = arith.constant 0.000000e+00 : f32
    %254 = vector.broadcast %cst_254 : f32 to vector<8x16xf32>
    %255 = arith.maximumf %253, %254 : vector<8x16xf32>
    %cst_255 = arith.constant dense<0.000000e+00> : vector<8x16xf32>
    %256 = tpu.matmul %208, %255, %cst_255 {dimension_numbers = #tpu.dot_dimension_numbers<[1], [0], [0], [1], [0, 0, 1, 1], [], []>} : vector<8x8xf32>, vector<8x16xf32>, vector<8x16xf32> -> vector<8x16xf32>
    %257 = vector.broadcast %210 : vector<8x1xf32> to vector<8x16xf32>
    %258 = arith.addf %256, %257 : vector<8x16xf32>
    %259 = arith.addf %245, %258 : vector<8x16xf32>
    %260 = vector.broadcast %1 : vector<1x16xf32> to vector<8x16xf32>
    %261 = arith.mulf %259, %260 : vector<8x16xf32>
    %c0_256 = arith.constant 0 : index
    %c8_257 = arith.constant 8 : index
    %262 = vector.load %arg29[%c0_256, %c8_257] : memref<8x32xf32, #tpu.memory_space<vmem>>, vector<8x16xf32>
    tpu.vector_store %arg29[%c0_256, %c8_257], %261 {strides = array<i32>} : memref<8x32xf32, #tpu.memory_space<vmem>>, vector<8x16xf32>,
    %c0_258 = arith.constant 0 : index
    %c4_259 = arith.constant 4 : index
    %263 = vector.load %arg29[%c0_258, %c4_259] : memref<8x32xf32, #tpu.memory_space<vmem>>, vector<8x16xf32>
    %c0_260 = arith.constant 0 : index
    %c8_261 = arith.constant 8 : index
    %264 = vector.load %arg29[%c0_260, %c8_261] : memref<8x32xf32, #tpu.memory_space<vmem>>, vector<8x16xf32>
    %c0_262 = arith.constant 0 : index
    %c12_263 = arith.constant 12 : index
    %265 = vector.load %arg29[%c0_262, %c12_263] : memref<8x32xf32, #tpu.memory_space<vmem>>, vector<8x16xf32>
    %266 = tpu.concatenate %263, %264, %265 in 0 : vector<8x16xf32>, vector<8x16xf32>, vector<8x16xf32> -> vector<24x16xf32>
    %cst_264 = arith.constant dense<0.000000e+00> : vector<8x16xf32>
    %267 = tpu.matmul %212, %266, %cst_264 {dimension_numbers = #tpu.dot_dimension_numbers<[1], [0], [0], [1], [0, 0, 1, 1], [], []>} : vector<8x24xf32>, vector<24x16xf32>, vector<8x16xf32> -> vector<8x16xf32>
    %268 = vector.broadcast %214 : vector<8x1xf32> to vector<8x16xf32>
    %269 = arith.addf %267, %268 : vector<8x16xf32>
    %cst_265 = arith.constant 0.000000e+00 : f32
    %270 = vector.broadcast %cst_265 : f32 to vector<8x16xf32>
    %271 = arith.maximumf %269, %270 : vector<8x16xf32>
    %cst_266 = arith.constant dense<0.000000e+00> : vector<8x16xf32>
    %272 = tpu.matmul %216, %271, %cst_266 {dimension_numbers = #tpu.dot_dimension_numbers<[1], [0], [0], [1], [0, 0, 1, 1], [], []>} : vector<8x8xf32>, vector<8x16xf32>, vector<8x16xf32> -> vector<8x16xf32>
    %273 = vector.broadcast %218 : vector<8x1xf32> to vector<8x16xf32>
    %274 = arith.addf %272, %273 : vector<8x16xf32>
    %275 = arith.addf %261, %274 : vector<8x16xf32>
    %276 = vector.broadcast %1 : vector<1x16xf32> to vector<8x16xf32>
    %277 = arith.mulf %275, %276 : vector<8x16xf32>
    %cst_267 = arith.constant dense<0.000000e+00> : vector<6x16xf32>
    %278 = tpu.matmul %224, %277, %cst_267 {dimension_numbers = #tpu.dot_dimension_numbers<[1], [0], [0], [1], [0, 0, 1, 1], [], []>} : vector<6x8xf32>, vector<8x16xf32>, vector<6x16xf32> -> vector<6x16xf32>
    %279 = vector.broadcast %226 : vector<6x1xf32> to vector<6x16xf32>
    %280 = arith.addf %278, %279 : vector<6x16xf32>
    %281 = vector.broadcast %1 : vector<1x16xf32> to vector<6x16xf32>
    %282 = arith.mulf %280, %281 : vector<6x16xf32>
    %c1_268 = arith.constant 1 : index
    %c0_269 = arith.constant 0 : index
    %c0_270 = arith.constant 0 : index
    %c0_271 = arith.constant 0 : index
    %283 = vector.load %arg28[%c1_268, %c0_269, %c0_270, %c0_271] : memref<3x1x6x16xf32, #tpu.memory_space<vmem>>, vector<1x1x6x16xf32>
    %284 = vector.shape_cast %283 : vector<1x1x6x16xf32> to vector<6x16xf32>
    %285 = vector.shape_cast %282 : vector<6x16xf32> to vector<1x1x6x16xf32>
    tpu.vector_store %arg28[%c1_268, %c0_269, %c0_270, %c0_271], %285 {strides = array<i32>} : memref<3x1x6x16xf32, #tpu.memory_space<vmem>>, vector<1x1x6x16xf32>,
    %cst_272 = arith.constant dense<0xFF800000> : vector<16xf32>
    %286 = vector.multi_reduction <maximumf>, %282, %cst_272 [0] : vector<6x16xf32> to vector<16xf32>
    %287 = vector.shape_cast %286 : vector<16xf32> to vector<1x16xf32>
    %288 = vector.broadcast %287 : vector<1x16xf32> to vector<6x16xf32>
    %289 = arith.subf %282, %288 : vector<6x16xf32>
    %290 = math.exp %289 : vector<6x16xf32>
    %cst_273 = arith.constant dense<0.000000e+00> : vector<16xf32>
    %291 = vector.multi_reduction <add>, %290, %cst_273 [0] : vector<6x16xf32> to vector<16xf32>
    %292 = vector.shape_cast %291 : vector<16xf32> to vector<1x16xf32>
    %293 = vector.broadcast %292 : vector<1x16xf32> to vector<6x16xf32>
    %294 = arith.divf %290, %293 : vector<6x16xf32>
    %295 = vector.broadcast %1 : vector<1x16xf32> to vector<6x16xf32>
    %296 = arith.mulf %294, %295 : vector<6x16xf32>
    %c1_274 = arith.constant 1 : index
    %c0_275 = arith.constant 0 : index
    %c0_276 = arith.constant 0 : index
    %c0_277 = arith.constant 0 : index
    %297 = vector.load %arg21[%c1_274, %c0_275, %c0_276, %c0_277] : memref<2x3x8x24xf32, #tpu.memory_space<vmem>>, vector<1x1x8x24xf32>
    %298 = vector.shape_cast %297 : vector<1x1x8x24xf32> to vector<8x24xf32>
    %c1_278 = arith.constant 1 : index
    %c0_279 = arith.constant 0 : index
    %c0_280 = arith.constant 0 : index
    %c0_281 = arith.constant 0 : index
    %299 = vector.load %arg22[%c1_278, %c0_279, %c0_280, %c0_281] : memref<2x3x8x1xf32, #tpu.memory_space<vmem>>, vector<1x1x8x1xf32>
    %300 = vector.shape_cast %299 : vector<1x1x8x1xf32> to vector<8x1xf32>
    %c1_282 = arith.constant 1 : index
    %c0_283 = arith.constant 0 : index
    %c0_284 = arith.constant 0 : index
    %c0_285 = arith.constant 0 : index
    %301 = vector.load %arg23[%c1_282, %c0_283, %c0_284, %c0_285] : memref<2x3x8x8xf32, #tpu.memory_space<vmem>>, vector<1x1x8x8xf32>
    %302 = vector.shape_cast %301 : vector<1x1x8x8xf32> to vector<8x8xf32>
    %c1_286 = arith.constant 1 : index
    %c0_287 = arith.constant 0 : index
    %c0_288 = arith.constant 0 : index
    %c0_289 = arith.constant 0 : index
    %303 = vector.load %arg24[%c1_286, %c0_287, %c0_288, %c0_289] : memref<2x3x8x1xf32, #tpu.memory_space<vmem>>, vector<1x1x8x1xf32>
    %304 = vector.shape_cast %303 : vector<1x1x8x1xf32> to vector<8x1xf32>
    %c1_290 = arith.constant 1 : index
    %c1_291 = arith.constant 1 : index
    %c0_292 = arith.constant 0 : index
    %c0_293 = arith.constant 0 : index
    %305 = vector.load %arg21[%c1_290, %c1_291, %c0_292, %c0_293] : memref<2x3x8x24xf32, #tpu.memory_space<vmem>>, vector<1x1x8x24xf32>
    %306 = vector.shape_cast %305 : vector<1x1x8x24xf32> to vector<8x24xf32>
    %c1_294 = arith.constant 1 : index
    %c1_295 = arith.constant 1 : index
    %c0_296 = arith.constant 0 : index
    %c0_297 = arith.constant 0 : index
    %307 = vector.load %arg22[%c1_294, %c1_295, %c0_296, %c0_297] : memref<2x3x8x1xf32, #tpu.memory_space<vmem>>, vector<1x1x8x1xf32>
    %308 = vector.shape_cast %307 : vector<1x1x8x1xf32> to vector<8x1xf32>
    %c1_298 = arith.constant 1 : index
    %c1_299 = arith.constant 1 : index
    %c0_300 = arith.constant 0 : index
    %c0_301 = arith.constant 0 : index
    %309 = vector.load %arg23[%c1_298, %c1_299, %c0_300, %c0_301] : memref<2x3x8x8xf32, #tpu.memory_space<vmem>>, vector<1x1x8x8xf32>
    %310 = vector.shape_cast %309 : vector<1x1x8x8xf32> to vector<8x8xf32>
    %c1_302 = arith.constant 1 : index
    %c1_303 = arith.constant 1 : index
    %c0_304 = arith.constant 0 : index
    %c0_305 = arith.constant 0 : index
    %311 = vector.load %arg24[%c1_302, %c1_303, %c0_304, %c0_305] : memref<2x3x8x1xf32, #tpu.memory_space<vmem>>, vector<1x1x8x1xf32>
    %312 = vector.shape_cast %311 : vector<1x1x8x1xf32> to vector<8x1xf32>
    %c1_306 = arith.constant 1 : index
    %c2_307 = arith.constant 2 : index
    %c0_308 = arith.constant 0 : index
    %c0_309 = arith.constant 0 : index
    %313 = vector.load %arg21[%c1_306, %c2_307, %c0_308, %c0_309] : memref<2x3x8x24xf32, #tpu.memory_space<vmem>>, vector<1x1x8x24xf32>
    %314 = vector.shape_cast %313 : vector<1x1x8x24xf32> to vector<8x24xf32>
    %c1_310 = arith.constant 1 : index
    %c2_311 = arith.constant 2 : index
    %c0_312 = arith.constant 0 : index
    %c0_313 = arith.constant 0 : index
    %315 = vector.load %arg22[%c1_310, %c2_311, %c0_312, %c0_313] : memref<2x3x8x1xf32, #tpu.memory_space<vmem>>, vector<1x1x8x1xf32>
    %316 = vector.shape_cast %315 : vector<1x1x8x1xf32> to vector<8x1xf32>
    %c1_314 = arith.constant 1 : index
    %c2_315 = arith.constant 2 : index
    %c0_316 = arith.constant 0 : index
    %c0_317 = arith.constant 0 : index
    %317 = vector.load %arg23[%c1_314, %c2_315, %c0_316, %c0_317] : memref<2x3x8x8xf32, #tpu.memory_space<vmem>>, vector<1x1x8x8xf32>
    %318 = vector.shape_cast %317 : vector<1x1x8x8xf32> to vector<8x8xf32>
    %c1_318 = arith.constant 1 : index
    %c2_319 = arith.constant 2 : index
    %c0_320 = arith.constant 0 : index
    %c0_321 = arith.constant 0 : index
    %319 = vector.load %arg24[%c1_318, %c2_319, %c0_320, %c0_321] : memref<2x3x8x1xf32, #tpu.memory_space<vmem>>, vector<1x1x8x1xf32>
    %320 = vector.shape_cast %319 : vector<1x1x8x1xf32> to vector<8x1xf32>
    %c1_322 = arith.constant 1 : index
    %c0_323 = arith.constant 0 : index
    %c0_324 = arith.constant 0 : index
    %321 = vector.load %arg19[%c1_322, %c0_323, %c0_324] : memref<2x8x6xf32, #tpu.memory_space<vmem>>, vector<1x8x6xf32>
    %322 = vector.shape_cast %321 : vector<1x8x6xf32> to vector<8x6xf32>
    %c1_325 = arith.constant 1 : index
    %c0_326 = arith.constant 0 : index
    %c0_327 = arith.constant 0 : index
    %323 = vector.load %arg20[%c1_325, %c0_326, %c0_327] : memref<2x8x1xf32, #tpu.memory_space<vmem>>, vector<1x8x1xf32>
    %324 = vector.shape_cast %323 : vector<1x8x1xf32> to vector<8x1xf32>
    %c1_328 = arith.constant 1 : index
    %c0_329 = arith.constant 0 : index
    %c0_330 = arith.constant 0 : index
    %325 = vector.load %arg25[%c1_328, %c0_329, %c0_330] : memref<2x6x8xf32, #tpu.memory_space<vmem>>, vector<1x6x8xf32>
    %326 = vector.shape_cast %325 : vector<1x6x8xf32> to vector<6x8xf32>
    %c1_331 = arith.constant 1 : index
    %c0_332 = arith.constant 0 : index
    %c0_333 = arith.constant 0 : index
    %327 = vector.load %arg26[%c1_331, %c0_332, %c0_333] : memref<2x6x1xf32, #tpu.memory_space<vmem>>, vector<1x6x1xf32>
    %328 = vector.shape_cast %327 : vector<1x6x1xf32> to vector<6x1xf32>
    %cst_334 = arith.constant dense<0.000000e+00> : vector<8x16xf32>
    %329 = tpu.matmul %322, %296, %cst_334 {dimension_numbers = #tpu.dot_dimension_numbers<[1], [0], [0], [1], [0, 0, 1, 1], [], []>} : vector<8x6xf32>, vector<6x16xf32>, vector<8x16xf32> -> vector<8x16xf32>
    %330 = vector.broadcast %324 : vector<8x1xf32> to vector<8x16xf32>
    %331 = arith.addf %329, %330 : vector<8x16xf32>
    %c0_335 = arith.constant 0 : index
    %c8_336 = arith.constant 8 : index
    %332 = vector.load %arg29[%c0_335, %c8_336] : memref<8x32xf32, #tpu.memory_space<vmem>>, vector<8x16xf32>
    tpu.vector_store %arg29[%c0_335, %c8_336], %331 {strides = array<i32>} : memref<8x32xf32, #tpu.memory_space<vmem>>, vector<8x16xf32>,
    %c0_337 = arith.constant 0 : index
    %c7_338 = arith.constant 7 : index
    %333 = vector.load %arg29[%c0_337, %c7_338] : memref<8x32xf32, #tpu.memory_space<vmem>>, vector<8x16xf32>
    %c0_339 = arith.constant 0 : index
    %c8_340 = arith.constant 8 : index
    %334 = vector.load %arg29[%c0_339, %c8_340] : memref<8x32xf32, #tpu.memory_space<vmem>>, vector<8x16xf32>
    %c0_341 = arith.constant 0 : index
    %c9_342 = arith.constant 9 : index
    %335 = vector.load %arg29[%c0_341, %c9_342] : memref<8x32xf32, #tpu.memory_space<vmem>>, vector<8x16xf32>
    %336 = tpu.concatenate %333, %334, %335 in 0 : vector<8x16xf32>, vector<8x16xf32>, vector<8x16xf32> -> vector<24x16xf32>
    %cst_343 = arith.constant dense<0.000000e+00> : vector<8x16xf32>
    %337 = tpu.matmul %298, %336, %cst_343 {dimension_numbers = #tpu.dot_dimension_numbers<[1], [0], [0], [1], [0, 0, 1, 1], [], []>} : vector<8x24xf32>, vector<24x16xf32>, vector<8x16xf32> -> vector<8x16xf32>
    %338 = vector.broadcast %300 : vector<8x1xf32> to vector<8x16xf32>
    %339 = arith.addf %337, %338 : vector<8x16xf32>
    %cst_344 = arith.constant 0.000000e+00 : f32
    %340 = vector.broadcast %cst_344 : f32 to vector<8x16xf32>
    %341 = arith.maximumf %339, %340 : vector<8x16xf32>
    %cst_345 = arith.constant dense<0.000000e+00> : vector<8x16xf32>
    %342 = tpu.matmul %302, %341, %cst_345 {dimension_numbers = #tpu.dot_dimension_numbers<[1], [0], [0], [1], [0, 0, 1, 1], [], []>} : vector<8x8xf32>, vector<8x16xf32>, vector<8x16xf32> -> vector<8x16xf32>
    %343 = vector.broadcast %304 : vector<8x1xf32> to vector<8x16xf32>
    %344 = arith.addf %342, %343 : vector<8x16xf32>
    %345 = arith.addf %331, %344 : vector<8x16xf32>
    %346 = vector.broadcast %1 : vector<1x16xf32> to vector<8x16xf32>
    %347 = arith.mulf %345, %346 : vector<8x16xf32>
    %c0_346 = arith.constant 0 : index
    %c8_347 = arith.constant 8 : index
    %348 = vector.load %arg29[%c0_346, %c8_347] : memref<8x32xf32, #tpu.memory_space<vmem>>, vector<8x16xf32>
    tpu.vector_store %arg29[%c0_346, %c8_347], %347 {strides = array<i32>} : memref<8x32xf32, #tpu.memory_space<vmem>>, vector<8x16xf32>,
    %c0_348 = arith.constant 0 : index
    %c6_349 = arith.constant 6 : index
    %349 = vector.load %arg29[%c0_348, %c6_349] : memref<8x32xf32, #tpu.memory_space<vmem>>, vector<8x16xf32>
    %c0_350 = arith.constant 0 : index
    %c8_351 = arith.constant 8 : index
    %350 = vector.load %arg29[%c0_350, %c8_351] : memref<8x32xf32, #tpu.memory_space<vmem>>, vector<8x16xf32>
    %c0_352 = arith.constant 0 : index
    %c10_353 = arith.constant 10 : index
    %351 = vector.load %arg29[%c0_352, %c10_353] : memref<8x32xf32, #tpu.memory_space<vmem>>, vector<8x16xf32>
    %352 = tpu.concatenate %349, %350, %351 in 0 : vector<8x16xf32>, vector<8x16xf32>, vector<8x16xf32> -> vector<24x16xf32>
    %cst_354 = arith.constant dense<0.000000e+00> : vector<8x16xf32>
    %353 = tpu.matmul %306, %352, %cst_354 {dimension_numbers = #tpu.dot_dimension_numbers<[1], [0], [0], [1], [0, 0, 1, 1], [], []>} : vector<8x24xf32>, vector<24x16xf32>, vector<8x16xf32> -> vector<8x16xf32>
    %354 = vector.broadcast %308 : vector<8x1xf32> to vector<8x16xf32>
    %355 = arith.addf %353, %354 : vector<8x16xf32>
    %cst_355 = arith.constant 0.000000e+00 : f32
    %356 = vector.broadcast %cst_355 : f32 to vector<8x16xf32>
    %357 = arith.maximumf %355, %356 : vector<8x16xf32>
    %cst_356 = arith.constant dense<0.000000e+00> : vector<8x16xf32>
    %358 = tpu.matmul %310, %357, %cst_356 {dimension_numbers = #tpu.dot_dimension_numbers<[1], [0], [0], [1], [0, 0, 1, 1], [], []>} : vector<8x8xf32>, vector<8x16xf32>, vector<8x16xf32> -> vector<8x16xf32>
    %359 = vector.broadcast %312 : vector<8x1xf32> to vector<8x16xf32>
    %360 = arith.addf %358, %359 : vector<8x16xf32>
    %361 = arith.addf %347, %360 : vector<8x16xf32>
    %362 = vector.broadcast %1 : vector<1x16xf32> to vector<8x16xf32>
    %363 = arith.mulf %361, %362 : vector<8x16xf32>
    %c0_357 = arith.constant 0 : index
    %c8_358 = arith.constant 8 : index
    %364 = vector.load %arg29[%c0_357, %c8_358] : memref<8x32xf32, #tpu.memory_space<vmem>>, vector<8x16xf32>
    tpu.vector_store %arg29[%c0_357, %c8_358], %363 {strides = array<i32>} : memref<8x32xf32, #tpu.memory_space<vmem>>, vector<8x16xf32>,
    %c0_359 = arith.constant 0 : index
    %c4_360 = arith.constant 4 : index
    %365 = vector.load %arg29[%c0_359, %c4_360] : memref<8x32xf32, #tpu.memory_space<vmem>>, vector<8x16xf32>
    %c0_361 = arith.constant 0 : index
    %c8_362 = arith.constant 8 : index
    %366 = vector.load %arg29[%c0_361, %c8_362] : memref<8x32xf32, #tpu.memory_space<vmem>>, vector<8x16xf32>
    %c0_363 = arith.constant 0 : index
    %c12_364 = arith.constant 12 : index
    %367 = vector.load %arg29[%c0_363, %c12_364] : memref<8x32xf32, #tpu.memory_space<vmem>>, vector<8x16xf32>
    %368 = tpu.concatenate %365, %366, %367 in 0 : vector<8x16xf32>, vector<8x16xf32>, vector<8x16xf32> -> vector<24x16xf32>
    %cst_365 = arith.constant dense<0.000000e+00> : vector<8x16xf32>
    %369 = tpu.matmul %314, %368, %cst_365 {dimension_numbers = #tpu.dot_dimension_numbers<[1], [0], [0], [1], [0, 0, 1, 1], [], []>} : vector<8x24xf32>, vector<24x16xf32>, vector<8x16xf32> -> vector<8x16xf32>
    %370 = vector.broadcast %316 : vector<8x1xf32> to vector<8x16xf32>
    %371 = arith.addf %369, %370 : vector<8x16xf32>
    %cst_366 = arith.constant 0.000000e+00 : f32
    %372 = vector.broadcast %cst_366 : f32 to vector<8x16xf32>
    %373 = arith.maximumf %371, %372 : vector<8x16xf32>
    %cst_367 = arith.constant dense<0.000000e+00> : vector<8x16xf32>
    %374 = tpu.matmul %318, %373, %cst_367 {dimension_numbers = #tpu.dot_dimension_numbers<[1], [0], [0], [1], [0, 0, 1, 1], [], []>} : vector<8x8xf32>, vector<8x16xf32>, vector<8x16xf32> -> vector<8x16xf32>
    %375 = vector.broadcast %320 : vector<8x1xf32> to vector<8x16xf32>
    %376 = arith.addf %374, %375 : vector<8x16xf32>
    %377 = arith.addf %363, %376 : vector<8x16xf32>
    %378 = vector.broadcast %1 : vector<1x16xf32> to vector<8x16xf32>
    %379 = arith.mulf %377, %378 : vector<8x16xf32>
    %cst_368 = arith.constant dense<0.000000e+00> : vector<6x16xf32>
    %380 = tpu.matmul %326, %379, %cst_368 {dimension_numbers = #tpu.dot_dimension_numbers<[1], [0], [0], [1], [0, 0, 1, 1], [], []>} : vector<6x8xf32>, vector<8x16xf32>, vector<6x16xf32> -> vector<6x16xf32>
    %381 = vector.broadcast %328 : vector<6x1xf32> to vector<6x16xf32>
    %382 = arith.addf %380, %381 : vector<6x16xf32>
    %383 = vector.broadcast %1 : vector<1x16xf32> to vector<6x16xf32>
    %384 = arith.mulf %382, %383 : vector<6x16xf32>
    %c2_369 = arith.constant 2 : index
    %c0_370 = arith.constant 0 : index
    %c0_371 = arith.constant 0 : index
    %c0_372 = arith.constant 0 : index
    %385 = vector.load %arg28[%c2_369, %c0_370, %c0_371, %c0_372] : memref<3x1x6x16xf32, #tpu.memory_space<vmem>>, vector<1x1x6x16xf32>
    %386 = vector.shape_cast %385 : vector<1x1x6x16xf32> to vector<6x16xf32>
    %387 = vector.shape_cast %384 : vector<6x16xf32> to vector<1x1x6x16xf32>
    tpu.vector_store %arg28[%c2_369, %c0_370, %c0_371, %c0_372], %387 {strides = array<i32>} : memref<3x1x6x16xf32, #tpu.memory_space<vmem>>, vector<1x1x6x16xf32>,
    %c0_373 = arith.constant 0 : index
    %c0_374 = arith.constant 0 : index
    %c0_375 = arith.constant 0 : index
    %388 = vector.load %arg27[%c0_373, %c0_374, %c0_375] : memref<1x8x16xf32, #tpu.memory_space<vmem>>, vector<1x8x16xf32>
    %389 = vector.shape_cast %388 : vector<1x8x16xf32> to vector<8x16xf32>
    %390 = vector.shape_cast %379 : vector<8x16xf32> to vector<1x8x16xf32>
    tpu.vector_store %arg27[%c0_373, %c0_374, %c0_375], %390 {strides = array<i32>} : memref<1x8x16xf32, #tpu.memory_space<vmem>>, vector<1x8x16xf32>,
    return
  }
  func.func @transform_0(%arg0: i32) -> (i32, i32, i32) {
    %c0_i32 = arith.constant 0 : i32
    %c0_i32_0 = arith.constant 0 : i32
    %c0_i32_1 = arith.constant 0 : i32
    return %arg0, %c0_i32, %c0_i32_0 : i32, i32, i32
  }
  func.func @transform_1(%arg0: i32) -> (i32, i32, i32) {
    %c0_i32 = arith.constant 0 : i32
    %c0_i32_0 = arith.constant 0 : i32
    %c0_i32_1 = arith.constant 0 : i32
    return %arg0, %c0_i32, %c0_i32_0 : i32, i32, i32
  }
  func.func @transform_2(%arg0: i32) -> (i32, i32) {
    %c0_i32 = arith.constant 0 : i32
    %c0_i32_0 = arith.constant 0 : i32
    %c0_i32_1 = arith.constant 0 : i32
    return %c0_i32, %c0_i32_0 : i32, i32
  }
  func.func @transform_3(%arg0: i32) -> (i32, i32) {
    %c0_i32 = arith.constant 0 : i32
    %c0_i32_0 = arith.constant 0 : i32
    %c0_i32_1 = arith.constant 0 : i32
    return %c0_i32, %c0_i32_0 : i32, i32
  }
  func.func @transform_4(%arg0: i32) -> (i32, i32, i32) {
    %c0_i32 = arith.constant 0 : i32
    %c0_i32_0 = arith.constant 0 : i32
    %c0_i32_1 = arith.constant 0 : i32
    %c0_i32_2 = arith.constant 0 : i32
    return %c0_i32, %c0_i32_0, %c0_i32_1 : i32, i32, i32
  }
  func.func @transform_5(%arg0: i32) -> (i32, i32, i32) {
    %c0_i32 = arith.constant 0 : i32
    %c0_i32_0 = arith.constant 0 : i32
    %c0_i32_1 = arith.constant 0 : i32
    %c0_i32_2 = arith.constant 0 : i32
    return %c0_i32, %c0_i32_0, %c0_i32_1 : i32, i32, i32
  }
  func.func @transform_6(%arg0: i32) -> (i32, i32, i32) {
    %c0_i32 = arith.constant 0 : i32
    %c0_i32_0 = arith.constant 0 : i32
    %c0_i32_1 = arith.constant 0 : i32
    %c0_i32_2 = arith.constant 0 : i32
    return %c0_i32, %c0_i32_0, %c0_i32_1 : i32, i32, i32
  }
  func.func @transform_7(%arg0: i32) -> (i32, i32, i32) {
    %c0_i32 = arith.constant 0 : i32
    %c0_i32_0 = arith.constant 0 : i32
    %c0_i32_1 = arith.constant 0 : i32
    %c0_i32_2 = arith.constant 0 : i32
    return %c0_i32, %c0_i32_0, %c0_i32_1 : i32, i32, i32
  }
  func.func @transform_8(%arg0: i32) -> (i32, i32) {
    %c0_i32 = arith.constant 0 : i32
    %c0_i32_0 = arith.constant 0 : i32
    %c0_i32_1 = arith.constant 0 : i32
    return %c0_i32, %c0_i32_0 : i32, i32
  }
  func.func @transform_9(%arg0: i32) -> (i32, i32) {
    %c0_i32 = arith.constant 0 : i32
    %c0_i32_0 = arith.constant 0 : i32
    %c0_i32_1 = arith.constant 0 : i32
    return %c0_i32, %c0_i32_0 : i32, i32
  }
  func.func @transform_10(%arg0: i32) -> (i32, i32) {
    %c0_i32 = arith.constant 0 : i32
    %c0_i32_0 = arith.constant 0 : i32
    %c0_i32_1 = arith.constant 0 : i32
    return %c0_i32, %c0_i32_0 : i32, i32
  }
  func.func @transform_11(%arg0: i32) -> (i32, i32) {
    %c0_i32 = arith.constant 0 : i32
    %c0_i32_0 = arith.constant 0 : i32
    %c0_i32_1 = arith.constant 0 : i32
    return %c0_i32, %c0_i32_0 : i32, i32
  }
  func.func @transform_12(%arg0: i32) -> (i32, i32, i32) {
    %c0_i32 = arith.constant 0 : i32
    %c0_i32_0 = arith.constant 0 : i32
    %c0_i32_1 = arith.constant 0 : i32
    %c0_i32_2 = arith.constant 0 : i32
    return %c0_i32, %c0_i32_0, %c0_i32_1 : i32, i32, i32
  }
  func.func @transform_13(%arg0: i32) -> (i32, i32, i32) {
    %c0_i32 = arith.constant 0 : i32
    %c0_i32_0 = arith.constant 0 : i32
    %c0_i32_1 = arith.constant 0 : i32
    %c0_i32_2 = arith.constant 0 : i32
    return %c0_i32, %c0_i32_0, %c0_i32_1 : i32, i32, i32
  }
  func.func @transform_14(%arg0: i32) -> (i32, i32, i32) {
    %c0_i32 = arith.constant 0 : i32
    %c0_i32_0 = arith.constant 0 : i32
    %c0_i32_1 = arith.constant 0 : i32
    %c0_i32_2 = arith.constant 0 : i32
    return %c0_i32, %c0_i32_0, %c0_i32_1 : i32, i32, i32
  }
  func.func @transform_15(%arg0: i32) -> (i32, i32, i32) {
    %c0_i32 = arith.constant 0 : i32
    %c0_i32_0 = arith.constant 0 : i32
    %c0_i32_1 = arith.constant 0 : i32
    %c0_i32_2 = arith.constant 0 : i32
    return %c0_i32, %c0_i32_0, %c0_i32_1 : i32, i32, i32
  }
  func.func @transform_16(%arg0: i32) -> (i32, i32) {
    %c0_i32 = arith.constant 0 : i32
    %c0_i32_0 = arith.constant 0 : i32
    %c0_i32_1 = arith.constant 0 : i32
    return %c0_i32, %c0_i32_0 : i32, i32
  }
  func.func @transform_17(%arg0: i32) -> (i32, i32) {
    %c0_i32 = arith.constant 0 : i32
    %c0_i32_0 = arith.constant 0 : i32
    %c0_i32_1 = arith.constant 0 : i32
    return %c0_i32, %c0_i32_0 : i32, i32
  }
  func.func @transform_18(%arg0: i32) -> (i32, i32, i32) {
    %c0_i32 = arith.constant 0 : i32
    %c0_i32_0 = arith.constant 0 : i32
    %c0_i32_1 = arith.constant 0 : i32
    %c0_i32_2 = arith.constant 0 : i32
    return %c0_i32, %c0_i32_0, %c0_i32_1 : i32, i32, i32
  }
  func.func @transform_19(%arg0: i32) -> (i32, i32, i32) {
    %c0_i32 = arith.constant 0 : i32
    %c0_i32_0 = arith.constant 0 : i32
    %c0_i32_1 = arith.constant 0 : i32
    %c0_i32_2 = arith.constant 0 : i32
    return %c0_i32, %c0_i32_0, %c0_i32_1 : i32, i32, i32
  }
  func.func @transform_20(%arg0: i32) -> (i32, i32, i32, i32) {
    %c0_i32 = arith.constant 0 : i32
    %c0_i32_0 = arith.constant 0 : i32
    %c0_i32_1 = arith.constant 0 : i32
    %c0_i32_2 = arith.constant 0 : i32
    %c0_i32_3 = arith.constant 0 : i32
    return %c0_i32, %c0_i32_0, %c0_i32_1, %c0_i32_2 : i32, i32, i32, i32
  }
  func.func @transform_21(%arg0: i32) -> (i32, i32, i32, i32) {
    %c0_i32 = arith.constant 0 : i32
    %c0_i32_0 = arith.constant 0 : i32
    %c0_i32_1 = arith.constant 0 : i32
    %c0_i32_2 = arith.constant 0 : i32
    %c0_i32_3 = arith.constant 0 : i32
    return %c0_i32, %c0_i32_0, %c0_i32_1, %c0_i32_2 : i32, i32, i32, i32
  }
  func.func @transform_22(%arg0: i32) -> (i32, i32, i32, i32) {
    %c0_i32 = arith.constant 0 : i32
    %c0_i32_0 = arith.constant 0 : i32
    %c0_i32_1 = arith.constant 0 : i32
    %c0_i32_2 = arith.constant 0 : i32
    %c0_i32_3 = arith.constant 0 : i32
    return %c0_i32, %c0_i32_0, %c0_i32_1, %c0_i32_2 : i32, i32, i32, i32
  }
  func.func @transform_23(%arg0: i32) -> (i32, i32, i32, i32) {
    %c0_i32 = arith.constant 0 : i32
    %c0_i32_0 = arith.constant 0 : i32
    %c0_i32_1 = arith.constant 0 : i32
    %c0_i32_2 = arith.constant 0 : i32
    %c0_i32_3 = arith.constant 0 : i32
    return %c0_i32, %c0_i32_0, %c0_i32_1, %c0_i32_2 : i32, i32, i32, i32
  }
  func.func @transform_24(%arg0: i32) -> (i32, i32, i32) {
    %c0_i32 = arith.constant 0 : i32
    %c0_i32_0 = arith.constant 0 : i32
    %c0_i32_1 = arith.constant 0 : i32
    %c0_i32_2 = arith.constant 0 : i32
    return %c0_i32, %c0_i32_0, %c0_i32_1 : i32, i32, i32
  }
  func.func @transform_25(%arg0: i32) -> (i32, i32, i32) {
    %c0_i32 = arith.constant 0 : i32
    %c0_i32_0 = arith.constant 0 : i32
    %c0_i32_1 = arith.constant 0 : i32
    %c0_i32_2 = arith.constant 0 : i32
    return %c0_i32, %c0_i32_0, %c0_i32_1 : i32, i32, i32
  }
  func.func @transform_26(%arg0: i32) -> (i32, i32, i32) {
    %c0_i32 = arith.constant 0 : i32
    %c0_i32_0 = arith.constant 0 : i32
    %c0_i32_1 = arith.constant 0 : i32
    return %arg0, %c0_i32, %c0_i32_0 : i32, i32, i32
  }
  func.func @transform_27(%arg0: i32) -> (i32, i32, i32, i32) {
    %c0_i32 = arith.constant 0 : i32
    %c0_i32_0 = arith.constant 0 : i32
    %c0_i32_1 = arith.constant 0 : i32
    %c0_i32_2 = arith.constant 0 : i32
    return %c0_i32, %arg0, %c0_i32_0, %c0_i32_1 : i32, i32, i32, i32
  }
}

</mosaic_0001>

<llo_original>
// kernel: multi_stage_forward.1
$region0: #{multi_stage_forward.1}
  #allocation0 [shape = 'u32[]', space=smem, size = 0x4, offset = 0x4, fixed_abs, tag = 'smem constant byte address 0x4 - core index']
  #allocation1 [shape = 'u32[72,128]{1,0:T(1,128)}', space=vmem, size = 0x9000, scoped, tag = 'internal scratch']
  #allocation2 [shape = 'f32[8,32]{1,0:T(8,128)}', space=vmem, size = 0x1000, scoped, tag = 'scratch operand']
  %s0 = inlined_call_operand.hbm [shape: f32[2,4,16], index: 0, kind: input, shape index: {}]
  %s1 = inlined_call_operand.vmem [shape: f32[2,1,16], index: 1, kind: input, shape index: {}]
  %s2 = inlined_call_operand.hbm [shape: f32[8,4], index: 2, kind: input, shape index: {}]
  %s3 = inlined_call_operand.hbm [shape: f32[8,1], index: 3, kind: input, shape index: {}]
  %s4 = inlined_call_operand.hbm [shape: f32[3,8,24], index: 4, kind: input, shape index: {}]
  %s5 = inlined_call_operand.hbm [shape: f32[3,8,1], index: 5, kind: input, shape index: {}]
  %s6 = inlined_call_operand.hbm [shape: f32[3,8,8], index: 6, kind: input, shape index: {}]
  %s7 = inlined_call_operand.hbm [shape: f32[3,8,1], index: 7, kind: input, shape index: {}]
  %s8 = inlined_call_operand.hbm [shape: f32[6,8], index: 8, kind: input, shape index: {}]
  %s9 = inlined_call_operand.hbm [shape: f32[6,1], index: 9, kind: input, shape index: {}]
  %s10 = inlined_call_operand.hbm [shape: f32[8,4], index: 10, kind: input, shape index: {}]
  %s11 = inlined_call_operand.hbm [shape: f32[8,1], index: 11, kind: input, shape index: {}]
  %s12 = inlined_call_operand.hbm [shape: f32[3,8,40], index: 12, kind: input, shape index: {}]
  %s13 = inlined_call_operand.hbm [shape: f32[3,8,1], index: 13, kind: input, shape index: {}]
  %s14 = inlined_call_operand.hbm [shape: f32[3,8,8], index: 14, kind: input, shape index: {}]
  %s15 = inlined_call_operand.hbm [shape: f32[3,8,1], index: 15, kind: input, shape index: {}]
  %s16 = inlined_call_operand.hbm [shape: f32[6,8], index: 16, kind: input, shape index: {}]
  %s17 = inlined_call_operand.vmem [shape: f32[6,1], index: 17, kind: input, shape index: {}]
  %s18 = inlined_call_operand.hbm [shape: f32[2,8,6], index: 18, kind: input, shape index: {}]
  %s19 = inlined_call_operand.hbm [shape: f32[2,8,1], index: 19, kind: input, shape index: {}]
  %s20 = inlined_call_operand.hbm [shape: f32[2,3,8,24], index: 20, kind: input, shape index: {}]
  %s21 = inlined_call_operand.hbm [shape: f32[2,3,8,1], index: 21, kind: input, shape index: {}]
  %s22 = inlined_call_operand.hbm [shape: f32[2,3,8,8], index: 22, kind: input, shape index: {}]
  %s23 = inlined_call_operand.hbm [shape: f32[2,3,8,1], index: 23, kind: input, shape index: {}]
  %s24 = inlined_call_operand.hbm [shape: f32[2,6,8], index: 24, kind: input, shape index: {}]
  %s25 = inlined_call_operand.vmem [shape: f32[2,6,1], index: 25, kind: input, shape index: {}]
  %s26 = inlined_call_operand.hbm [shape: f32[2,8,16], index: 26, kind: output, shape index: {0}]
  %s27 = inlined_call_operand.vmem [shape: f32[3,2,6,16], index: 27, kind: output, shape index: {1}]
  %28 = xla_tuple %s26, %s27
  %s29 = sld [smem:[#allocation0]]
  $region271: #{multi_stage_forward.1} parent=0
    _
  %s31 = ssub.s32 1, %s29
  %s32 = scalar_select 0, %s31, %s29
  $region1: #{multi_stage_forward.1} parent=0
    #allocation3 [shape = 'u8[4096]{0}', space=vmem, size = 0x1000, scoped, tag = 'input window, operand 0']
    #allocation4 [shape = 's32[2]{0}', space=sflag, size = 0x8, scoped, tag = 'scoped memory for multi_stage_forward.1']
    #allocation5 [shape = 's32[2]{0}', space=sflag, size = 0x8, scoped, tag = 'scoped memory for multi_stage_forward.1']
    #allocation6 [shape = 'u8[4096]{0}', space=vmem, size = 0x1000, scoped, tag = 'input window, operand 2, single buffered']
    #allocation7 [shape = 's32[1]{0}', space=sflag, size = 0x4, scoped, tag = 'scoped memory for multi_stage_forward.1']
    #allocation8 [shape = 'u8[4096]{0}', space=vmem, size = 0x1000, scoped, tag = 'input window, operand 3, single buffered']
    #allocation9 [shape = 'u8[12288]{0}', space=vmem, size = 0x3000, scoped, tag = 'input window, operand 4, single buffered']
    #allocation10 [shape = 's32[1]{0}', space=sflag, size = 0x4, scoped, tag = 'scoped memory for multi_stage_forward.1']
    #allocation11 [shape = 'u8[12288]{0}', space=vmem, size = 0x3000, scoped, tag = 'input window, operand 5, single buffered']
    #allocation12 [shape = 'u8[12288]{0}', space=vmem, size = 0x3000, scoped, tag = 'input window, operand 6, single buffered']
    #allocation13 [shape = 's32[1]{0}', space=sflag, size = 0x4, scoped, tag = 'scoped memory for multi_stage_forward.1']
    #allocation14 [shape = 'u8[12288]{0}', space=vmem, size = 0x3000, scoped, tag = 'input window, operand 7, single buffered']
    #allocation15 [shape = 'u8[4096]{0}', space=vmem, size = 0x1000, scoped, tag = 'input window, operand 8, single buffered']
    #allocation16 [shape = 's32[1]{0}', space=sflag, size = 0x4, scoped, tag = 'scoped memory for multi_stage_forward.1']
    #allocation17 [shape = 'u8[4096]{0}', space=vmem, size = 0x1000, scoped, tag = 'input window, operand 9, single buffered']
    #allocation18 [shape = 'u8[4096]{0}', space=vmem, size = 0x1000, scoped, tag = 'input window, operand 10, single buffered']
    #allocation19 [shape = 's32[1]{0}', space=sflag, size = 0x4, scoped, tag = 'scoped memory for multi_stage_forward.1']
    #allocation20 [shape = 'u8[4096]{0}', space=vmem, size = 0x1000, scoped, tag = 'input window, operand 11, single buffered']
    #allocation21 [shape = 'u8[12288]{0}', space=vmem, size = 0x3000, scoped, tag = 'input window, operand 12, single buffered']
    #allocation22 [shape = 's32[1]{0}', space=sflag, size = 0x4, scoped, tag = 'scoped memory for multi_stage_forward.1']
    #allocation23 [shape = 'u8[12288]{0}', space=vmem, size = 0x3000, scoped, tag = 'input window, operand 13, single buffered']
    #allocation24 [shape = 'u8[12288]{0}', space=vmem, size = 0x3000, scoped, tag = 'input window, operand 14, single buffered']
    #allocation25 [shape = 's32[1]{0}', space=sflag, size = 0x4, scoped, tag = 'scoped memory for multi_stage_forward.1']
    #allocation26 [shape = 'u8[12288]{0}', space=vmem, size = 0x3000, scoped, tag = 'input window, operand 15, single buffered']
    #allocation27 [shape = 'u8[4096]{0}', space=vmem, size = 0x1000, scoped, tag = 'input window, operand 16, single buffered']
    #allocation28 [shape = 's32[1]{0}', space=sflag, size = 0x4, scoped, tag = 'scoped memory for multi_stage_forward.1']
    #allocation29 [shape = 'u8[8192]{0}', space=vmem, size = 0x2000, scoped, tag = 'input window, operand 18, single buffered']
    #allocation30 [shape = 'u8[8192]{0}', space=vmem, size = 0x2000, scoped, tag = 'input window, operand 19, single buffered']
    #allocation31 [shape = 's32[1]{0}', space=sflag, size = 0x4, scoped, tag = 'scoped memory for multi_stage_forward.1']
    #allocation32 [shape = 'u8[24576]{0}', space=vmem, size = 0x6000, scoped, tag = 'input window, operand 20, single buffered']
    #allocation33 [shape = 'u8[24576]{0}', space=vmem, size = 0x6000, scoped, tag = 'input window, operand 21, single buffered']
    #allocation34 [shape = 's32[1]{0}', space=sflag, size = 0x4, scoped, tag = 'scoped memory for multi_stage_forward.1']
    #allocation35 [shape = 'u8[24576]{0}', space=vmem, size = 0x6000, scoped, tag = 'input window, operand 22, single buffered']
    #allocation36 [shape = 'u8[24576]{0}', space=vmem, size = 0x6000, scoped, tag = 'input window, operand 23, single buffered']
    #allocation37 [shape = 's32[1]{0}', space=sflag, size = 0x4, scoped, tag = 'scoped memory for multi_stage_forward.1']
    #allocation38 [shape = 'u8[8192]{0}', space=vmem, size = 0x2000, scoped, tag = 'input window, operand 24, single buffered']
    #allocation39 [shape = 'u8[8192]{0}', space=vmem, size = 0x2000, scoped, tag = 'output window, operand 0']
    #allocation40 [shape = 'u8[24576]{0}', space=vmem, size = 0x6000, scoped, tag = 'output window, operand 1']
    %33 = vsyncpa [#allocation4], 0
    %s34 = scalar_lea.sflag [#allocation4], 1
    %35 = vsyncpa %s34, 0
    %36 = vsyncpa [#allocation7], 0
    %37 = vsyncpa [#allocation10], 0
    %38 = vsyncpa [#allocation13], 0
    %39 = vsyncpa [#allocation16], 0
    %40 = vsyncpa [#allocation19], 0
    %41 = vsyncpa [#allocation22], 0
    %42 = vsyncpa [#allocation25], 0
    %43 = vsyncpa [#allocation28], 0
    %44 = vsyncpa [#allocation31], 0
    %45 = vsyncpa [#allocation34], 0
    %46 = vsyncpa [#allocation37], 0
    %47 = vsyncpa [#allocation5], 0
    %s48 = scalar_lea.sflag [#allocation5], 1
    %49 = vsyncpa %s48, 0
    loop: start=0, step=1, limit=4
    $region2: #{multi_stage_forward.1} parent=1 // loop_pre_header
      _
    $region3: #{multi_stage_forward.1} parent=1 // loop_header
      %s51 = sphi 0, %s55
      %p52 = scmp.ge.s32.totalorder %s51, 4
      %s61 = sphi 0, %s63
      %s64 = sphi 0, %s61
      %s65 = sphi 0, %s64
      %s81 = sphi 0, %s65
      %s87 = sphi 0, %s89
      %s90 = sphi 0, %s87
      %s91 = sphi 0, %s90
      %s107 = sphi 0, %s91
      %s111 = sphi 0, %s111
      %s113 = sphi 0, %s111
      %s114 = sphi 0, %s113
      %s128 = sphi 0, %s114
      %s132 = sphi 0, %s132
      %s134 = sphi 0, %s132
      %s135 = sphi 0, %s134
      %s149 = sphi 0, %s135
      %s153 = sphi 0, %s153
      %s155 = sphi 0, %s153
      %s156 = sphi 0, %s155
      %s170 = sphi 0, %s156
      %s174 = sphi 0, %s174
      %s176 = sphi 0, %s174
      %s177 = sphi 0, %s176
      %s191 = sphi 0, %s177
      %s195 = sphi 0, %s195
      %s197 = sphi 0, %s195
      %s198 = sphi 0, %s197
      %s212 = sphi 0, %s198
      %s216 = sphi 0, %s216
      %s218 = sphi 0, %s216
      %s219 = sphi 0, %s218
      %s233 = sphi 0, %s219
      %s237 = sphi 0, %s237
      %s239 = sphi 0, %s237
      %s240 = sphi 0, %s239
      %s254 = sphi 0, %s240
      %s258 = sphi 0, %s258
      %s260 = sphi 0, %s258
      %s261 = sphi 0, %s260
      %s275 = sphi 0, %s261
      %s279 = sphi 0, %s279
      %s281 = sphi 0, %s279
      %s282 = sphi 0, %s281
      %s296 = sphi 0, %s282
      %s300 = sphi 0, %s300
      %s302 = sphi 0, %s300
      %s303 = sphi 0, %s302
      %s317 = sphi 0, %s303
      %s321 = sphi 0, %s321
      %s323 = sphi 0, %s321
      %s324 = sphi 0, %s323
      %s338 = sphi 0, %s324
      %s342 = sphi 0, %s342
      %s344 = sphi 0, %s342
      %s345 = sphi 0, %s344
      %s359 = sphi 0, %s345
      %s363 = sphi 0, %s363
      %s365 = sphi 0, %s363
      %s366 = sphi 0, %s365
      %s380 = sphi 0, %s366
      %s384 = sphi 0, %s384
      %s386 = sphi 0, %s384
      %s387 = sphi 0, %s386
      %s401 = sphi 0, %s387
      %s405 = sphi 0, %s405
      %s407 = sphi 0, %s405
      %s408 = sphi 0, %s407
      %s422 = sphi 0, %s408
      %s426 = sphi 0, %s426
      %s428 = sphi 0, %s426
      %s429 = sphi 0, %s428
      %s443 = sphi 0, %s429
      %s447 = sphi 0, %s447
      %s449 = sphi 0, %s447
      %s450 = sphi 0, %s449
      %s464 = sphi 0, %s450
      %s468 = sphi 0, %s468
      %s470 = sphi 0, %s468
      %s471 = sphi 0, %s470
      %s485 = sphi 0, %s471
      %s489 = sphi 0, %s489
      %s491 = sphi 0, %s489
      %s492 = sphi 0, %s491
      %s506 = sphi 0, %s492
      %s510 = sphi 0, %s510
      %s512 = sphi 0, %s510
      %s513 = sphi 0, %s512
      %s527 = sphi 0, %s513
      %s531 = sphi 0, %s531
      %s533 = sphi 0, %s531
      %s534 = sphi 0, %s533
      %s548 = sphi 0, %s534
      %s552 = sphi 0, %s552
      %s554 = sphi 0, %s552
      %s555 = sphi 0, %s554
      %s569 = sphi 0, %s555
      %s573 = sphi 0, %s573
      %s575 = sphi 0, %s573
      %s576 = sphi 0, %s575
      %s590 = sphi 0, %s576
      %s594 = sphi 0, %s594
      %s596 = sphi 0, %s594
      %s597 = sphi 0, %s596
      %s611 = sphi 0, %s597
      %s617 = sphi 0, %s619
      %s620 = sphi 0, %s617
      %s621 = sphi 0, %s620
      %s637 = sphi 0, %s621
      %s643 = sphi 0, %s645
      %s646 = sphi 0, %s643
      %s647 = sphi 0, %s646
      %s663 = sphi 0, %s647
    $region4: #{multi_stage_forward.1} parent=1 // loop_header_branch
      %54 = sbr.rel (%p52) target = $region8
    $region5: #{multi_stage_forward.1} parent=1 // loop_body
      %s56 = ssub.s32 %s51, 1
      %s57 = ssub.s32 %s51, 2
      %s58 = sadd.s32 %s51, 1
      %s59 = ssub.s32 %s51, %s58
      %p60 = scmp.eq.s32.totalorder %s59, 0
      %s62 = sadd.s32 %s61, 1
      %s63 = scalar_select %p60, %s61, %s62
      %p66 = pneg %p60
      %p67 = scmp.eq.s32.totalorder %s51, 1
      %p68 = por %p66, %p67
      %p69 = scmp.ne.s32.totalorder %s61, %s64
      %p70 = scmp.eq.s32.totalorder %s51, 0
      %p71 = por %p69, %p70
      %p72 = scmp.ne.s32.totalorder %s61, %s64
      %p73 = scmp.eq.s32.totalorder %s56, 1
      %p74 = por %p72, %p73
      %p75 = scmp.ne.s32.totalorder %s64, %s65
      %p76 = scmp.eq.s32.totalorder %s56, 0
      %p77 = por %p75, %p76
      %p78 = scmp.ne.s32.totalorder %s64, %s65
      %p79 = scmp.eq.s32.totalorder %s57, 1
      %p80 = por %p78, %p79
      %p82 = scmp.ne.s32.totalorder %s65, %s81
      %p83 = scmp.eq.s32.totalorder %s57, 0
      %p84 = por %p82, %p83
      %s85 = ssub.s32 %s51, %s58
      %p86 = scmp.eq.s32.totalorder %s85, 0
      %s88 = sadd.s32 %s87, 1
      %s89 = scalar_select %p86, %s87, %s88
      %p92 = pneg %p86
      %p93 = scmp.eq.s32.totalorder %s51, 1
      %p94 = por %p92, %p93
      %p95 = scmp.ne.s32.totalorder %s87, %s90
      %p96 = scmp.eq.s32.totalorder %s51, 0
      %p97 = por %p95, %p96
      %p98 = scmp.ne.s32.totalorder %s87, %s90
      %p99 = scmp.eq.s32.totalorder %s56, 1
      %p100 = por %p98, %p99
      %p101 = scmp.ne.s32.totalorder %s90, %s91
      %p102 = scmp.eq.s32.totalorder %s56, 0
      %p103 = por %p101, %p102
      %p104 = scmp.ne.s32.totalorder %s90, %s91
      %p105 = scmp.eq.s32.totalorder %s57, 1
      %p106 = por %p104, %p105
      %p108 = scmp.ne.s32.totalorder %s91, %s107
      %p109 = scmp.eq.s32.totalorder %s57, 0
      %p110 = por %p108, %p109
      %s112 = sadd.s32 %s111, 1
      %p115 = scmp.eq.s32.totalorder %s51, 1
      %p116 = scmp.ne.s32.totalorder %s111, %s113
      %p117 = scmp.eq.s32.totalorder %s51, 0
      %p118 = por %p116, %p117
      %p119 = scmp.ne.s32.totalorder %s111, %s113
      %p120 = scmp.eq.s32.totalorder %s56, 1
      %p121 = por %p119, %p120
      %p122 = scmp.ne.s32.totalorder %s113, %s114
      %p123 = scmp.eq.s32.totalorder %s56, 0
      %p124 = por %p122, %p123
      %p125 = scmp.ne.s32.totalorder %s113, %s114
      %p126 = scmp.eq.s32.totalorder %s57, 1
      %p127 = por %p125, %p126
      %p129 = scmp.ne.s32.totalorder %s114, %s128
      %p130 = scmp.eq.s32.totalorder %s57, 0
      %p131 = por %p129, %p130
      %s133 = sadd.s32 %s132, 1
      %p136 = scmp.eq.s32.totalorder %s51, 1
      %p137 = scmp.ne.s32.totalorder %s132, %s134
      %p138 = scmp.eq.s32.totalorder %s51, 0
      %p139 = por %p137, %p138
      %p140 = scmp.ne.s32.totalorder %s132, %s134
      %p141 = scmp.eq.s32.totalorder %s56, 1
      %p142 = por %p140, %p141
      %p143 = scmp.ne.s32.totalorder %s134, %s135
      %p144 = scmp.eq.s32.totalorder %s56, 0
      %p145 = por %p143, %p144
      %p146 = scmp.ne.s32.totalorder %s134, %s135
      %p147 = scmp.eq.s32.totalorder %s57, 1
      %p148 = por %p146, %p147
      %p150 = scmp.ne.s32.totalorder %s135, %s149
      %p151 = scmp.eq.s32.totalorder %s57, 0
      %p152 = por %p150, %p151
      %s154 = sadd.s32 %s153, 1
      %p157 = scmp.eq.s32.totalorder %s51, 1
      %p158 = scmp.ne.s32.totalorder %s153, %s155
      %p159 = scmp.eq.s32.totalorder %s51, 0
      %p160 = por %p158, %p159
      %p161 = scmp.ne.s32.totalorder %s153, %s155
      %p162 = scmp.eq.s32.totalorder %s56, 1
      %p163 = por %p161, %p162
      %p164 = scmp.ne.s32.totalorder %s155, %s156
      %p165 = scmp.eq.s32.totalorder %s56, 0
      %p166 = por %p164, %p165
      %p167 = scmp.ne.s32.totalorder %s155, %s156
      %p168 = scmp.eq.s32.totalorder %s57, 1
      %p169 = por %p167, %p168
      %p171 = scmp.ne.s32.totalorder %s156, %s170
      %p172 = scmp.eq.s32.totalorder %s57, 0
      %p173 = por %p171, %p172
      %s175 = sadd.s32 %s174, 1
      %p178 = scmp.eq.s32.totalorder %s51, 1
      %p179 = scmp.ne.s32.totalorder %s174, %s176
      %p180 = scmp.eq.s32.totalorder %s51, 0
      %p181 = por %p179, %p180
      %p182 = scmp.ne.s32.totalorder %s174, %s176
      %p183 = scmp.eq.s32.totalorder %s56, 1
      %p184 = por %p182, %p183
      %p185 = scmp.ne.s32.totalorder %s176, %s177
      %p186 = scmp.eq.s32.totalorder %s56, 0
      %p187 = por %p185, %p186
      %p188 = scmp.ne.s32.totalorder %s176, %s177
      %p189 = scmp.eq.s32.totalorder %s57, 1
      %p190 = por %p188, %p189
      %p192 = scmp.ne.s32.totalorder %s177, %s191
      %p193 = scmp.eq.s32.totalorder %s57, 0
      %p194 = por %p192, %p193
      %s196 = sadd.s32 %s195, 1
      %p199 = scmp.eq.s32.totalorder %s51, 1
      %p200 = scmp.ne.s32.totalorder %s195, %s197
      %p201 = scmp.eq.s32.totalorder %s51, 0
      %p202 = por %p200, %p201
      %p203 = scmp.ne.s32.totalorder %s195, %s197
      %p204 = scmp.eq.s32.totalorder %s56, 1
      %p205 = por %p203, %p204
      %p206 = scmp.ne.s32.totalorder %s197, %s198
      %p207 = scmp.eq.s32.totalorder %s56, 0
      %p208 = por %p206, %p207
      %p209 = scmp.ne.s32.totalorder %s197, %s198
      %p210 = scmp.eq.s32.totalorder %s57, 1
      %p211 = por %p209, %p210
      %p213 = scmp.ne.s32.totalorder %s198, %s212
      %p214 = scmp.eq.s32.totalorder %s57, 0
      %p215 = por %p213, %p214
      %s217 = sadd.s32 %s216, 1
      %p220 = scmp.eq.s32.totalorder %s51, 1
      %p221 = scmp.ne.s32.totalorder %s216, %s218
      %p222 = scmp.eq.s32.totalorder %s51, 0
      %p223 = por %p221, %p222
      %p224 = scmp.ne.s32.totalorder %s216, %s218
      %p225 = scmp.eq.s32.totalorder %s56, 1
      %p226 = por %p224, %p225
      %p227 = scmp.ne.s32.totalorder %s218, %s219
      %p228 = scmp.eq.s32.totalorder %s56, 0
      %p229 = por %p227, %p228
      %p230 = scmp.ne.s32.totalorder %s218, %s219
      %p231 = scmp.eq.s32.totalorder %s57, 1
      %p232 = por %p230, %p231
      %p234 = scmp.ne.s32.totalorder %s219, %s233
      %p235 = scmp.eq.s32.totalorder %s57, 0
      %p236 = por %p234, %p235
      %s238 = sadd.s32 %s237, 1
      %p241 = scmp.eq.s32.totalorder %s51, 1
      %p242 = scmp.ne.s32.totalorder %s237, %s239
      %p243 = scmp.eq.s32.totalorder %s51, 0
      %p244 = por %p242, %p243
      %p245 = scmp.ne.s32.totalorder %s237, %s239
      %p246 = scmp.eq.s32.totalorder %s56, 1
      %p247 = por %p245, %p246
      %p248 = scmp.ne.s32.totalorder %s239, %s240
      %p249 = scmp.eq.s32.totalorder %s56, 0
      %p250 = por %p248, %p249
      %p251 = scmp.ne.s32.totalorder %s239, %s240
      %p252 = scmp.eq.s32.totalorder %s57, 1
      %p253 = por %p251, %p252
      %p255 = scmp.ne.s32.totalorder %s240, %s254
      %p256 = scmp.eq.s32.totalorder %s57, 0
      %p257 = por %p255, %p256
      %s259 = sadd.s32 %s258, 1
      %p262 = scmp.eq.s32.totalorder %s51, 1
      %p263 = scmp.ne.s32.totalorder %s258, %s260
      %p264 = scmp.eq.s32.totalorder %s51, 0
      %p265 = por %p263, %p264
      %p266 = scmp.ne.s32.totalorder %s258, %s260
      %p267 = scmp.eq.s32.totalorder %s56, 1
      %p268 = por %p266, %p267
      %p269 = scmp.ne.s32.totalorder %s260, %s261
      %p270 = scmp.eq.s32.totalorder %s56, 0
      %p271 = por %p269, %p270
      %p272 = scmp.ne.s32.totalorder %s260, %s261
      %p273 = scmp.eq.s32.totalorder %s57, 1
      %p274 = por %p272, %p273
      %p276 = scmp.ne.s32.totalorder %s261, %s275
      %p277 = scmp.eq.s32.totalorder %s57, 0
      %p278 = por %p276, %p277
      %s280 = sadd.s32 %s279, 1
      %p283 = scmp.eq.s32.totalorder %s51, 1
      %p284 = scmp.ne.s32.totalorder %s279, %s281
      %p285 = scmp.eq.s32.totalorder %s51, 0
      %p286 = por %p284, %p285
      %p287 = scmp.ne.s32.totalorder %s279, %s281
      %p288 = scmp.eq.s32.totalorder %s56, 1
      %p289 = por %p287, %p288
      %p290 = scmp.ne.s32.totalorder %s281, %s282
      %p291 = scmp.eq.s32.totalorder %s56, 0
      %p292 = por %p290, %p291
      %p293 = scmp.ne.s32.totalorder %s281, %s282
      %p294 = scmp.eq.s32.totalorder %s57, 1
      %p295 = por %p293, %p294
      %p297 = scmp.ne.s32.totalorder %s282, %s296
      %p298 = scmp.eq.s32.totalorder %s57, 0
      %p299 = por %p297, %p298
      %s301 = sadd.s32 %s300, 1
      %p304 = scmp.eq.s32.totalorder %s51, 1
      %p305 = scmp.ne.s32.totalorder %s300, %s302
      %p306 = scmp.eq.s32.totalorder %s51, 0
      %p307 = por %p305, %p306
      %p308 = scmp.ne.s32.totalorder %s300, %s302
      %p309 = scmp.eq.s32.totalorder %s56, 1
      %p310 = por %p308, %p309
      %p311 = scmp.ne.s32.totalorder %s302, %s303
      %p312 = scmp.eq.s32.totalorder %s56, 0
      %p313 = por %p311, %p312
      %p314 = scmp.ne.s32.totalorder %s302, %s303
      %p315 = scmp.eq.s32.totalorder %s57, 1
      %p316 = por %p314, %p315
      %p318 = scmp.ne.s32.totalorder %s303, %s317
      %p319 = scmp.eq.s32.totalorder %s57, 0
      %p320 = por %p318, %p319
      %s322 = sadd.s32 %s321, 1
      %p325 = scmp.eq.s32.totalorder %s51, 1
      %p326 = scmp.ne.s32.totalorder %s321, %s323
      %p327 = scmp.eq.s32.totalorder %s51, 0
      %p328 = por %p326, %p327
      %p329 = scmp.ne.s32.totalorder %s321, %s323
      %p330 = scmp.eq.s32.totalorder %s56, 1
      %p331 = por %p329, %p330
      %p332 = scmp.ne.s32.totalorder %s323, %s324
      %p333 = scmp.eq.s32.totalorder %s56, 0
      %p334 = por %p332, %p333
      %p335 = scmp.ne.s32.totalorder %s323, %s324
      %p336 = scmp.eq.s32.totalorder %s57, 1
      %p337 = por %p335, %p336
      %p339 = scmp.ne.s32.totalorder %s324, %s338
      %p340 = scmp.eq.s32.totalorder %s57, 0
      %p341 = por %p339, %p340
      %s343 = sadd.s32 %s342, 1
      %p346 = scmp.eq.s32.totalorder %s51, 1
      %p347 = scmp.ne.s32.totalorder %s342, %s344
      %p348 = scmp.eq.s32.totalorder %s51, 0
      %p349 = por %p347, %p348
      %p350 = scmp.ne.s32.totalorder %s342, %s344
      %p351 = scmp.eq.s32.totalorder %s56, 1
      %p352 = por %p350, %p351
      %p353 = scmp.ne.s32.totalorder %s344, %s345
      %p354 = scmp.eq.s32.totalorder %s56, 0
      %p355 = por %p353, %p354
      %p356 = scmp.ne.s32.totalorder %s344, %s345
      %p357 = scmp.eq.s32.totalorder %s57, 1
      %p358 = por %p356, %p357
      %p360 = scmp.ne.s32.totalorder %s345, %s359
      %p361 = scmp.eq.s32.totalorder %s57, 0
      %p362 = por %p360, %p361
      %s364 = sadd.s32 %s363, 1
      %p367 = scmp.eq.s32.totalorder %s51, 1
      %p368 = scmp.ne.s32.totalorder %s363, %s365
      %p369 = scmp.eq.s32.totalorder %s51, 0
      %p370 = por %p368, %p369
      %p371 = scmp.ne.s32.totalorder %s363, %s365
      %p372 = scmp.eq.s32.totalorder %s56, 1
      %p373 = por %p371, %p372
      %p374 = scmp.ne.s32.totalorder %s365, %s366
      %p375 = scmp.eq.s32.totalorder %s56, 0
      %p376 = por %p374, %p375
      %p377 = scmp.ne.s32.totalorder %s365, %s366
      %p378 = scmp.eq.s32.totalorder %s57, 1
      %p379 = por %p377, %p378
      %p381 = scmp.ne.s32.totalorder %s366, %s380
      %p382 = scmp.eq.s32.totalorder %s57, 0
      %p383 = por %p381, %p382
      %s385 = sadd.s32 %s384, 1
      %p388 = scmp.eq.s32.totalorder %s51, 1
      %p389 = scmp.ne.s32.totalorder %s384, %s386
      %p390 = scmp.eq.s32.totalorder %s51, 0
      %p391 = por %p389, %p390
      %p392 = scmp.ne.s32.totalorder %s384, %s386
      %p393 = scmp.eq.s32.totalorder %s56, 1
      %p394 = por %p392, %p393
      %p395 = scmp.ne.s32.totalorder %s386, %s387
      %p396 = scmp.eq.s32.totalorder %s56, 0
      %p397 = por %p395, %p396
      %p398 = scmp.ne.s32.totalorder %s386, %s387
      %p399 = scmp.eq.s32.totalorder %s57, 1
      %p400 = por %p398, %p399
      %p402 = scmp.ne.s32.totalorder %s387, %s401
      %p403 = scmp.eq.s32.totalorder %s57, 0
      %p404 = por %p402, %p403
      %s406 = sadd.s32 %s405, 1
      %p409 = scmp.eq.s32.totalorder %s51, 1
      %p410 = scmp.ne.s32.totalorder %s405, %s407
      %p411 = scmp.eq.s32.totalorder %s51, 0
      %p412 = por %p410, %p411
      %p413 = scmp.ne.s32.totalorder %s405, %s407
      %p414 = scmp.eq.s32.totalorder %s56, 1
      %p415 = por %p413, %p414
      %p416 = scmp.ne.s32.totalorder %s407, %s408
      %p417 = scmp.eq.s32.totalorder %s56, 0
      %p418 = por %p416, %p417
      %p419 = scmp.ne.s32.totalorder %s407, %s408
      %p420 = scmp.eq.s32.totalorder %s57, 1
      %p421 = por %p419, %p420
      %p423 = scmp.ne.s32.totalorder %s408, %s422
      %p424 = scmp.eq.s32.totalorder %s57, 0
      %p425 = por %p423, %p424
      %s427 = sadd.s32 %s426, 1
      %p430 = scmp.eq.s32.totalorder %s51, 1
      %p431 = scmp.ne.s32.totalorder %s426, %s428
      %p432 = scmp.eq.s32.totalorder %s51, 0
      %p433 = por %p431, %p432
      %p434 = scmp.ne.s32.totalorder %s426, %s428
      %p435 = scmp.eq.s32.totalorder %s56, 1
      %p436 = por %p434, %p435
      %p437 = scmp.ne.s32.totalorder %s428, %s429
      %p438 = scmp.eq.s32.totalorder %s56, 0
      %p439 = por %p437, %p438
      %p440 = scmp.ne.s32.totalorder %s428, %s429
      %p441 = scmp.eq.s32.totalorder %s57, 1
      %p442 = por %p440, %p441
      %p444 = scmp.ne.s32.totalorder %s429, %s443
      %p445 = scmp.eq.s32.totalorder %s57, 0
      %p446 = por %p444, %p445
      %s448 = sadd.s32 %s447, 1
      %p451 = scmp.eq.s32.totalorder %s51, 1
      %p452 = scmp.ne.s32.totalorder %s447, %s449
      %p453 = scmp.eq.s32.totalorder %s51, 0
      %p454 = por %p452, %p453
      %p455 = scmp.ne.s32.totalorder %s447, %s449
      %p456 = scmp.eq.s32.totalorder %s56, 1
      %p457 = por %p455, %p456
      %p458 = scmp.ne.s32.totalorder %s449, %s450
      %p459 = scmp.eq.s32.totalorder %s56, 0
      %p460 = por %p458, %p459
      %p461 = scmp.ne.s32.totalorder %s449, %s450
      %p462 = scmp.eq.s32.totalorder %s57, 1
      %p463 = por %p461, %p462
      %p465 = scmp.ne.s32.totalorder %s450, %s464
      %p466 = scmp.eq.s32.totalorder %s57, 0
      %p467 = por %p465, %p466
      %s469 = sadd.s32 %s468, 1
      %p472 = scmp.eq.s32.totalorder %s51, 1
      %p473 = scmp.ne.s32.totalorder %s468, %s470
      %p474 = scmp.eq.s32.totalorder %s51, 0
      %p475 = por %p473, %p474
      %p476 = scmp.ne.s32.totalorder %s468, %s470
      %p477 = scmp.eq.s32.totalorder %s56, 1
      %p478 = por %p476, %p477
      %p479 = scmp.ne.s32.totalorder %s470, %s471
      %p480 = scmp.eq.s32.totalorder %s56, 0
      %p481 = por %p479, %p480
      %p482 = scmp.ne.s32.totalorder %s470, %s471
      %p483 = scmp.eq.s32.totalorder %s57, 1
      %p484 = por %p482, %p483
      %p486 = scmp.ne.s32.totalorder %s471, %s485
      %p487 = scmp.eq.s32.totalorder %s57, 0
      %p488 = por %p486, %p487
      %s490 = sadd.s32 %s489, 1
      %p493 = scmp.eq.s32.totalorder %s51, 1
      %p494 = scmp.ne.s32.totalorder %s489, %s491
      %p495 = scmp.eq.s32.totalorder %s51, 0
      %p496 = por %p494, %p495
      %p497 = scmp.ne.s32.totalorder %s489, %s491
      %p498 = scmp.eq.s32.totalorder %s56, 1
      %p499 = por %p497, %p498
      %p500 = scmp.ne.s32.totalorder %s491, %s492
      %p501 = scmp.eq.s32.totalorder %s56, 0
      %p502 = por %p500, %p501
      %p503 = scmp.ne.s32.totalorder %s491, %s492
      %p504 = scmp.eq.s32.totalorder %s57, 1
      %p505 = por %p503, %p504
      %p507 = scmp.ne.s32.totalorder %s492, %s506
      %p508 = scmp.eq.s32.totalorder %s57, 0
      %p509 = por %p507, %p508
      %s511 = sadd.s32 %s510, 1
      %p514 = scmp.eq.s32.totalorder %s51, 1
      %p515 = scmp.ne.s32.totalorder %s510, %s512
      %p516 = scmp.eq.s32.totalorder %s51, 0
      %p517 = por %p515, %p516
      %p518 = scmp.ne.s32.totalorder %s510, %s512
      %p519 = scmp.eq.s32.totalorder %s56, 1
      %p520 = por %p518, %p519
      %p521 = scmp.ne.s32.totalorder %s512, %s513
      %p522 = scmp.eq.s32.totalorder %s56, 0
      %p523 = por %p521, %p522
      %p524 = scmp.ne.s32.totalorder %s512, %s513
      %p525 = scmp.eq.s32.totalorder %s57, 1
      %p526 = por %p524, %p525
      %p528 = scmp.ne.s32.totalorder %s513, %s527
      %p529 = scmp.eq.s32.totalorder %s57, 0
      %p530 = por %p528, %p529
      %s532 = sadd.s32 %s531, 1
      %p535 = scmp.eq.s32.totalorder %s51, 1
      %p536 = scmp.ne.s32.totalorder %s531, %s533
      %p537 = scmp.eq.s32.totalorder %s51, 0
      %p538 = por %p536, %p537
      %p539 = scmp.ne.s32.totalorder %s531, %s533
      %p540 = scmp.eq.s32.totalorder %s56, 1
      %p541 = por %p539, %p540
      %p542 = scmp.ne.s32.totalorder %s533, %s534
      %p543 = scmp.eq.s32.totalorder %s56, 0
      %p544 = por %p542, %p543
      %p545 = scmp.ne.s32.totalorder %s533, %s534
      %p546 = scmp.eq.s32.totalorder %s57, 1
      %p547 = por %p545, %p546
      %p549 = scmp.ne.s32.totalorder %s534, %s548
      %p550 = scmp.eq.s32.totalorder %s57, 0
      %p551 = por %p549, %p550
      %s553 = sadd.s32 %s552, 1
      %p556 = scmp.eq.s32.totalorder %s51, 1
      %p557 = scmp.ne.s32.totalorder %s552, %s554
      %p558 = scmp.eq.s32.totalorder %s51, 0
      %p559 = por %p557, %p558
      %p560 = scmp.ne.s32.totalorder %s552, %s554
      %p561 = scmp.eq.s32.totalorder %s56, 1
      %p562 = por %p560, %p561
      %p563 = scmp.ne.s32.totalorder %s554, %s555
      %p564 = scmp.eq.s32.totalorder %s56, 0
      %p565 = por %p563, %p564
      %p566 = scmp.ne.s32.totalorder %s554, %s555
      %p567 = scmp.eq.s32.totalorder %s57, 1
      %p568 = por %p566, %p567
      %p570 = scmp.ne.s32.totalorder %s555, %s569
      %p571 = scmp.eq.s32.totalorder %s57, 0
      %p572 = por %p570, %p571
      %s574 = sadd.s32 %s573, 1
      %p577 = scmp.eq.s32.totalorder %s51, 1
      %p578 = scmp.ne.s32.totalorder %s573, %s575
      %p579 = scmp.eq.s32.totalorder %s51, 0
      %p580 = por %p578, %p579
      %p581 = scmp.ne.s32.totalorder %s573, %s575
      %p582 = scmp.eq.s32.totalorder %s56, 1
      %p583 = por %p581, %p582
      %p584 = scmp.ne.s32.totalorder %s575, %s576
      %p585 = scmp.eq.s32.totalorder %s56, 0
      %p586 = por %p584, %p585
      %p587 = scmp.ne.s32.totalorder %s575, %s576
      %p588 = scmp.eq.s32.totalorder %s57, 1
      %p589 = por %p587, %p588
      %p591 = scmp.ne.s32.totalorder %s576, %s590
      %p592 = scmp.eq.s32.totalorder %s57, 0
      %p593 = por %p591, %p592
      %s595 = sadd.s32 %s594, 1
      %p598 = scmp.eq.s32.totalorder %s51, 1
      %p599 = scmp.ne.s32.totalorder %s594, %s596
      %p600 = scmp.eq.s32.totalorder %s51, 0
      %p601 = por %p599, %p600
      %p602 = scmp.ne.s32.totalorder %s594, %s596
      %p603 = scmp.eq.s32.totalorder %s56, 1
      %p604 = por %p602, %p603
      %p605 = scmp.ne.s32.totalorder %s596, %s597
      %p606 = scmp.eq.s32.totalorder %s56, 0
      %p607 = por %p605, %p606
      %p608 = scmp.ne.s32.totalorder %s596, %s597
      %p609 = scmp.eq.s32.totalorder %s57, 1
      %p610 = por %p608, %p609
      %p612 = scmp.ne.s32.totalorder %s597, %s611
      %p613 = scmp.eq.s32.totalorder %s57, 0
      %p614 = por %p612, %p613
      %s615 = ssub.s32 %s51, %s58
      %p616 = scmp.eq.s32.totalorder %s615, 0
      %s618 = sadd.s32 %s617, 1
      %s619 = scalar_select %p616, %s617, %s618
      %p622 = pneg %p616
      %p623 = scmp.eq.s32.totalorder %s51, 1
      %p624 = por %p622, %p623
      %p625 = scmp.ne.s32.totalorder %s617, %s620
      %p626 = scmp.eq.s32.totalorder %s51, 0
      %p627 = por %p625, %p626
      %p628 = scmp.ne.s32.totalorder %s617, %s620
      %p629 = scmp.eq.s32.totalorder %s56, 1
      %p630 = por %p628, %p629
      %p631 = scmp.ne.s32.totalorder %s620, %s621
      %p632 = scmp.eq.s32.totalorder %s56, 0
      %p633 = por %p631, %p632
      %p634 = scmp.ne.s32.totalorder %s620, %s621
      %p635 = scmp.eq.s32.totalorder %s57, 1
      %p636 = por %p634, %p635
      %p638 = scmp.ne.s32.totalorder %s621, %s637
      %p639 = scmp.eq.s32.totalorder %s57, 0
      %p640 = por %p638, %p639
      %s641 = ssub.s32 %s51, %s58
      %p642 = scmp.eq.s32.totalorder %s641, 0
      %s644 = sadd.s32 %s643, 1
      %s645 = scalar_select %p642, %s643, %s644
      %p648 = pneg %p642
      %p649 = scmp.eq.s32.totalorder %s51, 1
      %p650 = por %p648, %p649
      %p651 = scmp.ne.s32.totalorder %s643, %s646
      %p652 = scmp.eq.s32.totalorder %s51, 0
      %p653 = por %p651, %p652
      %p654 = scmp.ne.s32.totalorder %s643, %s646
      %p655 = scmp.eq.s32.totalorder %s56, 1
      %p656 = por %p654, %p655
      %p657 = scmp.ne.s32.totalorder %s646, %s647
      %p658 = scmp.eq.s32.totalorder %s56, 0
      %p659 = por %p657, %p658
      %p660 = scmp.ne.s32.totalorder %s646, %s647
      %p661 = scmp.eq.s32.totalorder %s57, 1
      %p662 = por %p660, %p661
      %p664 = scmp.ne.s32.totalorder %s647, %s663
      %p665 = scmp.eq.s32.totalorder %s57, 0
      %p666 = por %p664, %p665
      %p667 = scmp.le.s32.totalorder 1, %s51
      %p668 = scmp.lt.s32.totalorder %s51, 3
      %p669 = pnand %p667, %p668
      %p670 = pneg %p669
      // Predicated region
      $region9: #{multi_stage_forward.1} parent=5 // pred_check
        _
      $region10: #{multi_stage_forward.1} parent=5 // pred_check_branch
        %672 = sbr.rel (%p669) target = $region12
      $region11: #{multi_stage_forward.1} parent=5 // pred_region
        %s673 = ssub.s32 %s51, 1
        // Predicated region
        $region13: #{multi_stage_forward.1} parent=11 // pred_check
          %p674 = pneg %p124
        $region14: #{multi_stage_forward.1} parent=11 // pred_check_branch
          %676 = sbr.rel (%p674) target = $region16
        $region15: #{multi_stage_forward.1} parent=11 // pred_region
          %678 = vsyncadd [#allocation7], 0
          %s680 = sshll.u32 %s2, 4
          %s681 = int_to_ptr.hbm [resolvable:$true] %s680
          %s682 = sshll.u32 [#allocation6], 4
          %s683 = int_to_ptr.vmem [resolvable:$true] %s682
          %685 = dma.hbm_to_vmem [thread:$0]  %s681, 128, %s683, [#allocation7]
        $region16: #{multi_stage_forward.1} parent=11 // pred_fallthru
          _
        // Predicated region
        $region17: #{multi_stage_forward.1} parent=11 // pred_check
          %p686 = pneg %p145
        $region18: #{multi_stage_forward.1} parent=11 // pred_check_branch
          %688 = sbr.rel (%p686) target = $region20
        $region19: #{multi_stage_forward.1} parent=11 // pred_region
          %690 = vsyncadd [#allocation7], 0
          %s692 = sshll.u32 %s3, 4
          %s693 = int_to_ptr.hbm [resolvable:$true] %s692
          %s694 = sshll.u32 [#allocation8], 4
          %s695 = int_to_ptr.vmem [resolvable:$true] %s694
          %697 = dma.hbm_to_vmem [thread:$0]  %s693, 128, %s695, [#allocation7]
        $region20: #{multi_stage_forward.1} parent=11 // pred_fallthru
          _
        // Predicated region
        $region21: #{multi_stage_forward.1} parent=11 // pred_check
          %p698 = pneg %p166
        $region22: #{multi_stage_forward.1} parent=11 // pred_check_branch
          %700 = sbr.rel (%p698) target = $region24
        $region23: #{multi_stage_forward.1} parent=11 // pred_region
          %702 = vsyncadd [#allocation10], 0
          %s703 = sshll.u32 %s4, 4
          %s704 = int_to_ptr.hbm [resolvable:$true] %s703
          %s705 = sshll.u32 [#allocation9], 4
          %s706 = int_to_ptr.vmem [resolvable:$true] %s705
          %711 = dma.hbm_to_vmem [thread:$0]  %s704, 384, %s706, [#allocation10], 128, 128, 8
        $region24: #{multi_stage_forward.1} parent=11 // pred_fallthru
          _
        // Predicated region
        $region25: #{multi_stage_forward.1} parent=11 // pred_check
          %p712 = pneg %p187
        $region26: #{multi_stage_forward.1} parent=11 // pred_check_branch
          %714 = sbr.rel (%p712) target = $region28
        $region27: #{multi_stage_forward.1} parent=11 // pred_region
          %716 = vsyncadd [#allocation10], 0
          %s717 = sshll.u32 %s5, 4
          %s718 = int_to_ptr.hbm [resolvable:$true] %s717
          %s719 = sshll.u32 [#allocation11], 4
          %s720 = int_to_ptr.vmem [resolvable:$true] %s719
          %725 = dma.hbm_to_vmem [thread:$0]  %s718, 384, %s720, [#allocation10], 128, 128, 8
        $region28: #{multi_stage_forward.1} parent=11 // pred_fallthru
          _
        // Predicated region
        $region29: #{multi_stage_forward.1} parent=11 // pred_check
          %p726 = pneg %p208
        $region30: #{multi_stage_forward.1} parent=11 // pred_check_branch
          %728 = sbr.rel (%p726) target = $region32
        $region31: #{multi_stage_forward.1} parent=11 // pred_region
          %730 = vsyncadd [#allocation13], 0
          %s731 = sshll.u32 %s6, 4
          %s732 = int_to_ptr.hbm [resolvable:$true] %s731
          %s733 = sshll.u32 [#allocation12], 4
          %s734 = int_to_ptr.vmem [resolvable:$true] %s733
          %739 = dma.hbm_to_vmem [thread:$0]  %s732, 384, %s734, [#allocation13], 128, 128, 8
        $region32: #{multi_stage_forward.1} parent=11 // pred_fallthru
          _
        // Predicated region
        $region33: #{multi_stage_forward.1} parent=11 // pred_check
          %p740 = pneg %p229
        $region34: #{multi_stage_forward.1} parent=11 // pred_check_branch
          %742 = sbr.rel (%p740) target = $region36
        $region35: #{multi_stage_forward.1} parent=11 // pred_region
          %744 = vsyncadd [#allocation13], 0
          %s745 = sshll.u32 %s7, 4
          %s746 = int_to_ptr.hbm [resolvable:$true] %s745
          %s747 = sshll.u32 [#allocation14], 4
          %s748 = int_to_ptr.vmem [resolvable:$true] %s747
          %753 = dma.hbm_to_vmem [thread:$0]  %s746, 384, %s748, [#allocation13], 128, 128, 8
        $region36: #{multi_stage_forward.1} parent=11 // pred_fallthru
          _
        // Predicated region
        $region37: #{multi_stage_forward.1} parent=11 // pred_check
          %p754 = pneg %p250
        $region38: #{multi_stage_forward.1} parent=11 // pred_check_branch
          %756 = sbr.rel (%p754) target = $region40
        $region39: #{multi_stage_forward.1} parent=11 // pred_region
          %758 = vsyncadd [#allocation16], 0
          %s760 = sshll.u32 %s8, 4
          %s761 = int_to_ptr.hbm [resolvable:$true] %s760
          %s762 = sshll.u32 [#allocation15], 4
          %s763 = int_to_ptr.vmem [resolvable:$true] %s762
          %765 = dma.hbm_to_vmem [thread:$0]  %s761, 128, %s763, [#allocation16]
        $region40: #{multi_stage_forward.1} parent=11 // pred_fallthru
          _
        // Predicated region
        $region41: #{multi_stage_forward.1} parent=11 // pred_check
          %p766 = pneg %p271
        $region42: #{multi_stage_forward.1} parent=11 // pred_check_branch
          %768 = sbr.rel (%p766) target = $region44
        $region43: #{multi_stage_forward.1} parent=11 // pred_region
          %770 = vsyncadd [#allocation16], 0
          %s772 = sshll.u32 %s9, 4
          %s773 = int_to_ptr.hbm [resolvable:$true] %s772
          %s774 = sshll.u32 [#allocation17], 4
          %s775 = int_to_ptr.vmem [resolvable:$true] %s774
          %777 = dma.hbm_to_vmem [thread:$0]  %s773, 128, %s775, [#allocation16]
        $region44: #{multi_stage_forward.1} parent=11 // pred_fallthru
          _
        // Predicated region
        $region45: #{multi_stage_forward.1} parent=11 // pred_check
          %p778 = pneg %p292
        $region46: #{multi_stage_forward.1} parent=11 // pred_check_branch
          %780 = sbr.rel (%p778) target = $region48
        $region47: #{multi_stage_forward.1} parent=11 // pred_region
          %782 = vsyncadd [#allocation19], 0
          %s784 = sshll.u32 %s10, 4
          %s785 = int_to_ptr.hbm [resolvable:$true] %s784
          %s786 = sshll.u32 [#allocation18], 4
          %s787 = int_to_ptr.vmem [resolvable:$true] %s786
          %789 = dma.hbm_to_vmem [thread:$0]  %s785, 128, %s787, [#allocation19]
        $region48: #{multi_stage_forward.1} parent=11 // pred_fallthru
          _
        // Predicated region
        $region49: #{multi_stage_forward.1} parent=11 // pred_check
          %p790 = pneg %p313
        $region50: #{multi_stage_forward.1} parent=11 // pred_check_branch
          %792 = sbr.rel (%p790) target = $region52
        $region51: #{multi_stage_forward.1} parent=11 // pred_region
          %794 = vsyncadd [#allocation19], 0
          %s796 = sshll.u32 %s11, 4
          %s797 = int_to_ptr.hbm [resolvable:$true] %s796
          %s798 = sshll.u32 [#allocation20], 4
          %s799 = int_to_ptr.vmem [resolvable:$true] %s798
          %801 = dma.hbm_to_vmem [thread:$0]  %s797, 128, %s799, [#allocation19]
        $region52: #{multi_stage_forward.1} parent=11 // pred_fallthru
          _
        // Predicated region
        $region53: #{multi_stage_forward.1} parent=11 // pred_check
          %p802 = pneg %p334
        $region54: #{multi_stage_forward.1} parent=11 // pred_check_branch
          %804 = sbr.rel (%p802) target = $region56
        $region55: #{multi_stage_forward.1} parent=11 // pred_region
          %806 = vsyncadd [#allocation22], 0
          %s807 = sshll.u32 %s12, 4
          %s808 = int_to_ptr.hbm [resolvable:$true] %s807
          %s809 = sshll.u32 [#allocation21], 4
          %s810 = int_to_ptr.vmem [resolvable:$true] %s809
          %815 = dma.hbm_to_vmem [thread:$0]  %s808, 384, %s810, [#allocation22], 128, 128, 8
        $region56: #{multi_stage_forward.1} parent=11 // pred_fallthru
          _
        // Predicated region
        $region57: #{multi_stage_forward.1} parent=11 // pred_check
          %p816 = pneg %p355
        $region58: #{multi_stage_forward.1} parent=11 // pred_check_branch
          %818 = sbr.rel (%p816) target = $region60
        $region59: #{multi_stage_forward.1} parent=11 // pred_region
          %820 = vsyncadd [#allocation22], 0
          %s821 = sshll.u32 %s13, 4
          %s822 = int_to_ptr.hbm [resolvable:$true] %s821
          %s823 = sshll.u32 [#allocation23], 4
          %s824 = int_to_ptr.vmem [resolvable:$true] %s823
          %829 = dma.hbm_to_vmem [thread:$0]  %s822, 384, %s824, [#allocation22], 128, 128, 8
        $region60: #{multi_stage_forward.1} parent=11 // pred_fallthru
          _
        // Predicated region
        $region61: #{multi_stage_forward.1} parent=11 // pred_check
          %p830 = pneg %p376
        $region62: #{multi_stage_forward.1} parent=11 // pred_check_branch
          %832 = sbr.rel (%p830) target = $region64
        $region63: #{multi_stage_forward.1} parent=11 // pred_region
          %834 = vsyncadd [#allocation25], 0
          %s835 = sshll.u32 %s14, 4
          %s836 = int_to_ptr.hbm [resolvable:$true] %s835
          %s837 = sshll.u32 [#allocation24], 4
          %s838 = int_to_ptr.vmem [resolvable:$true] %s837
          %843 = dma.hbm_to_vmem [thread:$0]  %s836, 384, %s838, [#allocation25], 128, 128, 8
        $region64: #{multi_stage_forward.1} parent=11 // pred_fallthru
          _
        // Predicated region
        $region65: #{multi_stage_forward.1} parent=11 // pred_check
          %p844 = pneg %p397
        $region66: #{multi_stage_forward.1} parent=11 // pred_check_branch
          %846 = sbr.rel (%p844) target = $region68
        $region67: #{multi_stage_forward.1} parent=11 // pred_region
          %848 = vsyncadd [#allocation25], 0
          %s849 = sshll.u32 %s15, 4
          %s850 = int_to_ptr.hbm [resolvable:$true] %s849
          %s851 = sshll.u32 [#allocation26], 4
          %s852 = int_to_ptr.vmem [resolvable:$true] %s851
          %857 = dma.hbm_to_vmem [thread:$0]  %s850, 384, %s852, [#allocation25], 128, 128, 8
        $region68: #{multi_stage_forward.1} parent=11 // pred_fallthru
          _
        // Predicated region
        $region69: #{multi_stage_forward.1} parent=11 // pred_check
          %p858 = pneg %p418
        $region70: #{multi_stage_forward.1} parent=11 // pred_check_branch
          %860 = sbr.rel (%p858) target = $region72
        $region71: #{multi_stage_forward.1} parent=11 // pred_region
          %862 = vsyncadd [#allocation28], 0
          %s864 = sshll.u32 %s16, 4
          %s865 = int_to_ptr.hbm [resolvable:$true] %s864
          %s866 = sshll.u32 [#allocation27], 4
          %s867 = int_to_ptr.vmem [resolvable:$true] %s866
          %869 = dma.hbm_to_vmem [thread:$0]  %s865, 128, %s867, [#allocation28]
        $region72: #{multi_stage_forward.1} parent=11 // pred_fallthru
          _
        // Predicated region
        $region73: #{multi_stage_forward.1} parent=11 // pred_check
          %p870 = pneg %p439
        $region74: #{multi_stage_forward.1} parent=11 // pred_check_branch
          %872 = sbr.rel (%p870) target = $region76
        $region75: #{multi_stage_forward.1} parent=11 // pred_region
          _
        $region76: #{multi_stage_forward.1} parent=11 // pred_fallthru
          _
        // Predicated region
        $region77: #{multi_stage_forward.1} parent=11 // pred_check
          %p873 = pneg %p460
        $region78: #{multi_stage_forward.1} parent=11 // pred_check_branch
          %875 = sbr.rel (%p873) target = $region80
        $region79: #{multi_stage_forward.1} parent=11 // pred_region
          %877 = vsyncadd [#allocation28], 0
          %s878 = sshll.u32 %s18, 4
          %s879 = int_to_ptr.hbm [resolvable:$true] %s878
          %s880 = sshll.u32 [#allocation29], 4
          %s881 = int_to_ptr.vmem [resolvable:$true] %s880
          %886 = dma.hbm_to_vmem [thread:$0]  %s879, 256, %s881, [#allocation28], 128, 128, 8
        $region80: #{multi_stage_forward.1} parent=11 // pred_fallthru
          _
        // Predicated region
        $region81: #{multi_stage_forward.1} parent=11 // pred_check
          %p887 = pneg %p481
        $region82: #{multi_stage_forward.1} parent=11 // pred_check_branch
          %889 = sbr.rel (%p887) target = $region84
        $region83: #{multi_stage_forward.1} parent=11 // pred_region
          %891 = vsyncadd [#allocation31], 0
          %s892 = sshll.u32 %s19, 4
          %s893 = int_to_ptr.hbm [resolvable:$true] %s892
          %s894 = sshll.u32 [#allocation30], 4
          %s895 = int_to_ptr.vmem [resolvable:$true] %s894
          %900 = dma.hbm_to_vmem [thread:$0]  %s893, 256, %s895, [#allocation31], 128, 128, 8
        $region84: #{multi_stage_forward.1} parent=11 // pred_fallthru
          _
        // Predicated region
        $region85: #{multi_stage_forward.1} parent=11 // pred_check
          %p901 = pneg %p502
        $region86: #{multi_stage_forward.1} parent=11 // pred_check_branch
          %903 = sbr.rel (%p901) target = $region88
        $region87: #{multi_stage_forward.1} parent=11 // pred_region
          %905 = vsyncadd [#allocation31], 0
          %s906 = sshll.u32 %s20, 4
          %s907 = int_to_ptr.hbm [resolvable:$true] %s906
          %s908 = sshll.u32 [#allocation32], 4
          %s909 = int_to_ptr.vmem [resolvable:$true] %s908
          %914 = dma.hbm_to_vmem [thread:$0]  %s907, 768, %s909, [#allocation31], 128, 128, 8
        $region88: #{multi_stage_forward.1} parent=11 // pred_fallthru
          _
        // Predicated region
        $region89: #{multi_stage_forward.1} parent=11 // pred_check
          %p915 = pneg %p523
        $region90: #{multi_stage_forward.1} parent=11 // pred_check_branch
          %917 = sbr.rel (%p915) target = $region92
        $region91: #{multi_stage_forward.1} parent=11 // pred_region
          %919 = vsyncadd [#allocation34], 0
          %s920 = sshll.u32 %s21, 4
          %s921 = int_to_ptr.hbm [resolvable:$true] %s920
          %s922 = sshll.u32 [#allocation33], 4
          %s923 = int_to_ptr.vmem [resolvable:$true] %s922
          %928 = dma.hbm_to_vmem [thread:$0]  %s921, 768, %s923, [#allocation34], 128, 128, 8
        $region92: #{multi_stage_forward.1} parent=11 // pred_fallthru
          _
        // Predicated region
        $region93: #{multi_stage_forward.1} parent=11 // pred_check
          %p929 = pneg %p544
        $region94: #{multi_stage_forward.1} parent=11 // pred_check_branch
          %931 = sbr.rel (%p929) target = $region96
        $region95: #{multi_stage_forward.1} parent=11 // pred_region
          %933 = vsyncadd [#allocation34], 0
          %s934 = sshll.u32 %s22, 4
          %s935 = int_to_ptr.hbm [resolvable:$true] %s934
          %s936 = sshll.u32 [#allocation35], 4
          %s937 = int_to_ptr.vmem [resolvable:$true] %s936
          %942 = dma.hbm_to_vmem [thread:$0]  %s935, 768, %s937, [#allocation34], 128, 128, 8
        $region96: #{multi_stage_forward.1} parent=11 // pred_fallthru
          _
        // Predicated region
        $region97: #{multi_stage_forward.1} parent=11 // pred_check
          %p943 = pneg %p565
        $region98: #{multi_stage_forward.1} parent=11 // pred_check_branch
          %945 = sbr.rel (%p943) target = $region100
        $region99: #{multi_stage_forward.1} parent=11 // pred_region
          %947 = vsyncadd [#allocation37], 0
          %s948 = sshll.u32 %s23, 4
          %s949 = int_to_ptr.hbm [resolvable:$true] %s948
          %s950 = sshll.u32 [#allocation36], 4
          %s951 = int_to_ptr.vmem [resolvable:$true] %s950
          %956 = dma.hbm_to_vmem [thread:$0]  %s949, 768, %s951, [#allocation37], 128, 128, 8
        $region100: #{multi_stage_forward.1} parent=11 // pred_fallthru
          _
        // Predicated region
        $region101: #{multi_stage_forward.1} parent=11 // pred_check
          %p957 = pneg %p586
        $region102: #{multi_stage_forward.1} parent=11 // pred_check_branch
          %959 = sbr.rel (%p957) target = $region104
        $region103: #{multi_stage_forward.1} parent=11 // pred_region
          %961 = vsyncadd [#allocation37], 0
          %s962 = sshll.u32 %s24, 4
          %s963 = int_to_ptr.hbm [resolvable:$true] %s962
          %s964 = sshll.u32 [#allocation38], 4
          %s965 = int_to_ptr.vmem [resolvable:$true] %s964
          %970 = dma.hbm_to_vmem [thread:$0]  %s963, 256, %s965, [#allocation37], 128, 128, 8
        $region104: #{multi_stage_forward.1} parent=11 // pred_fallthru
          _
        // Predicated region
        $region105: #{multi_stage_forward.1} parent=11 // pred_check
          %p971 = pneg %p607
        $region106: #{multi_stage_forward.1} parent=11 // pred_check_branch
          %973 = sbr.rel (%p971) target = $region108
        $region107: #{multi_stage_forward.1} parent=11 // pred_region
          _
        $region108: #{multi_stage_forward.1} parent=11 // pred_fallthru
          _
      $region12: #{multi_stage_forward.1} parent=5 // pred_fallthru
        _
      %p974 = scmp.lt.s32.totalorder %s51, 2
      // Predicated region
      $region109: #{multi_stage_forward.1} parent=5 // pred_check
        %p975 = pneg %p974
      $region110: #{multi_stage_forward.1} parent=5 // pred_check_branch
        %977 = sbr.rel (%p975) target = $region112
      $region111: #{multi_stage_forward.1} parent=5 // pred_region
        // Predicated region
        $region113: #{multi_stage_forward.1} parent=111 // pred_check
          %p978 = pneg %p71
        $region114: #{multi_stage_forward.1} parent=111 // pred_check_branch
          %980 = sbr.rel (%p978) target = $region116
        $region115: #{multi_stage_forward.1} parent=111 // pred_region
          %s981 = sand.u32 %s61, 1
          %s982 = scalar_lea.sflag [#allocation4], %s981
          %s983 = sand.u32 %s61, 1
          %s984 = smul.addr %s983, 4
          %s985 = scalar_lea.vmem [#allocation3], %s984
          %987 = vsyncadd %s982, 0
          %s988 = smul.addr %s51, 4
          %s989 = scalar_lea.hbm %s0, %s988
          %s991 = sshll.u32 %s989, 4
          %s992 = int_to_ptr.hbm [resolvable:$true] %s991
          %s993 = sshll.u32 %s985, 4
          %s994 = int_to_ptr.vmem [resolvable:$true] %s993
          %996 = dma.hbm_to_vmem [thread:$0]  %s992, 64, %s994, %s982
        $region116: #{multi_stage_forward.1} parent=111 // pred_fallthru
          _
        // Predicated region
        $region117: #{multi_stage_forward.1} parent=111 // pred_check
          %p997 = pneg %p97
        $region118: #{multi_stage_forward.1} parent=111 // pred_check_branch
          %999 = sbr.rel (%p997) target = $region120
        $region119: #{multi_stage_forward.1} parent=111 // pred_region
          %p1000 = scmp.lt.s32.totalorder %s51, 1
          %s1001 = scalar_select %p1000, %s51, 1
          %s1002 = scalar_lea.vmem %s1, %s1001
        $region120: #{multi_stage_forward.1} parent=111 // pred_fallthru
          _
      $region112: #{multi_stage_forward.1} parent=5 // pred_fallthru
        _
      %p1003 = scmp.le.s32.totalorder 1, %s51
      %p1004 = scmp.lt.s32.totalorder %s51, 3
      %p1005 = pnand %p1003, %p1004
      %p1006 = pneg %p1005
      // Predicated region
      $region121: #{multi_stage_forward.1} parent=5 // pred_check
        _
      $region122: #{multi_stage_forward.1} parent=5 // pred_check_branch
        %1008 = sbr.rel (%p1005) target = $region124
      $region123: #{multi_stage_forward.1} parent=5 // pred_region
        %s1009 = ssub.s32 %s51, 1
        %s1010 = sand.u32 %s64, 1
        %s1011 = scalar_lea.sflag [#allocation4], %s1010
        %s1012 = sand.u32 %s64, 1
        %s1013 = smul.addr %s1012, 4
        %s1014 = scalar_lea.vmem [#allocation3], %s1013
        // Predicated region
        $region125: #{multi_stage_forward.1} parent=123 // pred_check
          %p1015 = pneg %p77
        $region126: #{multi_stage_forward.1} parent=123 // pred_check_branch
          %1017 = sbr.rel (%p1015) target = $region128
        $region127: #{multi_stage_forward.1} parent=123 // pred_region
          %1019 = dma.done %s1011, 64
        $region128: #{multi_stage_forward.1} parent=123 // pred_fallthru
          _
        // Predicated region
        $region129: #{multi_stage_forward.1} parent=123 // pred_check
          %p1020 = pneg %p124
        $region130: #{multi_stage_forward.1} parent=123 // pred_check_branch
          %1022 = sbr.rel (%p1020) target = $region132
        $region131: #{multi_stage_forward.1} parent=123 // pred_region
          %1024 = dma.done [#allocation7], 128
        $region132: #{multi_stage_forward.1} parent=123 // pred_fallthru
          _
        // Predicated region
        $region133: #{multi_stage_forward.1} parent=123 // pred_check
          %p1025 = pneg %p145
        $region134: #{multi_stage_forward.1} parent=123 // pred_check_branch
          %1027 = sbr.rel (%p1025) target = $region136
        $region135: #{multi_stage_forward.1} parent=123 // pred_region
          %1029 = dma.done [#allocation7], 128
        $region136: #{multi_stage_forward.1} parent=123 // pred_fallthru
          _
        // Predicated region
        $region137: #{multi_stage_forward.1} parent=123 // pred_check
          %p1030 = pneg %p166
        $region138: #{multi_stage_forward.1} parent=123 // pred_check_branch
          %1032 = sbr.rel (%p1030) target = $region140
        $region139: #{multi_stage_forward.1} parent=123 // pred_region
          %1034 = dma.done [#allocation10], 384
        $region140: #{multi_stage_forward.1} parent=123 // pred_fallthru
          _
        // Predicated region
        $region141: #{multi_stage_forward.1} parent=123 // pred_check
          %p1035 = pneg %p187
        $region142: #{multi_stage_forward.1} parent=123 // pred_check_branch
          %1037 = sbr.rel (%p1035) target = $region144
        $region143: #{multi_stage_forward.1} parent=123 // pred_region
          %1039 = dma.done [#allocation10], 384
        $region144: #{multi_stage_forward.1} parent=123 // pred_fallthru
          _
        // Predicated region
        $region145: #{multi_stage_forward.1} parent=123 // pred_check
          %p1040 = pneg %p208
        $region146: #{multi_stage_forward.1} parent=123 // pred_check_branch
          %1042 = sbr.rel (%p1040) target = $region148
        $region147: #{multi_stage_forward.1} parent=123 // pred_region
          %1044 = dma.done [#allocation13], 384
        $region148: #{multi_stage_forward.1} parent=123 // pred_fallthru
          _
        // Predicated region
        $region149: #{multi_stage_forward.1} parent=123 // pred_check
          %p1045 = pneg %p229
        $region150: #{multi_stage_forward.1} parent=123 // pred_check_branch
          %1047 = sbr.rel (%p1045) target = $region152
        $region151: #{multi_stage_forward.1} parent=123 // pred_region
          %1049 = dma.done [#allocation13], 384
        $region152: #{multi_stage_forward.1} parent=123 // pred_fallthru
          _
        // Predicated region
        $region153: #{multi_stage_forward.1} parent=123 // pred_check
          %p1050 = pneg %p250
        $region154: #{multi_stage_forward.1} parent=123 // pred_check_branch
          %1052 = sbr.rel (%p1050) target = $region156
        $region155: #{multi_stage_forward.1} parent=123 // pred_region
          %1054 = dma.done [#allocation16], 128
        $region156: #{multi_stage_forward.1} parent=123 // pred_fallthru
          _
        // Predicated region
        $region157: #{multi_stage_forward.1} parent=123 // pred_check
          %p1055 = pneg %p271
        $region158: #{multi_stage_forward.1} parent=123 // pred_check_branch
          %1057 = sbr.rel (%p1055) target = $region160
        $region159: #{multi_stage_forward.1} parent=123 // pred_region
          %1059 = dma.done [#allocation16], 128
        $region160: #{multi_stage_forward.1} parent=123 // pred_fallthru
          _
        // Predicated region
        $region161: #{multi_stage_forward.1} parent=123 // pred_check
          %p1060 = pneg %p292
        $region162: #{multi_stage_forward.1} parent=123 // pred_check_branch
          %1062 = sbr.rel (%p1060) target = $region164
        $region163: #{multi_stage_forward.1} parent=123 // pred_region
          %1064 = dma.done [#allocation19], 128
        $region164: #{multi_stage_forward.1} parent=123 // pred_fallthru
          _
        // Predicated region
        $region165: #{multi_stage_forward.1} parent=123 // pred_check
          %p1065 = pneg %p313
        $region166: #{multi_stage_forward.1} parent=123 // pred_check_branch
          %1067 = sbr.rel (%p1065) target = $region168
        $region167: #{multi_stage_forward.1} parent=123 // pred_region
          %1069 = dma.done [#allocation19], 128
        $region168: #{multi_stage_forward.1} parent=123 // pred_fallthru
          _
        // Predicated region
        $region169: #{multi_stage_forward.1} parent=123 // pred_check
          %p1070 = pneg %p334
        $region170: #{multi_stage_forward.1} parent=123 // pred_check_branch
          %1072 = sbr.rel (%p1070) target = $region172
        $region171: #{multi_stage_forward.1} parent=123 // pred_region
          %1074 = dma.done [#allocation22], 384
        $region172: #{multi_stage_forward.1} parent=123 // pred_fallthru
          _
        // Predicated region
        $region173: #{multi_stage_forward.1} parent=123 // pred_check
          %p1075 = pneg %p355
        $region174: #{multi_stage_forward.1} parent=123 // pred_check_branch
          %1077 = sbr.rel (%p1075) target = $region176
        $region175: #{multi_stage_forward.1} parent=123 // pred_region
          %1079 = dma.done [#allocation22], 384
        $region176: #{multi_stage_forward.1} parent=123 // pred_fallthru
          _
        // Predicated region
        $region177: #{multi_stage_forward.1} parent=123 // pred_check
          %p1080 = pneg %p376
        $region178: #{multi_stage_forward.1} parent=123 // pred_check_branch
          %1082 = sbr.rel (%p1080) target = $region180
        $region179: #{multi_stage_forward.1} parent=123 // pred_region
          %1084 = dma.done [#allocation25], 384
        $region180: #{multi_stage_forward.1} parent=123 // pred_fallthru
          _
        // Predicated region
        $region181: #{multi_stage_forward.1} parent=123 // pred_check
          %p1085 = pneg %p397
        $region182: #{multi_stage_forward.1} parent=123 // pred_check_branch
          %1087 = sbr.rel (%p1085) target = $region184
        $region183: #{multi_stage_forward.1} parent=123 // pred_region
          %1089 = dma.done [#allocation25], 384
        $region184: #{multi_stage_forward.1} parent=123 // pred_fallthru
          _
        // Predicated region
        $region185: #{multi_stage_forward.1} parent=123 // pred_check
          %p1090 = pneg %p418
        $region186: #{multi_stage_forward.1} parent=123 // pred_check_branch
          %1092 = sbr.rel (%p1090) target = $region188
        $region187: #{multi_stage_forward.1} parent=123 // pred_region
          %1094 = dma.done [#allocation28], 128
        $region188: #{multi_stage_forward.1} parent=123 // pred_fallthru
          _
        // Predicated region
        $region189: #{multi_stage_forward.1} parent=123 // pred_check
          %p1095 = pneg %p460
        $region190: #{multi_stage_forward.1} parent=123 // pred_check_branch
          %1097 = sbr.rel (%p1095) target = $region192
        $region191: #{multi_stage_forward.1} parent=123 // pred_region
          %1099 = dma.done [#allocation28], 256
        $region192: #{multi_stage_forward.1} parent=123 // pred_fallthru
          _
        // Predicated region
        $region193: #{multi_stage_forward.1} parent=123 // pred_check
          %p1100 = pneg %p481
        $region194: #{multi_stage_forward.1} parent=123 // pred_check_branch
          %1102 = sbr.rel (%p1100) target = $region196
        $region195: #{multi_stage_forward.1} parent=123 // pred_region
          %1104 = dma.done [#allocation31], 256
        $region196: #{multi_stage_forward.1} parent=123 // pred_fallthru
          _
        // Predicated region
        $region197: #{multi_stage_forward.1} parent=123 // pred_check
          %p1105 = pneg %p502
        $region198: #{multi_stage_forward.1} parent=123 // pred_check_branch
          %1107 = sbr.rel (%p1105) target = $region200
        $region199: #{multi_stage_forward.1} parent=123 // pred_region
          %1109 = dma.done [#allocation31], 768
        $region200: #{multi_stage_forward.1} parent=123 // pred_fallthru
          _
        // Predicated region
        $region201: #{multi_stage_forward.1} parent=123 // pred_check
          %p1110 = pneg %p523
        $region202: #{multi_stage_forward.1} parent=123 // pred_check_branch
          %1112 = sbr.rel (%p1110) target = $region204
        $region203: #{multi_stage_forward.1} parent=123 // pred_region
          %1114 = dma.done [#allocation34], 768
        $region204: #{multi_stage_forward.1} parent=123 // pred_fallthru
          _
        // Predicated region
        $region205: #{multi_stage_forward.1} parent=123 // pred_check
          %p1115 = pneg %p544
        $region206: #{multi_stage_forward.1} parent=123 // pred_check_branch
          %1117 = sbr.rel (%p1115) target = $region208
        $region207: #{multi_stage_forward.1} parent=123 // pred_region
          %1119 = dma.done [#allocation34], 768
        $region208: #{multi_stage_forward.1} parent=123 // pred_fallthru
          _
        // Predicated region
        $region209: #{multi_stage_forward.1} parent=123 // pred_check
          %p1120 = pneg %p565
        $region210: #{multi_stage_forward.1} parent=123 // pred_check_branch
          %1122 = sbr.rel (%p1120) target = $region212
        $region211: #{multi_stage_forward.1} parent=123 // pred_region
          %1124 = dma.done [#allocation37], 768
        $region212: #{multi_stage_forward.1} parent=123 // pred_fallthru
          _
        // Predicated region
        $region213: #{multi_stage_forward.1} parent=123 // pred_check
          %p1125 = pneg %p586
        $region214: #{multi_stage_forward.1} parent=123 // pred_check_branch
          %1127 = sbr.rel (%p1125) target = $region216
        $region215: #{multi_stage_forward.1} parent=123 // pred_region
          %1129 = dma.done [#allocation37], 256
        $region216: #{multi_stage_forward.1} parent=123 // pred_fallthru
          _
        %s1130 = sand.u32 %s64, 1
        %s1131 = scalar_lea.sflag [#allocation4], %s1130
        %s1132 = sand.u32 %s64, 1
        %s1133 = smul.addr %s1132, 4
        %s1134 = scalar_lea.vmem [#allocation3], %s1133
        %p1135 = pneg %p77
        %p1136 = pneg %p74
        %p1137 = scmp.lt.s32.totalorder %s56, 1
        %s1138 = scalar_select %p1137, %s56, 1
        %s1139 = scalar_lea.vmem %s1, %s1138
        %p1140 = pneg %p103
        %p1141 = pneg %p100
        %p1142 = pneg %p124
        %p1143 = pneg %p121
        %p1144 = pneg %p145
        %p1145 = pneg %p142
        %p1146 = pneg %p166
        %p1147 = pneg %p163
        %p1148 = pneg %p187
        %p1149 = pneg %p184
        %p1150 = pneg %p208
        %p1151 = pneg %p205
        %p1152 = pneg %p229
        %p1153 = pneg %p226
        %p1154 = pneg %p250
        %p1155 = pneg %p247
        %p1156 = pneg %p271
        %p1157 = pneg %p268
        %p1158 = pneg %p292
        %p1159 = pneg %p289
        %p1160 = pneg %p313
        %p1161 = pneg %p310
        %p1162 = pneg %p334
        %p1163 = pneg %p331
        %p1164 = pneg %p355
        %p1165 = pneg %p352
        %p1166 = pneg %p376
        %p1167 = pneg %p373
        %p1168 = pneg %p397
        %p1169 = pneg %p394
        %p1170 = pneg %p418
        %p1171 = pneg %p415
        %p1172 = pneg %p439
        %p1173 = pneg %p436
        %p1174 = pneg %p460
        %p1175 = pneg %p457
        %p1176 = pneg %p481
        %p1177 = pneg %p478
        %p1178 = pneg %p502
        %p1179 = pneg %p499
        %p1180 = pneg %p523
        %p1181 = pneg %p520
        %p1182 = pneg %p544
        %p1183 = pneg %p541
        %p1184 = pneg %p565
        %p1185 = pneg %p562
        %p1186 = pneg %p586
        %p1187 = pneg %p583
        %p1188 = pneg %p607
        %p1189 = pneg %p604
        %p1190 = pneg %p633
        %p1191 = pneg %p630
        %s1192 = sand.u32 %s620, 1
        %s1193 = scalar_lea.sflag [#allocation5], %s1192
        %s1194 = sand.u32 %s620, 1
        %s1195 = smul.addr %s1194, 8
        %s1196 = scalar_lea.vmem [#allocation39], %s1195
        %p1197 = pneg %p659
        %p1198 = pneg %p656
        %s1199 = sand.u32 %s646, 1
        %s1200 = sand.u32 %s646, 1
        %s1201 = smul.addr %s1200, 24
        %s1202 = scalar_lea.vmem [#allocation40], %s1201
        %p1203 = scmp.lt.s32.totalorder %s56, 1
        %s1204 = scalar_select %p1203, %s56, 1
        %s1205 = scalar_lea.vmem %s1, %s1204
        %v1206 = vld [vmem:[%s1205] sm:$0x1]
        %v1207 = vld [vmem:[%s1014] sm:$0xf]
        %vm1208 = vcmask 261120
        %1209 = vst.msk [vmem:[#allocation2] sm:$0xff] %vm1208, 0.0
        %v1210 = vld [vmem:[#allocation6] sm:$0xff]
        %v1211 = vld [vmem:[#allocation8] sm:$0xff]
        %v1212 = vld [vmem:[#allocation9] sm:$0xff]
        %v1213 = vld [vmem:[#allocation11] sm:$0xff]
        %v1214 = vld [vmem:[#allocation12] sm:$0xff]
        %v1215 = vld [vmem:[#allocation14] sm:$0xff]
        %s1216 = scalar_lea.vmem [#allocation9], 8
        %v1217 = vld [vmem:[%s1216] sm:$0xff]
        %s1218 = scalar_lea.vmem [#allocation11], 8
        %v1219 = vld [vmem:[%s1218] sm:$0xff]
        %s1220 = scalar_lea.vmem [#allocation12], 8
        %v1221 = vld [vmem:[%s1220] sm:$0xff]
        %s1222 = scalar_lea.vmem [#allocation14], 8
        %v1223 = vld [vmem:[%s1222] sm:$0xff]
        %s1224 = scalar_lea.vmem [#allocation9], 16
        %v1225 = vld [vmem:[%s1224] sm:$0xff]
        %s1226 = scalar_lea.vmem [#allocation11], 16
        %v1227 = vld [vmem:[%s1226] sm:$0xff]
        %s1228 = scalar_lea.vmem [#allocation12], 16
        %v1229 = vld [vmem:[%s1228] sm:$0xff]
        %s1230 = scalar_lea.vmem [#allocation14], 16
        %v1231 = vld [vmem:[%s1230] sm:$0xff]
        %v1232 = vld [vmem:[#allocation15] sm:$0x3f]
        %v1233 = vld [vmem:[#allocation17] sm:$0x3f]
        %1235 = vset.pattern.permute.xlu0 0
        %1236 = vperm.xlu0 %1235, %v1211
        %v1237 = vpop.permute.xlu0 %1236
        %vm1239 = vcmask 31744
        %v1241 = vsel %vm1239, %v1210, 0
        %vm1243 = vcmask 1043456
        %v1245 = vsel %vm1243, %v1207, 0
        %1247 = vmatpush.msra.mxu0 0.0
        %1248 = vmatpush.msra.mxu0 0.0
        %1249 = vmatpush.msra.mxu0 0.0
        %1250 = vmatpush.msra.mxu0 0.0
        %1251 = vmatpush.msra.mxu0 0.0
        %1252 = vmatpush.msra.mxu0 0.0
        %1253 = vmatpush.msra.mxu0 0.0
        %1254 = vmatpush.msra.mxu0 0.0
        %1255 = vmatpush.msra.mxu0 0.0
        %1256 = vmatpush.msra.mxu0 0.0
        %1257 = vmatpush.msra.mxu0 0.0
        %1258 = vmatpush.msra.mxu0 0.0
        %1259 = vmatpush.msra.mxu0 0.0
        %1260 = vmatpush.msra.mxu0 0.0
        %1261 = vmatpush.msra.mxu0 0.0
        %1262 = vmatpush.msra.mxu0 %v1245
        %1263 = vmatmul.f32.gmra.mxu0 %v1241
        %v1264 = vpop.f32.mrf.mxu0
        %v1265 = vadd.f32 %v1237, %v1264
        %1266 = vdwg.mxu0
        %1268 = vrot.lane.b32.xlu0 %v1265, 8
        %v1269 = vpop.permute.xlu0 %1268
        %vm1271 = vcmask 195648
        %1272 = vst.msk [vmem:[#allocation2] sm:$0xff] %vm1271, %v1269
        %v1273 = vld [vmem:[#allocation2] sm:$0xff]
        %1275 = vrot.lane.b32.xlu0 %v1273, 127
        %v1276 = vpop.permute.xlu0 %1275
        %1277 = vrot.lane.b32.xlu0 %v1273, 126
        %v1278 = vpop.permute.xlu0 %1277
        %1280 = vset.pattern.permute.xlu0 0
        %1281 = vperm.xlu0 %1280, %v1213
        %v1282 = vpop.permute.xlu0 %1281
        %1284 = vrot.lane.b32.xlu0 %v1273, 121
        %v1285 = vpop.permute.xlu0 %1284
        %1286 = vrot.lane.b32.xlu0 %v1276, 121
        %v1287 = vpop.permute.xlu0 %1286
        %1288 = vrot.lane.b32.xlu0 %v1278, 121
        %v1289 = vpop.permute.xlu0 %1288
        %vm1293 = vcmask 195584
        %v1295 = vsel %vm1293, %v1212, 0
        %1297 = vmatpush.msra.mxu0 0.0
        %1298 = vmatpush.msra.mxu0 0.0
        %1299 = vmatpush.msra.mxu0 0.0
        %1300 = vmatpush.msra.mxu0 0.0
        %1301 = vmatpush.msra.mxu0 0.0
        %1302 = vmatpush.msra.mxu0 0.0
        %1303 = vmatpush.msra.mxu0 0.0
        %1304 = vmatpush.msra.mxu0 0.0
        %1305 = vmatpush.msra.mxu0 0.0
        %1306 = vmatpush.msra.mxu0 0.0
        %1307 = vmatpush.msra.mxu0 0.0
        %1308 = vmatpush.msra.mxu0 0.0
        %1309 = vmatpush.msra.mxu0 0.0
        %1310 = vmatpush.msra.mxu0 %v1289
        %1311 = vmatpush.msra.mxu0 %v1287
        %1312 = vmatpush.msra.mxu0 %v1285
        %1313 = vmatmul.f32.gmra.mxu0 %v1295
        %v1314 = vpop.f32.mrf.mxu0
        %v1315 = vadd.f32 %v1282, %v1314
        %1316 = vdwg.mxu0
        %v1317 = vmax.f32 %v1315, 0.0
        %1319 = vset.pattern.permute.xlu0 0
        %1320 = vperm.xlu0 %1319, %v1215
        %v1321 = vpop.permute.xlu0 %1320
        %vm1323 = vcmask 64512
        %v1325 = vsel %vm1323, %v1214, 0
        %1327 = vmatpush.msra.mxu0 0.0
        %1328 = vmatpush.msra.mxu0 0.0
        %1329 = vmatpush.msra.mxu0 0.0
        %1330 = vmatpush.msra.mxu0 0.0
        %1331 = vmatpush.msra.mxu0 0.0
        %1332 = vmatpush.msra.mxu0 0.0
        %1333 = vmatpush.msra.mxu0 0.0
        %1334 = vmatpush.msra.mxu0 0.0
        %1335 = vmatpush.msra.mxu0 0.0
        %1336 = vmatpush.msra.mxu0 0.0
        %1337 = vmatpush.msra.mxu0 0.0
        %1338 = vmatpush.msra.mxu0 0.0
        %1339 = vmatpush.msra.mxu0 0.0
        %1340 = vmatpush.msra.mxu0 0.0
        %1341 = vmatpush.msra.mxu0 0.0
        %1342 = vmatpush.msra.mxu0 %v1317
        %1343 = vmatmul.f32.gmra.mxu0 %v1325
        %v1344 = vpop.f32.mrf.mxu0
        %v1345 = vadd.f32 %v1321, %v1344
        %1346 = vdwg.mxu0
        %v1347 = vadd.f32 %v1265, %v1345
        %v1349 = vperm.slane %v1206, 0
        %v1351 = vmul.f32 %v1347, %v1349
        %1353 = vrot.lane.b32.xlu0 %v1351, 8
        %v1354 = vpop.permute.xlu0 %1353
        %1356 = vst.msk [vmem:[#allocation2] sm:$0xff] %vm1271, %v1354
        %v1357 = vld [vmem:[#allocation2] sm:$0xff]
        %1359 = vrot.lane.b32.xlu0 %v1357, 126
        %v1360 = vpop.permute.xlu0 %1359
        %1361 = vrot.lane.b32.xlu0 %v1357, 124
        %v1362 = vpop.permute.xlu0 %1361
        %1364 = vset.pattern.permute.xlu0 0
        %1365 = vperm.xlu0 %1364, %v1219
        %v1366 = vpop.permute.xlu0 %1365
        %1368 = vrot.lane.b32.xlu0 %v1357, 122
        %v1369 = vpop.permute.xlu0 %1368
        %1370 = vrot.lane.b32.xlu0 %v1360, 122
        %v1371 = vpop.permute.xlu0 %1370
        %1372 = vrot.lane.b32.xlu0 %v1362, 122
        %v1373 = vpop.permute.xlu0 %1372
        %v1378 = vsel %vm1293, %v1217, 0
        %1380 = vmatpush.msra.mxu0 0.0
        %1381 = vmatpush.msra.mxu0 0.0
        %1382 = vmatpush.msra.mxu0 0.0
        %1383 = vmatpush.msra.mxu0 0.0
        %1384 = vmatpush.msra.mxu0 0.0
        %1385 = vmatpush.msra.mxu0 0.0
        %1386 = vmatpush.msra.mxu0 0.0
        %1387 = vmatpush.msra.mxu0 0.0
        %1388 = vmatpush.msra.mxu0 0.0
        %1389 = vmatpush.msra.mxu0 0.0
        %1390 = vmatpush.msra.mxu0 0.0
        %1391 = vmatpush.msra.mxu0 0.0
        %1392 = vmatpush.msra.mxu0 0.0
        %1393 = vmatpush.msra.mxu0 %v1373
        %1394 = vmatpush.msra.mxu0 %v1371
        %1395 = vmatpush.msra.mxu0 %v1369
        %1396 = vmatmul.f32.gmra.mxu0 %v1378
        %v1397 = vpop.f32.mrf.mxu0
        %v1398 = vadd.f32 %v1366, %v1397
        %1399 = vdwg.mxu0
        %v1400 = vmax.f32 %v1398, 0.0
        %1402 = vset.pattern.permute.xlu0 0
        %1403 = vperm.xlu0 %1402, %v1223
        %v1404 = vpop.permute.xlu0 %1403
        %v1407 = vsel %vm1323, %v1221, 0
        %1409 = vmatpush.msra.mxu0 0.0
        %1410 = vmatpush.msra.mxu0 0.0
        %1411 = vmatpush.msra.mxu0 0.0
        %1412 = vmatpush.msra.mxu0 0.0
        %1413 = vmatpush.msra.mxu0 0.0
        %1414 = vmatpush.msra.mxu0 0.0
        %1415 = vmatpush.msra.mxu0 0.0
        %1416 = vmatpush.msra.mxu0 0.0
        %1417 = vmatpush.msra.mxu0 0.0
        %1418 = vmatpush.msra.mxu0 0.0
        %1419 = vmatpush.msra.mxu0 0.0
        %1420 = vmatpush.msra.mxu0 0.0
        %1421 = vmatpush.msra.mxu0 0.0
        %1422 = vmatpush.msra.mxu0 0.0
        %1423 = vmatpush.msra.mxu0 0.0
        %1424 = vmatpush.msra.mxu0 %v1400
        %1425 = vmatmul.f32.gmra.mxu0 %v1407
        %v1426 = vpop.f32.mrf.mxu0
        %v1427 = vadd.f32 %v1404, %v1426
        %1428 = vdwg.mxu0
        %v1429 = vadd.f32 %v1351, %v1427
        %v1430 = vmul.f32 %v1429, %v1349
        %1432 = vrot.lane.b32.xlu0 %v1430, 8
        %v1433 = vpop.permute.xlu0 %1432
        %1435 = vst.msk [vmem:[#allocation2] sm:$0xff] %vm1271, %v1433
        %v1436 = vld [vmem:[#allocation2] sm:$0xff]
        %1438 = vrot.lane.b32.xlu0 %v1436, 124
        %v1439 = vpop.permute.xlu0 %1438
        %1440 = vrot.lane.b32.xlu0 %v1436, 120
        %v1441 = vpop.permute.xlu0 %1440
        %1443 = vset.pattern.permute.xlu0 0
        %1444 = vperm.xlu0 %1443, %v1227
        %v1445 = vpop.permute.xlu0 %1444
        %1447 = vrot.lane.b32.xlu0 %v1439, 124
        %v1448 = vpop.permute.xlu0 %1447
        %1449 = vrot.lane.b32.xlu0 %v1441, 124
        %v1450 = vpop.permute.xlu0 %1449
        %v1455 = vsel %vm1293, %v1225, 0
        %1457 = vmatpush.msra.mxu0 0.0
        %1458 = vmatpush.msra.mxu0 0.0
        %1459 = vmatpush.msra.mxu0 0.0
        %1460 = vmatpush.msra.mxu0 0.0
        %1461 = vmatpush.msra.mxu0 0.0
        %1462 = vmatpush.msra.mxu0 0.0
        %1463 = vmatpush.msra.mxu0 0.0
        %1464 = vmatpush.msra.mxu0 0.0
        %1465 = vmatpush.msra.mxu0 0.0
        %1466 = vmatpush.msra.mxu0 0.0
        %1467 = vmatpush.msra.mxu0 0.0
        %1468 = vmatpush.msra.mxu0 0.0
        %1469 = vmatpush.msra.mxu0 0.0
        %1470 = vmatpush.msra.mxu0 %v1450
        %1471 = vmatpush.msra.mxu0 %v1448
        %1472 = vmatpush.msra.mxu0 %v1439
        %1473 = vmatmul.f32.gmra.mxu0 %v1455
        %v1474 = vpop.f32.mrf.mxu0
        %v1475 = vadd.f32 %v1445, %v1474
        %1476 = vdwg.mxu0
        %v1477 = vmax.f32 %v1475, 0.0
        %1479 = vset.pattern.permute.xlu0 0
        %1480 = vperm.xlu0 %1479, %v1231
        %v1481 = vpop.permute.xlu0 %1480
        %v1484 = vsel %vm1323, %v1229, 0
        %1486 = vmatpush.msra.mxu0 0.0
        %1487 = vmatpush.msra.mxu0 0.0
        %1488 = vmatpush.msra.mxu0 0.0
        %1489 = vmatpush.msra.mxu0 0.0
        %1490 = vmatpush.msra.mxu0 0.0
        %1491 = vmatpush.msra.mxu0 0.0
        %1492 = vmatpush.msra.mxu0 0.0
        %1493 = vmatpush.msra.mxu0 0.0
        %1494 = vmatpush.msra.mxu0 0.0
        %1495 = vmatpush.msra.mxu0 0.0
        %1496 = vmatpush.msra.mxu0 0.0
        %1497 = vmatpush.msra.mxu0 0.0
        %1498 = vmatpush.msra.mxu0 0.0
        %1499 = vmatpush.msra.mxu0 0.0
        %1500 = vmatpush.msra.mxu0 0.0
        %1501 = vmatpush.msra.mxu0 %v1477
        %1502 = vmatmul.f32.gmra.mxu0 %v1484
        %v1503 = vpop.f32.mrf.mxu0
        %v1504 = vadd.f32 %v1481, %v1503
        %1505 = vdwg.mxu0
        %v1506 = vadd.f32 %v1430, %v1504
        %v1507 = vmul.f32 %v1506, %v1349
        %1509 = vset.pattern.permute.xlu0 0
        %1510 = vperm.xlu0 %1509, %v1233
        %v1511 = vpop.permute.xlu0 %1510
        %v1514 = vsel %vm1323, %v1232, 0
        %1516 = vmatpush.msra.mxu0 0.0
        %1517 = vmatpush.msra.mxu0 0.0
        %1518 = vmatpush.msra.mxu0 0.0
        %1519 = vmatpush.msra.mxu0 0.0
        %1520 = vmatpush.msra.mxu0 0.0
        %1521 = vmatpush.msra.mxu0 0.0
        %1522 = vmatpush.msra.mxu0 0.0
        %1523 = vmatpush.msra.mxu0 0.0
        %1524 = vmatpush.msra.mxu0 0.0
        %1525 = vmatpush.msra.mxu0 0.0
        %1526 = vmatpush.msra.mxu0 0.0
        %1527 = vmatpush.msra.mxu0 0.0
        %1528 = vmatpush.msra.mxu0 0.0
        %1529 = vmatpush.msra.mxu0 0.0
        %1530 = vmatpush.msra.mxu0 0.0
        %1531 = vmatpush.msra.mxu0 %v1507
        %1532 = vmatmul.f32.gmra.mxu0 %v1514
        %v1533 = vpop.f32.mrf.mxu0
        %v1534 = vadd.f32 %v1511, %v1533
        %1535 = vdwg.mxu0
        %v1536 = vmul.f32 %v1534, %v1349
        %v1537 = vld [vmem:[#allocation18] sm:$0xff]
        %v1538 = vld [vmem:[#allocation20] sm:$0xff]
        %v1539 = vld [vmem:[#allocation21] sm:$0xff]
        %v1540 = vld [vmem:[#allocation23] sm:$0xff]
        %v1541 = vld [vmem:[#allocation24] sm:$0xff]
        %v1542 = vld [vmem:[#allocation26] sm:$0xff]
        %s1543 = scalar_lea.vmem [#allocation21], 8
        %v1544 = vld [vmem:[%s1543] sm:$0xff]
        %s1545 = scalar_lea.vmem [#allocation23], 8
        %v1546 = vld [vmem:[%s1545] sm:$0xff]
        %s1547 = scalar_lea.vmem [#allocation24], 8
        %v1548 = vld [vmem:[%s1547] sm:$0xff]
        %s1549 = scalar_lea.vmem [#allocation26], 8
        %v1550 = vld [vmem:[%s1549] sm:$0xff]
        %s1551 = scalar_lea.vmem [#allocation21], 16
        %v1552 = vld [vmem:[%s1551] sm:$0xff]
        %s1553 = scalar_lea.vmem [#allocation23], 16
        %v1554 = vld [vmem:[%s1553] sm:$0xff]
        %s1555 = scalar_lea.vmem [#allocation24], 16
        %v1556 = vld [vmem:[%s1555] sm:$0xff]
        %s1557 = scalar_lea.vmem [#allocation26], 16
        %v1558 = vld [vmem:[%s1557] sm:$0xff]
        %v1559 = vld [vmem:[#allocation27] sm:$0x3f]
        %v1560 = vld [vmem:[%s17] sm:$0x3f]
        %1562 = vset.pattern.permute.xlu0 0
        %1563 = vperm.xlu0 %1562, %v1538
        %v1564 = vpop.permute.xlu0 %1563
        %v1567 = vsel %vm1239, %v1537, 0
        %1569 = vmatpush.msra.mxu0 0.0
        %1570 = vmatpush.msra.mxu0 0.0
        %1571 = vmatpush.msra.mxu0 0.0
        %1572 = vmatpush.msra.mxu0 0.0
        %1573 = vmatpush.msra.mxu0 0.0
        %1574 = vmatpush.msra.mxu0 0.0
        %1575 = vmatpush.msra.mxu0 0.0
        %1576 = vmatpush.msra.mxu0 0.0
        %1577 = vmatpush.msra.mxu0 0.0
        %1578 = vmatpush.msra.mxu0 0.0
        %1579 = vmatpush.msra.mxu0 0.0
        %1580 = vmatpush.msra.mxu0 0.0
        %1581 = vmatpush.msra.mxu0 0.0
        %1582 = vmatpush.msra.mxu0 0.0
        %1583 = vmatpush.msra.mxu0 0.0
        %1584 = vmatpush.msra.mxu0 %v1245
        %1585 = vmatmul.f32.gmra.mxu0 %v1567
        %v1586 = vpop.f32.mrf.mxu0
        %v1587 = vadd.f32 %v1564, %v1586
        %1588 = vdwg.mxu0
        %1590 = vrot.lane.b32.xlu0 %v1587, 8
        %v1591 = vpop.permute.xlu0 %1590
        %1593 = vst.msk [vmem:[#allocation2] sm:$0xff] %vm1271, %v1591
        %v1594 = vld [vmem:[#allocation2] sm:$0xff]
        %1596 = vrot.lane.b32.xlu0 %v1594, 127
        %v1597 = vpop.permute.xlu0 %1596
        %1598 = vrot.lane.b32.xlu0 %v1594, 126
        %v1599 = vpop.permute.xlu0 %1598
        %1600 = vrot.lane.b32.xlu0 %v1594, 125
        %v1601 = vpop.permute.xlu0 %1600
        %1602 = vrot.lane.b32.xlu0 %v1594, 124
        %v1603 = vpop.permute.xlu0 %1602
        %1605 = vset.pattern.permute.xlu0 0
        %1606 = vperm.xlu0 %1605, %v1540
        %v1607 = vpop.permute.xlu0 %1606
        %1609 = vrot.lane.b32.xlu0 %v1594, 122
        %v1610 = vpop.permute.xlu0 %1609
        %1611 = vrot.lane.b32.xlu0 %v1597, 122
        %v1612 = vpop.permute.xlu0 %1611
        %1613 = vrot.lane.b32.xlu0 %v1599, 122
        %v1614 = vpop.permute.xlu0 %1613
        %1615 = vrot.lane.b32.xlu0 %v1601, 122
        %v1616 = vpop.permute.xlu0 %1615
        %1617 = vrot.lane.b32.xlu0 %v1603, 122
        %v1618 = vpop.permute.xlu0 %1617
        %vm1624 = vcmask 326656
        %v1626 = vsel %vm1624, %v1539, 0
        %1628 = vmatpush.msra.mxu0 0.0
        %1629 = vmatpush.msra.mxu0 0.0
        %1630 = vmatpush.msra.mxu0 0.0
        %1631 = vmatpush.msra.mxu0 0.0
        %1632 = vmatpush.msra.mxu0 0.0
        %1633 = vmatpush.msra.mxu0 0.0
        %1634 = vmatpush.msra.mxu0 0.0
        %1635 = vmatpush.msra.mxu0 0.0
        %1636 = vmatpush.msra.mxu0 0.0
        %1637 = vmatpush.msra.mxu0 0.0
        %1638 = vmatpush.msra.mxu0 0.0
        %1639 = vmatpush.msra.mxu0 %v1618
        %1640 = vmatpush.msra.mxu0 %v1616
        %1641 = vmatpush.msra.mxu0 %v1614
        %1642 = vmatpush.msra.mxu0 %v1612
        %1643 = vmatpush.msra.mxu0 %v1610
        %1644 = vmatmul.f32.gmra.mxu0 %v1626
        %v1645 = vpop.f32.mrf.mxu0
        %v1646 = vadd.f32 %v1607, %v1645
        %1647 = vdwg.mxu0
        %v1648 = vmax.f32 %v1646, 0.0
        %1650 = vset.pattern.permute.xlu0 0
        %1651 = vperm.xlu0 %1650, %v1542
        %v1652 = vpop.permute.xlu0 %1651
        %v1655 = vsel %vm1323, %v1541, 0
        %1657 = vmatpush.msra.mxu0 0.0
        %1658 = vmatpush.msra.mxu0 0.0
        %1659 = vmatpush.msra.mxu0 0.0
        %1660 = vmatpush.msra.mxu0 0.0
        %1661 = vmatpush.msra.mxu0 0.0
        %1662 = vmatpush.msra.mxu0 0.0
        %1663 = vmatpush.msra.mxu0 0.0
        %1664 = vmatpush.msra.mxu0 0.0
        %1665 = vmatpush.msra.mxu0 0.0
        %1666 = vmatpush.msra.mxu0 0.0
        %1667 = vmatpush.msra.mxu0 0.0
        %1668 = vmatpush.msra.mxu0 0.0
        %1669 = vmatpush.msra.mxu0 0.0
        %1670 = vmatpush.msra.mxu0 0.0
        %1671 = vmatpush.msra.mxu0 0.0
        %1672 = vmatpush.msra.mxu0 %v1648
        %1673 = vmatmul.f32.gmra.mxu0 %v1655
        %v1674 = vpop.f32.mrf.mxu0
        %v1675 = vadd.f32 %v1652, %v1674
        %1676 = vdwg.mxu0
        %v1677 = vadd.f32 %v1587, %v1675
        %v1678 = vmul.f32 %v1677, %v1349
        %1680 = vrot.lane.b32.xlu0 %v1678, 8
        %v1681 = vpop.permute.xlu0 %1680
        %1683 = vst.msk [vmem:[#allocation2] sm:$0xff] %vm1271, %v1681
        %v1684 = vld [vmem:[#allocation2] sm:$0xff]
        %1686 = vrot.lane.b32.xlu0 %v1684, 126
        %v1687 = vpop.permute.xlu0 %1686
        %1688 = vrot.lane.b32.xlu0 %v1684, 124
        %v1689 = vpop.permute.xlu0 %1688
        %1690 = vrot.lane.b32.xlu0 %v1684, 122
        %v1691 = vpop.permute.xlu0 %1690
        %1692 = vrot.lane.b32.xlu0 %v1684, 120
        %v1693 = vpop.permute.xlu0 %1692
        %1695 = vset.pattern.permute.xlu0 0
        %1696 = vperm.xlu0 %1695, %v1546
        %v1697 = vpop.permute.xlu0 %1696
        %1699 = vrot.lane.b32.xlu0 %v1687, 124
        %v1700 = vpop.permute.xlu0 %1699
        %1701 = vrot.lane.b32.xlu0 %v1689, 124
        %v1702 = vpop.permute.xlu0 %1701
        %1703 = vrot.lane.b32.xlu0 %v1691, 124
        %v1704 = vpop.permute.xlu0 %1703
        %1705 = vrot.lane.b32.xlu0 %v1693, 124
        %v1706 = vpop.permute.xlu0 %1705
        %v1713 = vsel %vm1624, %v1544, 0
        %1715 = vmatpush.msra.mxu0 0.0
        %1716 = vmatpush.msra.mxu0 0.0
        %1717 = vmatpush.msra.mxu0 0.0
        %1718 = vmatpush.msra.mxu0 0.0
        %1719 = vmatpush.msra.mxu0 0.0
        %1720 = vmatpush.msra.mxu0 0.0
        %1721 = vmatpush.msra.mxu0 0.0
        %1722 = vmatpush.msra.mxu0 0.0
        %1723 = vmatpush.msra.mxu0 0.0
        %1724 = vmatpush.msra.mxu0 0.0
        %1725 = vmatpush.msra.mxu0 0.0
        %1726 = vmatpush.msra.mxu0 %v1706
        %1727 = vmatpush.msra.mxu0 %v1704
        %1728 = vmatpush.msra.mxu0 %v1702
        %1729 = vmatpush.msra.mxu0 %v1700
        %1730 = vmatpush.msra.mxu0 %v1689
        %1731 = vmatmul.f32.gmra.mxu0 %v1713
        %v1732 = vpop.f32.mrf.mxu0
        %v1733 = vadd.f32 %v1697, %v1732
        %1734 = vdwg.mxu0
        %v1735 = vmax.f32 %v1733, 0.0
        %1737 = vset.pattern.permute.xlu0 0
        %1738 = vperm.xlu0 %1737, %v1550
        %v1739 = vpop.permute.xlu0 %1738
        %v1742 = vsel %vm1323, %v1548, 0
        %1744 = vmatpush.msra.mxu0 0.0
        %1745 = vmatpush.msra.mxu0 0.0
        %1746 = vmatpush.msra.mxu0 0.0
        %1747 = vmatpush.msra.mxu0 0.0
        %1748 = vmatpush.msra.mxu0 0.0
        %1749 = vmatpush.msra.mxu0 0.0
        %1750 = vmatpush.msra.mxu0 0.0
        %1751 = vmatpush.msra.mxu0 0.0
        %1752 = vmatpush.msra.mxu0 0.0
        %1753 = vmatpush.msra.mxu0 0.0
        %1754 = vmatpush.msra.mxu0 0.0
        %1755 = vmatpush.msra.mxu0 0.0
        %1756 = vmatpush.msra.mxu0 0.0
        %1757 = vmatpush.msra.mxu0 0.0
        %1758 = vmatpush.msra.mxu0 0.0
        %1759 = vmatpush.msra.mxu0 %v1735
        %1760 = vmatmul.f32.gmra.mxu0 %v1742
        %v1761 = vpop.f32.mrf.mxu0
        %v1762 = vadd.f32 %v1739, %v1761
        %1763 = vdwg.mxu0
        %v1764 = vadd.f32 %v1678, %v1762
        %v1765 = vmul.f32 %v1764, %v1349
        %1767 = vrot.lane.b32.xlu0 %v1765, 8
        %v1768 = vpop.permute.xlu0 %1767
        %1770 = vst.msk [vmem:[#allocation2] sm:$0xff] %vm1271, %v1768
        %v1771 = vld [vmem:[#allocation2] sm:$0xff]
        %1773 = vrot.lane.b32.xlu0 %v1771, 124
        %v1774 = vpop.permute.xlu0 %1773
        %1776 = vrot.lane.b32.xlu0 %v1771, 120
        %v1777 = vpop.permute.xlu0 %1776
        %1779 = vrot.lane.b32.xlu0 %v1771, 116
        %v1780 = vpop.permute.xlu0 %1779
        %1782 = vrot.lane.b32.xlu0 %v1771, 112
        %v1783 = vpop.permute.xlu0 %1782
        %1786 = vset.pattern.permute.xlu0 0
        %1787 = vperm.xlu0 %1786, %v1554
        %v1788 = vpop.permute.xlu0 %1787
        %v1791 = vsel %vm1624, %v1552, 0
        %1793 = vmatpush.msra.mxu0 0.0
        %1794 = vmatpush.msra.mxu0 0.0
        %1795 = vmatpush.msra.mxu0 0.0
        %1796 = vmatpush.msra.mxu0 0.0
        %1797 = vmatpush.msra.mxu0 0.0
        %1798 = vmatpush.msra.mxu0 0.0
        %1799 = vmatpush.msra.mxu0 0.0
        %1800 = vmatpush.msra.mxu0 0.0
        %1801 = vmatpush.msra.mxu0 0.0
        %1802 = vmatpush.msra.mxu0 0.0
        %1803 = vmatpush.msra.mxu0 0.0
        %1804 = vmatpush.msra.mxu0 %v1783
        %1805 = vmatpush.msra.mxu0 %v1780
        %1806 = vmatpush.msra.mxu0 %v1777
        %1807 = vmatpush.msra.mxu0 %v1774
        %1808 = vmatpush.msra.mxu0 %v1771
        %1809 = vmatmul.f32.gmra.mxu0 %v1791
        %v1810 = vpop.f32.mrf.mxu0
        %v1811 = vadd.f32 %v1788, %v1810
        %1812 = vdwg.mxu0
        %v1813 = vmax.f32 %v1811, 0.0
        %1815 = vset.pattern.permute.xlu0 0
        %1816 = vperm.xlu0 %1815, %v1558
        %v1817 = vpop.permute.xlu0 %1816
        %v1820 = vsel %vm1323, %v1556, 0
        %1822 = vmatpush.msra.mxu0 0.0
        %1823 = vmatpush.msra.mxu0 0.0
        %1824 = vmatpush.msra.mxu0 0.0
        %1825 = vmatpush.msra.mxu0 0.0
        %1826 = vmatpush.msra.mxu0 0.0
        %1827 = vmatpush.msra.mxu0 0.0
        %1828 = vmatpush.msra.mxu0 0.0
        %1829 = vmatpush.msra.mxu0 0.0
        %1830 = vmatpush.msra.mxu0 0.0
        %1831 = vmatpush.msra.mxu0 0.0
        %1832 = vmatpush.msra.mxu0 0.0
        %1833 = vmatpush.msra.mxu0 0.0
        %1834 = vmatpush.msra.mxu0 0.0
        %1835 = vmatpush.msra.mxu0 0.0
        %1836 = vmatpush.msra.mxu0 0.0
        %1837 = vmatpush.msra.mxu0 %v1813
        %1838 = vmatmul.f32.gmra.mxu0 %v1820
        %v1839 = vpop.f32.mrf.mxu0
        %v1840 = vadd.f32 %v1817, %v1839
        %1841 = vdwg.mxu0
        %v1842 = vadd.f32 %v1765, %v1840
        %v1843 = vmul.f32 %v1842, %v1349
        %1845 = vset.pattern.permute.xlu0 0
        %1846 = vperm.xlu0 %1845, %v1560
        %v1847 = vpop.permute.xlu0 %1846
        %v1850 = vsel %vm1323, %v1559, 0
        %1852 = vmatpush.msra.mxu0 0.0
        %1853 = vmatpush.msra.mxu0 0.0
        %1854 = vmatpush.msra.mxu0 0.0
        %1855 = vmatpush.msra.mxu0 0.0
        %1856 = vmatpush.msra.mxu0 0.0
        %1857 = vmatpush.msra.mxu0 0.0
        %1858 = vmatpush.msra.mxu0 0.0
        %1859 = vmatpush.msra.mxu0 0.0
        %1860 = vmatpush.msra.mxu0 0.0
        %1861 = vmatpush.msra.mxu0 0.0
        %1862 = vmatpush.msra.mxu0 0.0
        %1863 = vmatpush.msra.mxu0 0.0
        %1864 = vmatpush.msra.mxu0 0.0
        %1865 = vmatpush.msra.mxu0 0.0
        %1866 = vmatpush.msra.mxu0 0.0
        %1867 = vmatpush.msra.mxu0 %v1843
        %1868 = vmatmul.f32.gmra.mxu0 %v1850
        %v1869 = vpop.f32.mrf.mxu0
        %v1870 = vadd.f32 %v1847, %v1869
        %1871 = vdwg.mxu0
        %v1872 = vmul.f32 %v1870, %v1349
        %v1873 = vadd.f32 %v1536, %v1872
        %vm1874 = vcmask 128000
        %1875 = vst.msk [vmem:[%s1202] sm:$0x3f] %vm1874, %v1873
        %v1876 = vsel %vm1874, %v1873, -inf
        %v1877 = vrot.slane %v1876, 4
        %v1878 = vmax.f32 %v1876, %v1877
        %v1879 = vrot.slane %v1878, 2
        %v1880 = vmax.f32 %v1878, %v1879
        %v1881 = vrot.slane %v1880, 1
        %v1882 = vmax.f32 %v1880, %v1881
        %v1883 = vsub.f32 %v1873, %v1882
        %v1884 = vmul.f32 %v1883, 1.442695
        %v1885 = vpow.pop %v1884
        %v1886 = vsel %vm1874, %v1885, 0.0
        %v1887 = vrot.slane %v1886, 4
        %v1888 = vadd.f32 %v1886, %v1887
        %v1889 = vrot.slane %v1888, 2
        %v1890 = vadd.f32 %v1888, %v1889
        %v1891 = vrot.slane %v1890, 1
        %v1892 = vadd.f32 %v1890, %v1891
        %v1893 = vrcp.pop %v1892
        %v1894 = vmul.f32 %v1892, %v1893
        %v1895 = vsub.f32 1.0, %v1894
        %v1896 = vmul.f32 %v1893, %v1895
        %v1897 = vadd.f32 %v1893, %v1896
        %vm1898 = vweird.f32 %v1892
        %vm1899 = vweird.f32 %v1893
        %vm1900 = vmor %vm1898, %vm1899
        %v1901 = vsel %vm1900, %v1893, %v1897
        %v1902 = vand.u32 2147483647, %v1892
        %vm1903 = vcmp.eq.f32.partialorder %v1902, 8.507059e+37
        %v1904 = vand.u32 %v1892, 2147483648
        %v1905 = vor.u32 1.1754944e-38, %v1904
        %v1906 = vsel %vm1903, %v1905, %v1901
        %v1907 = vmul.f32 %v1885, %v1906
        %v1908 = vmul.f32 %v1907, %v1349
        %v1909 = vld [vmem:[#allocation32] sm:$0xff]
        %v1910 = vld [vmem:[#allocation33] sm:$0xff]
        %v1911 = vld [vmem:[#allocation35] sm:$0xff]
        %v1912 = vld [vmem:[#allocation36] sm:$0xff]
        %s1913 = scalar_lea.vmem [#allocation32], 8
        %v1914 = vld [vmem:[%s1913] sm:$0xff]
        %s1915 = scalar_lea.vmem [#allocation33], 8
        %v1916 = vld [vmem:[%s1915] sm:$0xff]
        %s1917 = scalar_lea.vmem [#allocation35], 8
        %v1918 = vld [vmem:[%s1917] sm:$0xff]
        %s1919 = scalar_lea.vmem [#allocation36], 8
        %v1920 = vld [vmem:[%s1919] sm:$0xff]
        %s1921 = scalar_lea.vmem [#allocation32], 16
        %v1922 = vld [vmem:[%s1921] sm:$0xff]
        %s1923 = scalar_lea.vmem [#allocation33], 16
        %v1924 = vld [vmem:[%s1923] sm:$0xff]
        %s1925 = scalar_lea.vmem [#allocation35], 16
        %v1926 = vld [vmem:[%s1925] sm:$0xff]
        %s1927 = scalar_lea.vmem [#allocation36], 16
        %v1928 = vld [vmem:[%s1927] sm:$0xff]
        %v1929 = vld [vmem:[#allocation29] sm:$0xff]
        %v1930 = vld [vmem:[#allocation30] sm:$0xff]
        %v1931 = vld [vmem:[#allocation38] sm:$0x3f]
        %v1932 = vld [vmem:[%s25] sm:$0x3f]
        %1934 = vset.pattern.permute.xlu0 0
        %1935 = vperm.xlu0 %1934, %v1930
        %v1936 = vpop.permute.xlu0 %1935
        %vm1938 = vcmask 48128
        %v1940 = vsel %vm1938, %v1929, 0
        %vm1942 = vcmask 1045504
        %v1944 = vsel %vm1942, %v1908, 0
        %1946 = vmatpush.msra.mxu0 0.0
        %1947 = vmatpush.msra.mxu0 0.0
        %1948 = vmatpush.msra.mxu0 0.0
        %1949 = vmatpush.msra.mxu0 0.0
        %1950 = vmatpush.msra.mxu0 0.0
        %1951 = vmatpush.msra.mxu0 0.0
        %1952 = vmatpush.msra.mxu0 0.0
        %1953 = vmatpush.msra.mxu0 0.0
        %1954 = vmatpush.msra.mxu0 0.0
        %1955 = vmatpush.msra.mxu0 0.0
        %1956 = vmatpush.msra.mxu0 0.0
        %1957 = vmatpush.msra.mxu0 0.0
        %1958 = vmatpush.msra.mxu0 0.0
        %1959 = vmatpush.msra.mxu0 0.0
        %1960 = vmatpush.msra.mxu0 0.0
        %1961 = vmatpush.msra.mxu0 %v1944
        %1962 = vmatmul.f32.gmra.mxu0 %v1940
        %v1963 = vpop.f32.mrf.mxu0
        %v1964 = vadd.f32 %v1936, %v1963
        %1965 = vdwg.mxu0
        %1967 = vrot.lane.b32.xlu0 %v1964, 8
        %v1968 = vpop.permute.xlu0 %1967
        %1970 = vst.msk [vmem:[#allocation2] sm:$0xff] %vm1271, %v1968
        %v1971 = vld [vmem:[#allocation2] sm:$0xff]
        %1973 = vrot.lane.b32.xlu0 %v1971, 127
        %v1974 = vpop.permute.xlu0 %1973
        %1975 = vrot.lane.b32.xlu0 %v1971, 126
        %v1976 = vpop.permute.xlu0 %1975
        %1978 = vset.pattern.permute.xlu0 0
        %1979 = vperm.xlu0 %1978, %v1910
        %v1980 = vpop.permute.xlu0 %1979
        %1982 = vrot.lane.b32.xlu0 %v1971, 121
        %v1983 = vpop.permute.xlu0 %1982
        %1984 = vrot.lane.b32.xlu0 %v1974, 121
        %v1985 = vpop.permute.xlu0 %1984
        %1986 = vrot.lane.b32.xlu0 %v1976, 121
        %v1987 = vpop.permute.xlu0 %1986
        %v1992 = vsel %vm1293, %v1909, 0
        %1994 = vmatpush.msra.mxu0 0.0
        %1995 = vmatpush.msra.mxu0 0.0
        %1996 = vmatpush.msra.mxu0 0.0
        %1997 = vmatpush.msra.mxu0 0.0
        %1998 = vmatpush.msra.mxu0 0.0
        %1999 = vmatpush.msra.mxu0 0.0
        %2000 = vmatpush.msra.mxu0 0.0
        %2001 = vmatpush.msra.mxu0 0.0
        %2002 = vmatpush.msra.mxu0 0.0
        %2003 = vmatpush.msra.mxu0 0.0
        %2004 = vmatpush.msra.mxu0 0.0
        %2005 = vmatpush.msra.mxu0 0.0
        %2006 = vmatpush.msra.mxu0 0.0
        %2007 = vmatpush.msra.mxu0 %v1987
        %2008 = vmatpush.msra.mxu0 %v1985
        %2009 = vmatpush.msra.mxu0 %v1983
        %2010 = vmatmul.f32.gmra.mxu0 %v1992
        %v2011 = vpop.f32.mrf.mxu0
        %v2012 = vadd.f32 %v1980, %v2011
        %2013 = vdwg.mxu0
        %v2014 = vmax.f32 %v2012, 0.0
        %2016 = vset.pattern.permute.xlu0 0
        %2017 = vperm.xlu0 %2016, %v1912
        %v2018 = vpop.permute.xlu0 %2017
        %v2021 = vsel %vm1323, %v1911, 0
        %2023 = vmatpush.msra.mxu0 0.0
        %2024 = vmatpush.msra.mxu0 0.0
        %2025 = vmatpush.msra.mxu0 0.0
        %2026 = vmatpush.msra.mxu0 0.0
        %2027 = vmatpush.msra.mxu0 0.0
        %2028 = vmatpush.msra.mxu0 0.0
        %2029 = vmatpush.msra.mxu0 0.0
        %2030 = vmatpush.msra.mxu0 0.0
        %2031 = vmatpush.msra.mxu0 0.0
        %2032 = vmatpush.msra.mxu0 0.0
        %2033 = vmatpush.msra.mxu0 0.0
        %2034 = vmatpush.msra.mxu0 0.0
        %2035 = vmatpush.msra.mxu0 0.0
        %2036 = vmatpush.msra.mxu0 0.0
        %2037 = vmatpush.msra.mxu0 0.0
        %2038 = vmatpush.msra.mxu0 %v2014
        %2039 = vmatmul.f32.gmra.mxu0 %v2021
        %v2040 = vpop.f32.mrf.mxu0
        %v2041 = vadd.f32 %v2018, %v2040
        %2042 = vdwg.mxu0
        %v2043 = vadd.f32 %v1964, %v2041
        %v2044 = vmul.f32 %v2043, %v1349
        %2046 = vrot.lane.b32.xlu0 %v2044, 8
        %v2047 = vpop.permute.xlu0 %2046
        %2049 = vst.msk [vmem:[#allocation2] sm:$0xff] %vm1271, %v2047
        %v2050 = vld [vmem:[#allocation2] sm:$0xff]
        %2052 = vrot.lane.b32.xlu0 %v2050, 126
        %v2053 = vpop.permute.xlu0 %2052
        %2054 = vrot.lane.b32.xlu0 %v2050, 124
        %v2055 = vpop.permute.xlu0 %2054
        %2057 = vset.pattern.permute.xlu0 0
        %2058 = vperm.xlu0 %2057, %v1916
        %v2059 = vpop.permute.xlu0 %2058
        %2061 = vrot.lane.b32.xlu0 %v2050, 122
        %v2062 = vpop.permute.xlu0 %2061
        %2063 = vrot.lane.b32.xlu0 %v2053, 122
        %v2064 = vpop.permute.xlu0 %2063
        %2065 = vrot.lane.b32.xlu0 %v2055, 122
        %v2066 = vpop.permute.xlu0 %2065
        %v2071 = vsel %vm1293, %v1914, 0
        %2073 = vmatpush.msra.mxu0 0.0
        %2074 = vmatpush.msra.mxu0 0.0
        %2075 = vmatpush.msra.mxu0 0.0
        %2076 = vmatpush.msra.mxu0 0.0
        %2077 = vmatpush.msra.mxu0 0.0
        %2078 = vmatpush.msra.mxu0 0.0
        %2079 = vmatpush.msra.mxu0 0.0
        %2080 = vmatpush.msra.mxu0 0.0
        %2081 = vmatpush.msra.mxu0 0.0
        %2082 = vmatpush.msra.mxu0 0.0
        %2083 = vmatpush.msra.mxu0 0.0
        %2084 = vmatpush.msra.mxu0 0.0
        %2085 = vmatpush.msra.mxu0 0.0
        %2086 = vmatpush.msra.mxu0 %v2066
        %2087 = vmatpush.msra.mxu0 %v2064
        %2088 = vmatpush.msra.mxu0 %v2062
        %2089 = vmatmul.f32.gmra.mxu0 %v2071
        %v2090 = vpop.f32.mrf.mxu0
        %v2091 = vadd.f32 %v2059, %v2090
        %2092 = vdwg.mxu0
        %v2093 = vmax.f32 %v2091, 0.0
        %2095 = vset.pattern.permute.xlu0 0
        %2096 = vperm.xlu0 %2095, %v1920
        %v2097 = vpop.permute.xlu0 %2096
        %v2100 = vsel %vm1323, %v1918, 0
        %2102 = vmatpush.msra.mxu0 0.0
        %2103 = vmatpush.msra.mxu0 0.0
        %2104 = vmatpush.msra.mxu0 0.0
        %2105 = vmatpush.msra.mxu0 0.0
        %2106 = vmatpush.msra.mxu0 0.0
        %2107 = vmatpush.msra.mxu0 0.0
        %2108 = vmatpush.msra.mxu0 0.0
        %2109 = vmatpush.msra.mxu0 0.0
        %2110 = vmatpush.msra.mxu0 0.0
        %2111 = vmatpush.msra.mxu0 0.0
        %2112 = vmatpush.msra.mxu0 0.0
        %2113 = vmatpush.msra.mxu0 0.0
        %2114 = vmatpush.msra.mxu0 0.0
        %2115 = vmatpush.msra.mxu0 0.0
        %2116 = vmatpush.msra.mxu0 0.0
        %2117 = vmatpush.msra.mxu0 %v2093
        %2118 = vmatmul.f32.gmra.mxu0 %v2100
        %v2119 = vpop.f32.mrf.mxu0
        %v2120 = vadd.f32 %v2097, %v2119
        %2121 = vdwg.mxu0
        %v2122 = vadd.f32 %v2044, %v2120
        %v2123 = vmul.f32 %v2122, %v1349
        %2125 = vrot.lane.b32.xlu0 %v2123, 8
        %v2126 = vpop.permute.xlu0 %2125
        %2128 = vst.msk [vmem:[#allocation2] sm:$0xff] %vm1271, %v2126
        %v2129 = vld [vmem:[#allocation2] sm:$0xff]
        %2131 = vrot.lane.b32.xlu0 %v2129, 124
        %v2132 = vpop.permute.xlu0 %2131
        %2133 = vrot.lane.b32.xlu0 %v2129, 120
        %v2134 = vpop.permute.xlu0 %2133
        %2136 = vset.pattern.permute.xlu0 0
        %2137 = vperm.xlu0 %2136, %v1924
        %v2138 = vpop.permute.xlu0 %2137
        %2140 = vrot.lane.b32.xlu0 %v2132, 124
        %v2141 = vpop.permute.xlu0 %2140
        %2142 = vrot.lane.b32.xlu0 %v2134, 124
        %v2143 = vpop.permute.xlu0 %2142
        %v2148 = vsel %vm1293, %v1922, 0
        %2150 = vmatpush.msra.mxu0 0.0
        %2151 = vmatpush.msra.mxu0 0.0
        %2152 = vmatpush.msra.mxu0 0.0
        %2153 = vmatpush.msra.mxu0 0.0
        %2154 = vmatpush.msra.mxu0 0.0
        %2155 = vmatpush.msra.mxu0 0.0
        %2156 = vmatpush.msra.mxu0 0.0
        %2157 = vmatpush.msra.mxu0 0.0
        %2158 = vmatpush.msra.mxu0 0.0
        %2159 = vmatpush.msra.mxu0 0.0
        %2160 = vmatpush.msra.mxu0 0.0
        %2161 = vmatpush.msra.mxu0 0.0
        %2162 = vmatpush.msra.mxu0 0.0
        %2163 = vmatpush.msra.mxu0 %v2143
        %2164 = vmatpush.msra.mxu0 %v2141
        %2165 = vmatpush.msra.mxu0 %v2132
        %2166 = vmatmul.f32.gmra.mxu0 %v2148
        %v2167 = vpop.f32.mrf.mxu0
        %v2168 = vadd.f32 %v2138, %v2167
        %2169 = vdwg.mxu0
        %v2170 = vmax.f32 %v2168, 0.0
        %2172 = vset.pattern.permute.xlu0 0
        %2173 = vperm.xlu0 %2172, %v1928
        %v2174 = vpop.permute.xlu0 %2173
        %v2177 = vsel %vm1323, %v1926, 0
        %2179 = vmatpush.msra.mxu0 0.0
        %2180 = vmatpush.msra.mxu0 0.0
        %2181 = vmatpush.msra.mxu0 0.0
        %2182 = vmatpush.msra.mxu0 0.0
        %2183 = vmatpush.msra.mxu0 0.0
        %2184 = vmatpush.msra.mxu0 0.0
        %2185 = vmatpush.msra.mxu0 0.0
        %2186 = vmatpush.msra.mxu0 0.0
        %2187 = vmatpush.msra.mxu0 0.0
        %2188 = vmatpush.msra.mxu0 0.0
        %2189 = vmatpush.msra.mxu0 0.0
        %2190 = vmatpush.msra.mxu0 0.0
        %2191 = vmatpush.msra.mxu0 0.0
        %2192 = vmatpush.msra.mxu0 0.0
        %2193 = vmatpush.msra.mxu0 0.0
        %2194 = vmatpush.msra.mxu0 %v2170
        %2195 = vmatmul.f32.gmra.mxu0 %v2177
        %v2196 = vpop.f32.mrf.mxu0
        %v2197 = vadd.f32 %v2174, %v2196
        %2198 = vdwg.mxu0
        %v2199 = vadd.f32 %v2123, %v2197
        %v2200 = vmul.f32 %v2199, %v1349
        %2202 = vset.pattern.permute.xlu0 0
        %2203 = vperm.xlu0 %2202, %v1932
        %v2204 = vpop.permute.xlu0 %2203
        %v2207 = vsel %vm1323, %v1931, 0
        %2209 = vmatpush.msra.mxu0 0.0
        %2210 = vmatpush.msra.mxu0 0.0
        %2211 = vmatpush.msra.mxu0 0.0
        %2212 = vmatpush.msra.mxu0 0.0
        %2213 = vmatpush.msra.mxu0 0.0
        %2214 = vmatpush.msra.mxu0 0.0
        %2215 = vmatpush.msra.mxu0 0.0
        %2216 = vmatpush.msra.mxu0 0.0
        %2217 = vmatpush.msra.mxu0 0.0
        %2218 = vmatpush.msra.mxu0 0.0
        %2219 = vmatpush.msra.mxu0 0.0
        %2220 = vmatpush.msra.mxu0 0.0
        %2221 = vmatpush.msra.mxu0 0.0
        %2222 = vmatpush.msra.mxu0 0.0
        %2223 = vmatpush.msra.mxu0 0.0
        %2224 = vmatpush.msra.mxu0 %v2200
        %2225 = vmatmul.f32.gmra.mxu0 %v2207
        %v2226 = vpop.f32.mrf.mxu0
        %v2227 = vadd.f32 %v2204, %v2226
        %2228 = vdwg.mxu0
        %v2229 = vmul.f32 %v2227, %v1349
        %s2230 = scalar_lea.vmem %s1202, 8 [#allocation40]
        %2231 = vst.msk [vmem:[%s2230] sm:$0x3f] %vm1874, %v2229
        %v2232 = vsel %vm1874, %v2229, -inf
        %v2233 = vrot.slane %v2232, 4
        %v2234 = vmax.f32 %v2232, %v2233
        %v2235 = vrot.slane %v2234, 2
        %v2236 = vmax.f32 %v2234, %v2235
        %v2237 = vrot.slane %v2236, 1
        %v2238 = vmax.f32 %v2236, %v2237
        %v2239 = vsub.f32 %v2229, %v2238
        %v2240 = vmul.f32 %v2239, 1.442695
        %v2241 = vpow.pop %v2240
        %v2242 = vsel %vm1874, %v2241, 0.0
        %v2243 = vrot.slane %v2242, 4
        %v2244 = vadd.f32 %v2242, %v2243
        %v2245 = vrot.slane %v2244, 2
        %v2246 = vadd.f32 %v2244, %v2245
        %v2247 = vrot.slane %v2246, 1
        %v2248 = vadd.f32 %v2246, %v2247
        %v2249 = vrcp.pop %v2248
        %v2250 = vmul.f32 %v2248, %v2249
        %v2251 = vsub.f32 1.0, %v2250
        %v2252 = vmul.f32 %v2249, %v2251
        %v2253 = vadd.f32 %v2249, %v2252
        %vm2254 = vweird.f32 %v2248
        %vm2255 = vweird.f32 %v2249
        %vm2256 = vmor %vm2254, %vm2255
        %v2257 = vsel %vm2256, %v2249, %v2253
        %v2258 = vand.u32 2147483647, %v2248
        %vm2259 = vcmp.eq.f32.partialorder %v2258, 8.507059e+37
        %v2260 = vand.u32 %v2248, 2147483648
        %v2261 = vor.u32 1.1754944e-38, %v2260
        %v2262 = vsel %vm2259, %v2261, %v2257
        %v2263 = vmul.f32 %v2241, %v2262
        %v2264 = vmul.f32 %v2263, %v1349
        %s2265 = scalar_lea.vmem [#allocation32], 24
        %v2266 = vld [vmem:[%s2265] sm:$0xff]
        %s2267 = scalar_lea.vmem [#allocation33], 24
        %v2268 = vld [vmem:[%s2267] sm:$0xff]
        %s2269 = scalar_lea.vmem [#allocation35], 24
        %v2270 = vld [vmem:[%s2269] sm:$0xff]
        %s2271 = scalar_lea.vmem [#allocation36], 24
        %v2272 = vld [vmem:[%s2271] sm:$0xff]
        %s2273 = scalar_lea.vmem [#allocation32], 32
        %v2274 = vld [vmem:[%s2273] sm:$0xff]
        %s2275 = scalar_lea.vmem [#allocation33], 32
        %v2276 = vld [vmem:[%s2275] sm:$0xff]
        %s2277 = scalar_lea.vmem [#allocation35], 32
        %v2278 = vld [vmem:[%s2277] sm:$0xff]
        %s2279 = scalar_lea.vmem [#allocation36], 32
        %v2280 = vld [vmem:[%s2279] sm:$0xff]
        %s2281 = scalar_lea.vmem [#allocation32], 40
        %v2282 = vld [vmem:[%s2281] sm:$0xff]
        %s2283 = scalar_lea.vmem [#allocation33], 40
        %v2284 = vld [vmem:[%s2283] sm:$0xff]
        %s2285 = scalar_lea.vmem [#allocation35], 40
        %v2286 = vld [vmem:[%s2285] sm:$0xff]
        %s2287 = scalar_lea.vmem [#allocation36], 40
        %v2288 = vld [vmem:[%s2287] sm:$0xff]
        %s2289 = scalar_lea.vmem [#allocation29], 8
        %v2290 = vld [vmem:[%s2289] sm:$0xff]
        %s2291 = scalar_lea.vmem [#allocation30], 8
        %v2292 = vld [vmem:[%s2291] sm:$0xff]
        %s2293 = scalar_lea.vmem [#allocation38], 8
        %v2294 = vld [vmem:[%s2293] sm:$0x3f]
        %s2295 = scalar_lea.vmem %s25, 8
        %v2296 = vld [vmem:[%s2295] sm:$0x3f]
        %2298 = vset.pattern.permute.xlu0 0
        %2299 = vperm.xlu0 %2298, %v2292
        %v2300 = vpop.permute.xlu0 %2299
        %v2303 = vsel %vm1938, %v2290, 0
        %v2306 = vsel %vm1942, %v2264, 0
        %2308 = vmatpush.msra.mxu0 0.0
        %2309 = vmatpush.msra.mxu0 0.0
        %2310 = vmatpush.msra.mxu0 0.0
        %2311 = vmatpush.msra.mxu0 0.0
        %2312 = vmatpush.msra.mxu0 0.0
        %2313 = vmatpush.msra.mxu0 0.0
        %2314 = vmatpush.msra.mxu0 0.0
        %2315 = vmatpush.msra.mxu0 0.0
        %2316 = vmatpush.msra.mxu0 0.0
        %2317 = vmatpush.msra.mxu0 0.0
        %2318 = vmatpush.msra.mxu0 0.0
        %2319 = vmatpush.msra.mxu0 0.0
        %2320 = vmatpush.msra.mxu0 0.0
        %2321 = vmatpush.msra.mxu0 0.0
        %2322 = vmatpush.msra.mxu0 0.0
        %2323 = vmatpush.msra.mxu0 %v2306
        %2324 = vmatmul.f32.gmra.mxu0 %v2303
        %v2325 = vpop.f32.mrf.mxu0
        %v2326 = vadd.f32 %v2300, %v2325
        %2327 = vdwg.mxu0
        %2329 = vrot.lane.b32.xlu0 %v2326, 8
        %v2330 = vpop.permute.xlu0 %2329
        %2332 = vst.msk [vmem:[#allocation2] sm:$0xff] %vm1271, %v2330
        %v2333 = vld [vmem:[#allocation2] sm:$0xff]
        %2335 = vrot.lane.b32.xlu0 %v2333, 127
        %v2336 = vpop.permute.xlu0 %2335
        %2337 = vrot.lane.b32.xlu0 %v2333, 126
        %v2338 = vpop.permute.xlu0 %2337
        %2340 = vset.pattern.permute.xlu0 0
        %2341 = vperm.xlu0 %2340, %v2268
        %v2342 = vpop.permute.xlu0 %2341
        %2344 = vrot.lane.b32.xlu0 %v2333, 121
        %v2345 = vpop.permute.xlu0 %2344
        %2346 = vrot.lane.b32.xlu0 %v2336, 121
        %v2347 = vpop.permute.xlu0 %2346
        %2348 = vrot.lane.b32.xlu0 %v2338, 121
        %v2349 = vpop.permute.xlu0 %2348
        %v2354 = vsel %vm1293, %v2266, 0
        %2356 = vmatpush.msra.mxu0 0.0
        %2357 = vmatpush.msra.mxu0 0.0
        %2358 = vmatpush.msra.mxu0 0.0
        %2359 = vmatpush.msra.mxu0 0.0
        %2360 = vmatpush.msra.mxu0 0.0
        %2361 = vmatpush.msra.mxu0 0.0
        %2362 = vmatpush.msra.mxu0 0.0
        %2363 = vmatpush.msra.mxu0 0.0
        %2364 = vmatpush.msra.mxu0 0.0
        %2365 = vmatpush.msra.mxu0 0.0
        %2366 = vmatpush.msra.mxu0 0.0
        %2367 = vmatpush.msra.mxu0 0.0
        %2368 = vmatpush.msra.mxu0 0.0
        %2369 = vmatpush.msra.mxu0 %v2349
        %2370 = vmatpush.msra.mxu0 %v2347
        %2371 = vmatpush.msra.mxu0 %v2345
        %2372 = vmatmul.f32.gmra.mxu0 %v2354
        %v2373 = vpop.f32.mrf.mxu0
        %v2374 = vadd.f32 %v2342, %v2373
        %2375 = vdwg.mxu0
        %v2376 = vmax.f32 %v2374, 0.0
        %2378 = vset.pattern.permute.xlu0 0
        %2379 = vperm.xlu0 %2378, %v2272
        %v2380 = vpop.permute.xlu0 %2379
        %v2383 = vsel %vm1323, %v2270, 0
        %2385 = vmatpush.msra.mxu0 0.0
        %2386 = vmatpush.msra.mxu0 0.0
        %2387 = vmatpush.msra.mxu0 0.0
        %2388 = vmatpush.msra.mxu0 0.0
        %2389 = vmatpush.msra.mxu0 0.0
        %2390 = vmatpush.msra.mxu0 0.0
        %2391 = vmatpush.msra.mxu0 0.0
        %2392 = vmatpush.msra.mxu0 0.0
        %2393 = vmatpush.msra.mxu0 0.0
        %2394 = vmatpush.msra.mxu0 0.0
        %2395 = vmatpush.msra.mxu0 0.0
        %2396 = vmatpush.msra.mxu0 0.0
        %2397 = vmatpush.msra.mxu0 0.0
        %2398 = vmatpush.msra.mxu0 0.0
        %2399 = vmatpush.msra.mxu0 0.0
        %2400 = vmatpush.msra.mxu0 %v2376
        %2401 = vmatmul.f32.gmra.mxu0 %v2383
        %v2402 = vpop.f32.mrf.mxu0
        %v2403 = vadd.f32 %v2380, %v2402
        %2404 = vdwg.mxu0
        %v2405 = vadd.f32 %v2326, %v2403
        %v2406 = vmul.f32 %v2405, %v1349
        %2408 = vrot.lane.b32.xlu0 %v2406, 8
        %v2409 = vpop.permute.xlu0 %2408
        %2411 = vst.msk [vmem:[#allocation2] sm:$0xff] %vm1271, %v2409
        %v2412 = vld [vmem:[#allocation2] sm:$0xff]
        %2414 = vrot.lane.b32.xlu0 %v2412, 126
        %v2415 = vpop.permute.xlu0 %2414
        %2416 = vrot.lane.b32.xlu0 %v2412, 124
        %v2417 = vpop.permute.xlu0 %2416
        %2419 = vset.pattern.permute.xlu0 0
        %2420 = vperm.xlu0 %2419, %v2276
        %v2421 = vpop.permute.xlu0 %2420
        %2423 = vrot.lane.b32.xlu0 %v2412, 122
        %v2424 = vpop.permute.xlu0 %2423
        %2425 = vrot.lane.b32.xlu0 %v2415, 122
        %v2426 = vpop.permute.xlu0 %2425
        %2427 = vrot.lane.b32.xlu0 %v2417, 122
        %v2428 = vpop.permute.xlu0 %2427
        %v2433 = vsel %vm1293, %v2274, 0
        %2435 = vmatpush.msra.mxu0 0.0
        %2436 = vmatpush.msra.mxu0 0.0
        %2437 = vmatpush.msra.mxu0 0.0
        %2438 = vmatpush.msra.mxu0 0.0
        %2439 = vmatpush.msra.mxu0 0.0
        %2440 = vmatpush.msra.mxu0 0.0
        %2441 = vmatpush.msra.mxu0 0.0
        %2442 = vmatpush.msra.mxu0 0.0
        %2443 = vmatpush.msra.mxu0 0.0
        %2444 = vmatpush.msra.mxu0 0.0
        %2445 = vmatpush.msra.mxu0 0.0
        %2446 = vmatpush.msra.mxu0 0.0
        %2447 = vmatpush.msra.mxu0 0.0
        %2448 = vmatpush.msra.mxu0 %v2428
        %2449 = vmatpush.msra.mxu0 %v2426
        %2450 = vmatpush.msra.mxu0 %v2424
        %2451 = vmatmul.f32.gmra.mxu0 %v2433
        %v2452 = vpop.f32.mrf.mxu0
        %v2453 = vadd.f32 %v2421, %v2452
        %2454 = vdwg.mxu0
        %v2455 = vmax.f32 %v2453, 0.0
        %2457 = vset.pattern.permute.xlu0 0
        %2458 = vperm.xlu0 %2457, %v2280
        %v2459 = vpop.permute.xlu0 %2458
        %v2462 = vsel %vm1323, %v2278, 0
        %2464 = vmatpush.msra.mxu0 0.0
        %2465 = vmatpush.msra.mxu0 0.0
        %2466 = vmatpush.msra.mxu0 0.0
        %2467 = vmatpush.msra.mxu0 0.0
        %2468 = vmatpush.msra.mxu0 0.0
        %2469 = vmatpush.msra.mxu0 0.0
        %2470 = vmatpush.msra.mxu0 0.0
        %2471 = vmatpush.msra.mxu0 0.0
        %2472 = vmatpush.msra.mxu0 0.0
        %2473 = vmatpush.msra.mxu0 0.0
        %2474 = vmatpush.msra.mxu0 0.0
        %2475 = vmatpush.msra.mxu0 0.0
        %2476 = vmatpush.msra.mxu0 0.0
        %2477 = vmatpush.msra.mxu0 0.0
        %2478 = vmatpush.msra.mxu0 0.0
        %2479 = vmatpush.msra.mxu0 %v2455
        %2480 = vmatmul.f32.gmra.mxu0 %v2462
        %v2481 = vpop.f32.mrf.mxu0
        %v2482 = vadd.f32 %v2459, %v2481
        %2483 = vdwg.mxu0
        %v2484 = vadd.f32 %v2406, %v2482
        %v2485 = vmul.f32 %v2484, %v1349
        %2487 = vrot.lane.b32.xlu0 %v2485, 8
        %v2488 = vpop.permute.xlu0 %2487
        %2490 = vst.msk [vmem:[#allocation2] sm:$0xff] %vm1271, %v2488
        %v2491 = vld [vmem:[#allocation2] sm:$0xff]
        %2493 = vrot.lane.b32.xlu0 %v2491, 124
        %v2494 = vpop.permute.xlu0 %2493
        %2495 = vrot.lane.b32.xlu0 %v2491, 120
        %v2496 = vpop.permute.xlu0 %2495
        %2498 = vset.pattern.permute.xlu0 0
        %2499 = vperm.xlu0 %2498, %v2284
        %v2500 = vpop.permute.xlu0 %2499
        %2502 = vrot.lane.b32.xlu0 %v2494, 124
        %v2503 = vpop.permute.xlu0 %2502
        %2504 = vrot.lane.b32.xlu0 %v2496, 124
        %v2505 = vpop.permute.xlu0 %2504
        %v2510 = vsel %vm1293, %v2282, 0
        %2512 = vmatpush.msra.mxu0 0.0
        %2513 = vmatpush.msra.mxu0 0.0
        %2514 = vmatpush.msra.mxu0 0.0
        %2515 = vmatpush.msra.mxu0 0.0
        %2516 = vmatpush.msra.mxu0 0.0
        %2517 = vmatpush.msra.mxu0 0.0
        %2518 = vmatpush.msra.mxu0 0.0
        %2519 = vmatpush.msra.mxu0 0.0
        %2520 = vmatpush.msra.mxu0 0.0
        %2521 = vmatpush.msra.mxu0 0.0
        %2522 = vmatpush.msra.mxu0 0.0
        %2523 = vmatpush.msra.mxu0 0.0
        %2524 = vmatpush.msra.mxu0 0.0
        %2525 = vmatpush.msra.mxu0 %v2505
        %2526 = vmatpush.msra.mxu0 %v2503
        %2527 = vmatpush.msra.mxu0 %v2494
        %2528 = vmatmul.f32.gmra.mxu0 %v2510
        %v2529 = vpop.f32.mrf.mxu0
        %v2530 = vadd.f32 %v2500, %v2529
        %2531 = vdwg.mxu0
        %v2532 = vmax.f32 %v2530, 0.0
        %2534 = vset.pattern.permute.xlu0 0
        %2535 = vperm.xlu0 %2534, %v2288
        %v2536 = vpop.permute.xlu0 %2535
        %v2539 = vsel %vm1323, %v2286, 0
        %2541 = vmatpush.msra.mxu0 0.0
        %2542 = vmatpush.msra.mxu0 0.0
        %2543 = vmatpush.msra.mxu0 0.0
        %2544 = vmatpush.msra.mxu0 0.0
        %2545 = vmatpush.msra.mxu0 0.0
        %2546 = vmatpush.msra.mxu0 0.0
        %2547 = vmatpush.msra.mxu0 0.0
        %2548 = vmatpush.msra.mxu0 0.0
        %2549 = vmatpush.msra.mxu0 0.0
        %2550 = vmatpush.msra.mxu0 0.0
        %2551 = vmatpush.msra.mxu0 0.0
        %2552 = vmatpush.msra.mxu0 0.0
        %2553 = vmatpush.msra.mxu0 0.0
        %2554 = vmatpush.msra.mxu0 0.0
        %2555 = vmatpush.msra.mxu0 0.0
        %2556 = vmatpush.msra.mxu0 %v2532
        %2557 = vmatmul.f32.gmra.mxu0 %v2539
        %v2558 = vpop.f32.mrf.mxu0
        %v2559 = vadd.f32 %v2536, %v2558
        %2560 = vdwg.mxu0
        %v2561 = vadd.f32 %v2485, %v2559
        %v2562 = vmul.f32 %v2561, %v1349
        %2564 = vset.pattern.permute.xlu0 0
        %2565 = vperm.xlu0 %2564, %v2296
        %v2566 = vpop.permute.xlu0 %2565
        %v2569 = vsel %vm1323, %v2294, 0
        %2571 = vmatpush.msra.mxu0 0.0
        %2572 = vmatpush.msra.mxu0 0.0
        %2573 = vmatpush.msra.mxu0 0.0
        %2574 = vmatpush.msra.mxu0 0.0
        %2575 = vmatpush.msra.mxu0 0.0
        %2576 = vmatpush.msra.mxu0 0.0
        %2577 = vmatpush.msra.mxu0 0.0
        %2578 = vmatpush.msra.mxu0 0.0
        %2579 = vmatpush.msra.mxu0 0.0
        %2580 = vmatpush.msra.mxu0 0.0
        %2581 = vmatpush.msra.mxu0 0.0
        %2582 = vmatpush.msra.mxu0 0.0
        %2583 = vmatpush.msra.mxu0 0.0
        %2584 = vmatpush.msra.mxu0 0.0
        %2585 = vmatpush.msra.mxu0 0.0
        %2586 = vmatpush.msra.mxu0 %v2562
        %2587 = vmatmul.f32.gmra.mxu0 %v2569
        %v2588 = vpop.f32.mrf.mxu0
        %v2589 = vadd.f32 %v2566, %v2588
        %2590 = vdwg.mxu0
        %v2591 = vmul.f32 %v2589, %v1349
        %s2592 = scalar_lea.vmem %s1202, 16 [#allocation40]
        %2593 = vst.msk [vmem:[%s2592] sm:$0x3f] %vm1874, %v2591
        %vm2594 = vcmask 130048
        %2595 = vst.msk [vmem:[%s1196] sm:$0xff] %vm2594, %v2562
        %s2596 = sand.u32 %s620, 1
        %s2597 = scalar_lea.sflag [#allocation5], %s2596
        %s2598 = sand.u32 %s620, 1
        %s2599 = smul.addr %s2598, 8
        %s2600 = scalar_lea.vmem [#allocation39], %s2599
        %s2601 = sand.u32 %s646, 1
        %s2602 = sand.u32 %s646, 1
        %s2603 = smul.addr %s2602, 24
        %s2604 = scalar_lea.vmem [#allocation40], %s2603
        // Predicated region
        $region217: #{multi_stage_forward.1} parent=123 // pred_check
          %p2605 = pneg %p630
        $region218: #{multi_stage_forward.1} parent=123 // pred_check_branch
          %2607 = sbr.rel (%p2605) target = $region220
        $region219: #{multi_stage_forward.1} parent=123 // pred_region
          %2609 = vsyncadd %s2597, 0
          %s2610 = smul.addr %s56, 8
          %s2611 = scalar_lea.hbm %s26, %s2610
          %s2613 = sshll.u32 %s2600, 4
          %s2614 = int_to_ptr.vmem [resolvable:$true] %s2613
          %s2615 = sshll.u32 %s2611, 4
          %s2616 = int_to_ptr.hbm [resolvable:$true] %s2615
          %2618 = dma.vmem_to_hbm [thread:$0]  %s2614, 128, %s2616, %s2597
        $region220: #{multi_stage_forward.1} parent=123 // pred_fallthru
          _
        // Predicated region
        $region221: #{multi_stage_forward.1} parent=123 // pred_check
          %p2619 = pneg %p656
        $region222: #{multi_stage_forward.1} parent=123 // pred_check_branch
          %2621 = sbr.rel (%p2619) target = $region224
        $region223: #{multi_stage_forward.1} parent=123 // pred_region
          %s2622 = smul.addr %s56, 8
          %s2623 = scalar_lea.vmem %s27, %s2622
          // Predicated region
          $region225: #{multi_stage_forward.1} parent=223 // pred_check
            _
          $region226: #{multi_stage_forward.1} parent=223 // pred_check_branch
            %2625 = sbr.rel (0) target = $region228
          $region227: #{multi_stage_forward.1} parent=223 // pred_region
            // Predicated region
            $region229: #{multi_stage_forward.1} parent=227 // pred_check
              _
            $region230: #{multi_stage_forward.1} parent=227 // pred_check_branch
              %2627 = sbr.rel (0) target = $region232
            $region231: #{multi_stage_forward.1} parent=227 // pred_region
              // Predicated region
              $region244: #{multi_stage_forward.1} parent=231 // pred_check
                _
              $region245: #{multi_stage_forward.1} parent=231 // pred_check_branch
                %2647 = sbr.rel (0) target = $region247
              $region246: #{multi_stage_forward.1} parent=231 // pred_region
                loop: start=0, step=1, limit=1
                $region248: #{multi_stage_forward.1} parent=246 // loop_pre_header
                  _
                $region249: #{multi_stage_forward.1} parent=246 // loop_header
                  %s2649 = sphi 0, %s2653
                  %p2650 = scmp.ge.s32.totalorder %s2649, 1
                  %s2654 = sphi %s2604, %s2604
                  %s2655 = sphi %s2623, %s2623
                $region250: #{multi_stage_forward.1} parent=246 // loop_header_branch
                  %2652 = sbr.rel (%p2650) target = $region254
                $region251: #{multi_stage_forward.1} parent=246 // loop_body
                  %v2656 = vld [vmem:[%s2654] sm:$0xff]
                  %2657 = vst [vmem:[%s2655] sm:$0xff] %v2656
                  %v2658 = vld [vmem:[%s2654 + $0x8] sm:$0xff]
                  %2659 = vst [vmem:[%s2655 + $0x10] sm:$0xff] %v2658
                  %v2660 = vld [vmem:[%s2654 + $0x10] sm:$0xff]
                  %2661 = vst [vmem:[%s2655 + $0x20] sm:$0xff] %v2660
                $region252: #{multi_stage_forward.1} parent=246 // loop_footer
                  %s2653 = sadd.s32 1, %s2649
                $region253: #{multi_stage_forward.1} parent=246 // loop_footer_branch
                  %2648 = sbr.rel target = $region249
                $region254: #{multi_stage_forward.1} parent=246 // loop_exit
                  _
              $region247: #{multi_stage_forward.1} parent=231 // pred_fallthru
                _
              // Predicated region
              $region255: #{multi_stage_forward.1} parent=231 // pred_check
                _
              $region256: #{multi_stage_forward.1} parent=231 // pred_check_branch
                %2663 = sbr.rel target = $region258
              $region257: #{multi_stage_forward.1} parent=231 // pred_region
                _
              $region258: #{multi_stage_forward.1} parent=231 // pred_fallthru
                _
            $region232: #{multi_stage_forward.1} parent=227 // pred_fallthru
              _
            // Predicated region
            $region233: #{multi_stage_forward.1} parent=227 // pred_check
              _
            $region234: #{multi_stage_forward.1} parent=227 // pred_check_branch
              %2629 = sbr.rel target = $region236
            $region235: #{multi_stage_forward.1} parent=227 // pred_region
              %s2631 = ssub.s32 256, 1
              loop: start=0, step=1, limit=1
              $region237: #{multi_stage_forward.1} parent=235 // loop_pre_header
                _
              $region238: #{multi_stage_forward.1} parent=235 // loop_header
                %s2633 = sphi 0, %s2637
                %p2634 = scmp.ge.s32.totalorder %s2633, 1
                %s2638 = sphi %s2604, %s2604
                %s2639 = sphi %s2623, %s2623
              $region239: #{multi_stage_forward.1} parent=235 // loop_header_branch
                %2636 = sbr.rel (%p2634) target = $region243
              $region240: #{multi_stage_forward.1} parent=235 // loop_body
                %v2640 = vld [vmem:[%s2638] sm:%s2631]
                %2641 = vst [vmem:[%s2639] sm:%s2631] %v2640
                %v2642 = vld [vmem:[%s2638 + $0x8] sm:%s2631]
                %2643 = vst [vmem:[%s2639 + $0x10] sm:%s2631] %v2642
                %v2644 = vld [vmem:[%s2638 + $0x10] sm:%s2631]
                %2645 = vst [vmem:[%s2639 + $0x20] sm:%s2631] %v2644
              $region241: #{multi_stage_forward.1} parent=235 // loop_footer
                %s2637 = sadd.s32 1, %s2633
              $region242: #{multi_stage_forward.1} parent=235 // loop_footer_branch
                %2632 = sbr.rel target = $region238
              $region243: #{multi_stage_forward.1} parent=235 // loop_exit
                _
            $region236: #{multi_stage_forward.1} parent=227 // pred_fallthru
              _
          $region228: #{multi_stage_forward.1} parent=223 // pred_fallthru
            _
          %2664 = vnop
        $region224: #{multi_stage_forward.1} parent=123 // pred_fallthru
          _
      $region124: #{multi_stage_forward.1} parent=5 // pred_fallthru
        _
      %p2665 = scmp.le.s32.totalorder 2, %s51
      // Predicated region
      $region259: #{multi_stage_forward.1} parent=5 // pred_check
        %p2666 = pneg %p2665
      $region260: #{multi_stage_forward.1} parent=5 // pred_check_branch
        %2668 = sbr.rel (%p2666) target = $region262
      $region261: #{multi_stage_forward.1} parent=5 // pred_region
        %s2669 = ssub.s32 %s51, 2
        // Predicated region
        $region263: #{multi_stage_forward.1} parent=261 // pred_check
          %p2670 = pneg %p636
        $region264: #{multi_stage_forward.1} parent=261 // pred_check_branch
          %2672 = sbr.rel (%p2670) target = $region266
        $region265: #{multi_stage_forward.1} parent=261 // pred_region
          %s2673 = sand.u32 %s621, 1
          %s2674 = scalar_lea.sflag [#allocation5], %s2673
          %s2675 = sand.u32 %s621, 1
          %s2676 = smul.addr %s2675, 8
          %s2677 = scalar_lea.vmem [#allocation39], %s2676
          %2679 = dma.done %s2674, 128
        $region266: #{multi_stage_forward.1} parent=261 // pred_fallthru
          _
        // Predicated region
        $region267: #{multi_stage_forward.1} parent=261 // pred_check
          %p2680 = pneg %p662
        $region268: #{multi_stage_forward.1} parent=261 // pred_check_branch
          %2682 = sbr.rel (%p2680) target = $region270
        $region269: #{multi_stage_forward.1} parent=261 // pred_region
          %s2683 = sand.u32 %s647, 1
          %s2684 = sand.u32 %s647, 1
          %s2685 = smul.addr %s2684, 24
          %s2686 = scalar_lea.vmem [#allocation40], %s2685
        $region270: #{multi_stage_forward.1} parent=261 // pred_fallthru
          _
      $region262: #{multi_stage_forward.1} parent=5 // pred_fallthru
        _
    $region6: #{multi_stage_forward.1} parent=1 // loop_footer
      %s55 = sadd.s32 1, %s51
    $region7: #{multi_stage_forward.1} parent=1 // loop_footer_branch
      %50 = sbr.rel target = $region3
    $region8: #{multi_stage_forward.1} parent=1 // loop_exit
      _
    %2687 = vsyncpa [#allocation4], 1
    %s2688 = scalar_lea.sflag [#allocation4], 1
    %2689 = vsyncpa %s2688, 1
    %2690 = vsyncpa [#allocation7], 1
    %2691 = vsyncpa [#allocation10], 1
    %2692 = vsyncpa [#allocation13], 1
    %2693 = vsyncpa [#allocation16], 1
    %2694 = vsyncpa [#allocation19], 1
    %2695 = vsyncpa [#allocation22], 1
    %2696 = vsyncpa [#allocation25], 1
    %2697 = vsyncpa [#allocation28], 1
    %2698 = vsyncpa [#allocation31], 1
    %2699 = vsyncpa [#allocation34], 1
    %2700 = vsyncpa [#allocation37], 1
    %2701 = vsyncpa [#allocation5], 1
    %s2702 = scalar_lea.sflag [#allocation5], 1
    %2703 = vsyncpa %s2702, 1

</llo_original>
